<compile_context>
chip_gen: v7x
topology: tpu7x:2x2x1
jax: 0.10.0
libtpu: 0.0.40
codegen_flags: <defaults>
</compile_context>

<pallas_src>
import jax
import jax.numpy as jnp
import numpy as np
from jax.experimental import pallas as pl
from jax.experimental.pallas import tpu as pltpu


# ------------------------------------------------------------------
# Fused kernel: 2-layer LSTM + tanh + CBAM + max-pool + linear + sigmoid
# ------------------------------------------------------------------
def fused_model_kernel(x_ref,                       # (T*MB, D)   flat, time-major
                       wih0_ref, whh0_ref, b0_ref,  # (D,4H) (H,4H) (1,4H)
                       w1c_ref, b1_ref,             # (2H,4H) (1,4H)   layer-1 fused
                       w1t_ref, w2t_ref,            # (H,R) (R,H)      CA shared MLP
                       wsa_ref,                     # (14,) SMEM       SA conv taps
                       wlt_ref, bl_ref,             # (H,O) (1,O)
                       out_ref,                     # (MB, O)
                       seq_ref):                    # (T*MB, H) VMEM scratch
    MB = out_ref.shape[0]
    TB = x_ref.shape[0]
    T = TB // MB
    H = whh0_ref.shape[0]
    f32 = jnp.float32

    # ---- layer-0 input projection hoisted out of the recurrence (one matmul) ----
    gx0 = jnp.dot(x_ref[...], wih0_ref[...], preferred_element_type=f32) + b0_ref[...]
    whh0_t = whh0_ref[...]
    w1c = w1c_ref[...]
    b1 = b1_ref[...]

    def cell(gates, c_prev):
        # 2 full-vreg transcendentals per step, then 32-lane segment picks.
        sg = jax.nn.sigmoid(gates)                  # (MB, 4H)
        th = jnp.tanh(gates)                        # (MB, 4H)
        i = sg[:, 0:H]
        f = sg[:, H:2 * H]
        o = sg[:, 3 * H:4 * H]
        g = th[:, 2 * H:3 * H]
        c_new = f * c_prev + i * g
        h_new = o * jnp.tanh(c_new)
        return h_new, c_new

    h0 = jnp.zeros((MB, H), f32)
    c0 = jnp.zeros((MB, H), f32)
    h1 = jnp.zeros((MB, H), f32)
    c1 = jnp.zeros((MB, H), f32)

    # Wavefronted, fully-unrolled 2-layer recurrence.  Within one dataflow
    # graph the layer-0 matmul of step t+1 and the layer-1 matmul of step t
    # are independent, so the critical path is ~T+1 cell steps.
    for t in range(T):
        r0, r1 = t * MB, (t + 1) * MB
        # layer 0, step t
        g0 = gx0[r0:r1, :] + jnp.dot(h0, whh0_t, preferred_element_type=f32)
        h0, c0 = cell(g0, c0)
        # layer 1, step t  (input + recurrent projection fused into one matmul)
        g1 = jnp.dot(jnp.concatenate([h0, h1], axis=1), w1c,
                     preferred_element_type=f32) + b1
        h1, c1 = cell(g1, c1)
        # tanh(out) is off the recurrence critical path; store directly.
        seq_ref[r0:r1, :] = jnp.tanh(h1)

    xh = seq_ref[...]                                        # (T*MB, H) = tanh(lstm_out)

    # ---- ChannelAttention: shared 1x1-conv MLP per timestep, THEN mean/max over T ----
    y = jnp.maximum(jnp.dot(xh, w1t_ref[...], preferred_element_type=f32), 0.0)
    y = jnp.dot(y, w2t_ref[...], preferred_element_type=f32)  # (T*MB, H)
    mean_acc = y[0:MB, :]
    max_acc = y[0:MB, :]
    for t in range(1, T):
        blk = y[t * MB:(t + 1) * MB, :]
        mean_acc = mean_acc + blk
        max_acc = jnp.maximum(max_acc, blk)
    ca = jax.nn.sigmoid(mean_acc * (1.0 / T) + max_acc)       # (MB, H)
    x1 = xh * jnp.tile(ca, (T, 1))                            # broadcast over T

    # ---- SpatialAttention: mean/max over channels, Conv1d(2,1,7,pad=3) as
    #      7 shifted adds along T with SMEM scalar taps; (t,b) stays on sublanes ----
    avg_c = jnp.mean(x1, axis=1, keepdims=True)               # (T*MB, 1)
    max_c = jnp.max(x1, axis=1, keepdims=True)                # (T*MB, 1)
    zpad = jnp.zeros((3 * MB, 1), f32)
    ap = jnp.concatenate([zpad, avg_c, zpad], axis=0)         # ((T+6)*MB, 1)
    mp = jnp.concatenate([zpad, max_c, zpad], axis=0)
    conv = jnp.zeros((TB, 1), f32)
    for k in range(7):
        conv = conv + wsa_ref[k] * ap[k * MB:k * MB + TB, :] \
                    + wsa_ref[7 + k] * mp[k * MB:k * MB + TB, :]
    x2 = x1 * jax.nn.sigmoid(conv)                            # lane-broadcast

    # ---- AdaptiveMaxPool1d(1) over T + squeeze + Linear + sigmoid ----
    pooled = x2[0:MB, :]
    for t in range(1, T):
        pooled = jnp.maximum(pooled, x2[t * MB:(t + 1) * MB, :])
    logits = jnp.dot(pooled, wlt_ref[...], preferred_element_type=f32) + bl_ref[...]
    out_ref[...] = jax.nn.sigmoid(logits).astype(out_ref.dtype)


# ------------------------------------------------------------------
# Host-side one-time parameter prep (transposes, bias sums, fused layer-1 W)
# ------------------------------------------------------------------
def prepare_params(params):
    (wih0, whh0, bih0, bhh0), (wih1, whh1, bih1, bhh1) = params["lstm"]
    H = whh0.shape[1]
    O = params["wl"].shape[0]
    f32 = lambda a: jnp.asarray(a, jnp.float32)
    return dict(
        wih0_t=f32(wih0.T),                                  # (D, 4H)
        whh0_t=f32(whh0.T),                                  # (H, 4H)
        b0=f32((bih0 + bhh0).reshape(1, 4 * H)),
        w1c=f32(jnp.concatenate([wih1.T, whh1.T], axis=0)),  # (2H, 4H)
        b1=f32((bih1 + bhh1).reshape(1, 4 * H)),
        w1t=f32(params["w1"].T),                             # (H, R)
        w2t=f32(params["w2"].T),                             # (R, H)
        wsa=f32(params["w_sa"].reshape(-1)),                 # (14,) [avg taps | max taps]
        wl_t=f32(params["wl"].T),                            # (H, O)
        bl=f32(params["bl"].reshape(1, O)),
    )


def model_forward(x_btd, prep, mb=8):
    B, T, D = x_btd.shape
    assert B % mb == 0, "batch must be a multiple of the micro-batch size"
    nb = B // mb
    H = prep["whh0_t"].shape[0]
    R = prep["w1t"].shape[1]
    O = prep["wl_t"].shape[1]

    # One-off host-side relayout: (B,T,D) -> (nb, T*mb, D), time-major per micro-batch.
    x_flat = (jnp.transpose(x_btd, (1, 0, 2)).astype(jnp.float32)   # (T, B, D)
              .reshape(T, nb, mb, D)
              .transpose(1, 0, 2, 3)
              .reshape(nb, T * mb, D))

    def wspec(shape):
        nd = len(shape)
        return pl.BlockSpec(shape, lambda i, _nd=nd: (0,) * _nd)

    return pl.pallas_call(
        fused_model_kernel,
        out_shape=jax.ShapeDtypeStruct((B, O), jnp.float32),
        grid=(nb,),
        in_specs=[
            pl.BlockSpec((None, T * mb, D), lambda i: (i, 0, 0)),   # x (squeezed batch axis)
            wspec((D, 4 * H)), wspec((H, 4 * H)), wspec((1, 4 * H)),
            wspec((2 * H, 4 * H)), wspec((1, 4 * H)),
            wspec((H, R)), wspec((R, H)),
            pl.BlockSpec(memory_space=pltpu.MemorySpace.SMEM),      # SA conv taps
            wspec((H, O)), wspec((1, O)),
        ],
        out_specs=pl.BlockSpec((mb, O), lambda i: (i, 0)),
        scratch_shapes=[pltpu.VMEM((T * mb, H), jnp.float32)],
        compiler_params=pltpu.CompilerParams(dimension_semantics=("parallel",)),
    )(x_flat,
      prep["wih0_t"], prep["whh0_t"], prep["b0"],
      prep["w1c"], prep["b1"],
      prep["w1t"], prep["w2t"], prep["wsa"],
      prep["wl_t"], prep["bl"])


# ------------------------------------------------------------------
# Pure-JAX reference (direct transcription of the PyTorch forward)
# ------------------------------------------------------------------
def reference_forward(x_btd, params):
    h = x_btd.astype(jnp.float32)
    for (wih, whh, bih, bhh) in params["lstm"]:
        B, T, _ = h.shape
        H = whh.shape[1]
        b = bih + bhh
        hs = jnp.zeros((B, H), jnp.float32)
        cs = jnp.zeros((B, H), jnp.float32)
        outs = []
        for t in range(T):
            g = h[:, t] @ wih.T + hs @ whh.T + b
            i = jax.nn.sigmoid(g[:, :H])
            f = jax.nn.sigmoid(g[:, H:2 * H])
            gg = jnp.tanh(g[:, 2 * H:3 * H])
            o = jax.nn.sigmoid(g[:, 3 * H:])
            cs = f * cs + i * gg
            hs = o * jnp.tanh(cs)
            outs.append(hs)
        h = jnp.stack(outs, axis=1)
    out = jnp.tanh(h)                                      # (B, T, H)
    x_cht = jnp.transpose(out, (0, 2, 1))                  # (B, H, T) torch layout
    # channel attention: shareMlp per timestep, then mean/max pool over T
    y = jnp.einsum('rh,bht->brt', params["w1"], x_cht)
    y = jnp.maximum(y, 0.0)
    y = jnp.einsum('hr,brt->bht', params["w2"], y)
    ca = jax.nn.sigmoid(jnp.mean(y, axis=-1, keepdims=True)
                        + jnp.max(y, axis=-1, keepdims=True))
    x1 = ca * x_cht
    # spatial attention
    avgout = jnp.mean(x1, axis=1, keepdims=True)
    maxout = jnp.max(x1, axis=1, keepdims=True)
    cat = jnp.concatenate([avgout, maxout], axis=1)        # (B, 2, T)
    T = cat.shape[-1]
    pad = jnp.pad(cat, ((0, 0), (0, 0), (3, 3)))
    conv = sum(jnp.einsum('c,bct->bt', params["w_sa"][0, :, k], pad[:, :, k:k + T])
               for k in range(7))
    sa = jax.nn.sigmoid(conv)[:, None, :]
    x2 = sa * x1
    pooled = jnp.max(x2, axis=-1)                          # (B, H)
    logits = pooled @ params["wl"].T + params["bl"]
    return jax.nn.sigmoid(logits)


if __name__ == "__main__":
    # config: input_size=16, hidden_size=32, lstm_layers=2, output_size=2, ratio=8
    B, T, D, H, O, L = 16, 8, 16, 32, 2, 2
    R = H // 8

    key = jax.random.PRNGKey(0)
    ks = jax.random.split(key, 20)
    u = lambda k, shape: jax.random.uniform(k, shape, jnp.float32, -0.2, 0.2)

    lstm_params = []
    for layer in range(L):
        din = D if layer == 0 else H
        wih = u(ks[5 * layer + 0], (4 * H, din))
        whh = u(ks[5 * layer + 1], (4 * H, H))
        bih = u(ks[5 * layer + 2], (4 * H,))      # separate biases, like nn.LSTM
        bhh = u(ks[5 * layer + 3], (4 * H,))
        lstm_params.append((wih, whh, bih, bhh))

    params = {
        "lstm": lstm_params,
        "w1": u(ks[12], (R, H)),        # Conv1d(H, H//8, 1, bias=False)
        "w2": u(ks[13], (H, R)),        # Conv1d(H//8, H, 1, bias=False)
        "w_sa": u(ks[14], (1, 2, 7)),   # Conv1d(2, 1, 7, padding=3, bias=False)
        "wl": u(ks[15], (O, H)),        # Linear weight
        "bl": u(ks[16], (O,)),          # Linear bias
    }

    x = jax.random.normal(ks[17], (B, T, D), jnp.float32)

    prep = prepare_params(params)        # one-time host-side prep
    fwd = jax.jit(model_forward)

    out = jax.block_until_ready(fwd(x, prep))
    ref = jax.block_until_ready(reference_forward(x, params))

    assert out.shape == (B, O), out.shape
    np.testing.assert_allclose(np.asarray(out), np.asarray(ref), atol=2e-3, rtol=2e-3)
    print("KERNEL_OK")
</pallas_src>

<mosaic_0001>
module attributes {stable_mosaic.version = 11 : i64} {
  func.func @fused_model_kernel(%arg0: i32, %arg1: memref<1x64x16xf32, #tpu.memory_space<vmem>>, %arg2: memref<16x128xf32, #tpu.memory_space<vmem>>, %arg3: memref<32x128xf32, #tpu.memory_space<vmem>>, %arg4: memref<1x128xf32, #tpu.memory_space<vmem>>, %arg5: memref<64x128xf32, #tpu.memory_space<vmem>>, %arg6: memref<1x128xf32, #tpu.memory_space<vmem>>, %arg7: memref<32x4xf32, #tpu.memory_space<vmem>>, %arg8: memref<4x32xf32, #tpu.memory_space<vmem>>, %arg9: memref<14xf32, #tpu.memory_space<smem>>, %arg10: memref<32x2xf32, #tpu.memory_space<vmem>>, %arg11: memref<1x2xf32, #tpu.memory_space<vmem>>, %arg12: memref<8x2xf32, #tpu.memory_space<vmem>>, %arg13: memref<64x32xf32, #tpu.memory_space<vmem>>) attributes {dimension_semantics = [#tpu.dimension_semantics<parallel>], iteration_bounds = array<i64: 2>, scalar_prefetch = 0 : i64, scratch_operands = 1 : i64, tpu.core_type = #tpu.core_type<tc>, window_params = [{transform_indices = @transform_0, window_bounds = array<i64: 1, 64, 16>}, {pipeline_mode = #tpu.pipeline_mode<synchronous>, transform_indices = @transform_1, window_bounds = array<i64: 16, 128>}, {pipeline_mode = #tpu.pipeline_mode<synchronous>, transform_indices = @transform_2, window_bounds = array<i64: 32, 128>}, {pipeline_mode = #tpu.pipeline_mode<synchronous>, transform_indices = @transform_3, window_bounds = array<i64: 1, 128>}, {pipeline_mode = #tpu.pipeline_mode<synchronous>, transform_indices = @transform_4, window_bounds = array<i64: 64, 128>}, {pipeline_mode = #tpu.pipeline_mode<synchronous>, transform_indices = @transform_5, window_bounds = array<i64: 1, 128>}, {pipeline_mode = #tpu.pipeline_mode<synchronous>, transform_indices = @transform_6, window_bounds = array<i64: 32, 4>}, {pipeline_mode = #tpu.pipeline_mode<synchronous>, transform_indices = @transform_7, window_bounds = array<i64: 4, 32>}, {transform_indices = @transform_8, window_bounds = array<i64: 14>}, {pipeline_mode = #tpu.pipeline_mode<synchronous>, transform_indices = @transform_9, window_bounds = array<i64: 32, 2>}, {pipeline_mode = #tpu.pipeline_mode<synchronous>, transform_indices = @transform_10, window_bounds = array<i64: 1, 2>}, {transform_indices = @transform_11, window_bounds = array<i64: 8, 2>}]} {
    %c0 = arith.constant 0 : index
    %c0_0 = arith.constant 0 : index
    %c0_1 = arith.constant 0 : index
    %0 = vector.load %arg1[%c0, %c0_0, %c0_1] : memref<1x64x16xf32, #tpu.memory_space<vmem>>, vector<1x64x16xf32>
    %1 = vector.shape_cast %0 : vector<1x64x16xf32> to vector<64x16xf32>
    %c0_2 = arith.constant 0 : index
    %c0_3 = arith.constant 0 : index
    %2 = vector.load %arg2[%c0_2, %c0_3] : memref<16x128xf32, #tpu.memory_space<vmem>>, vector<16x128xf32>
    %cst = arith.constant dense<0.000000e+00> : vector<64x128xf32>
    %3 = tpu.matmul %1, %2, %cst {dimension_numbers = #tpu.dot_dimension_numbers<[1], [0], [0], [1], [0, 0, 1, 1], [], []>} : vector<64x16xf32>, vector<16x128xf32>, vector<64x128xf32> -> vector<64x128xf32>
    %c0_4 = arith.constant 0 : index
    %c0_5 = arith.constant 0 : index
    %4 = vector.load %arg4[%c0_4, %c0_5] : memref<1x128xf32, #tpu.memory_space<vmem>>, vector<1x128xf32>
    %5 = vector.broadcast %4 : vector<1x128xf32> to vector<64x128xf32>
    %6 = arith.addf %3, %5 : vector<64x128xf32>
    %c0_6 = arith.constant 0 : index
    %c0_7 = arith.constant 0 : index
    %7 = vector.load %arg3[%c0_6, %c0_7] : memref<32x128xf32, #tpu.memory_space<vmem>>, vector<32x128xf32>
    %c0_8 = arith.constant 0 : index
    %c0_9 = arith.constant 0 : index
    %8 = vector.load %arg5[%c0_8, %c0_9] : memref<64x128xf32, #tpu.memory_space<vmem>>, vector<64x128xf32>
    %c0_10 = arith.constant 0 : index
    %c0_11 = arith.constant 0 : index
    %9 = vector.load %arg6[%c0_10, %c0_11] : memref<1x128xf32, #tpu.memory_space<vmem>>, vector<1x128xf32>
    %cst_12 = arith.constant 0.000000e+00 : f32
    %10 = vector.broadcast %cst_12 : f32 to vector<8x32xf32>
    %cst_13 = arith.constant 0.000000e+00 : f32
    %11 = vector.broadcast %cst_13 : f32 to vector<8x32xf32>
    %cst_14 = arith.constant 0.000000e+00 : f32
    %12 = vector.broadcast %cst_14 : f32 to vector<8x32xf32>
    %cst_15 = arith.constant 0.000000e+00 : f32
    %13 = vector.broadcast %cst_15 : f32 to vector<8x32xf32>
    %14 = vector.extract_strided_slice %6 {offsets = [0, 0], sizes = [8, 128], strides = [1, 1]} : vector<64x128xf32> to vector<8x128xf32>
    %cst_16 = arith.constant dense<0.000000e+00> : vector<8x128xf32>
    %15 = tpu.matmul %10, %7, %cst_16 {dimension_numbers = #tpu.dot_dimension_numbers<[1], [0], [0], [1], [0, 0, 1, 1], [], []>} : vector<8x32xf32>, vector<32x128xf32>, vector<8x128xf32> -> vector<8x128xf32>
    %16 = arith.addf %14, %15 : vector<8x128xf32>
    %17 = arith.negf %16 : vector<8x128xf32>
    %18 = math.exp %17 : vector<8x128xf32>
    %cst_17 = arith.constant 1.000000e+00 : f32
    %19 = vector.broadcast %cst_17 : f32 to vector<8x128xf32>
    %20 = arith.addf %19, %18 : vector<8x128xf32>
    %21 = arith.divf %19, %20 : vector<8x128xf32>
    %22 = math.tanh %16 : vector<8x128xf32>
    %23 = vector.extract_strided_slice %21 {offsets = [0, 0], sizes = [8, 32], strides = [1, 1]} : vector<8x128xf32> to vector<8x32xf32>
    %24 = vector.extract_strided_slice %21 {offsets = [0, 32], sizes = [8, 32], strides = [1, 1]} : vector<8x128xf32> to vector<8x32xf32>
    %25 = vector.extract_strided_slice %21 {offsets = [0, 96], sizes = [8, 32], strides = [1, 1]} : vector<8x128xf32> to vector<8x32xf32>
    %26 = vector.extract_strided_slice %22 {offsets = [0, 64], sizes = [8, 32], strides = [1, 1]} : vector<8x128xf32> to vector<8x32xf32>
    %27 = arith.mulf %24, %11 : vector<8x32xf32>
    %28 = arith.mulf %23, %26 : vector<8x32xf32>
    %29 = arith.addf %27, %28 : vector<8x32xf32>
    %30 = math.tanh %29 : vector<8x32xf32>
    %31 = arith.mulf %25, %30 : vector<8x32xf32>
    %32 = tpu.concatenate %31, %12 in 1 : vector<8x32xf32>, vector<8x32xf32> -> vector<8x64xf32>
    %cst_18 = arith.constant dense<0.000000e+00> : vector<8x128xf32>
    %33 = tpu.matmul %32, %8, %cst_18 {dimension_numbers = #tpu.dot_dimension_numbers<[1], [0], [0], [1], [0, 0, 1, 1], [], []>} : vector<8x64xf32>, vector<64x128xf32>, vector<8x128xf32> -> vector<8x128xf32>
    %34 = vector.broadcast %9 : vector<1x128xf32> to vector<8x128xf32>
    %35 = arith.addf %33, %34 : vector<8x128xf32>
    %36 = arith.negf %35 : vector<8x128xf32>
    %37 = math.exp %36 : vector<8x128xf32>
    %cst_19 = arith.constant 1.000000e+00 : f32
    %38 = vector.broadcast %cst_19 : f32 to vector<8x128xf32>
    %39 = arith.addf %38, %37 : vector<8x128xf32>
    %40 = arith.divf %38, %39 : vector<8x128xf32>
    %41 = math.tanh %35 : vector<8x128xf32>
    %42 = vector.extract_strided_slice %40 {offsets = [0, 0], sizes = [8, 32], strides = [1, 1]} : vector<8x128xf32> to vector<8x32xf32>
    %43 = vector.extract_strided_slice %40 {offsets = [0, 32], sizes = [8, 32], strides = [1, 1]} : vector<8x128xf32> to vector<8x32xf32>
    %44 = vector.extract_strided_slice %40 {offsets = [0, 96], sizes = [8, 32], strides = [1, 1]} : vector<8x128xf32> to vector<8x32xf32>
    %45 = vector.extract_strided_slice %41 {offsets = [0, 64], sizes = [8, 32], strides = [1, 1]} : vector<8x128xf32> to vector<8x32xf32>
    %46 = arith.mulf %43, %13 : vector<8x32xf32>
    %47 = arith.mulf %42, %45 : vector<8x32xf32>
    %48 = arith.addf %46, %47 : vector<8x32xf32>
    %49 = math.tanh %48 : vector<8x32xf32>
    %50 = arith.mulf %44, %49 : vector<8x32xf32>
    %51 = math.tanh %50 : vector<8x32xf32>
    %c0_20 = arith.constant 0 : index
    %c0_21 = arith.constant 0 : index
    %52 = vector.load %arg13[%c0_20, %c0_21] : memref<64x32xf32, #tpu.memory_space<vmem>>, vector<8x32xf32>
    tpu.vector_store %arg13[%c0_20, %c0_21], %51 {strides = array<i32>} : memref<64x32xf32, #tpu.memory_space<vmem>>, vector<8x32xf32>,
    %53 = vector.extract_strided_slice %6 {offsets = [8, 0], sizes = [8, 128], strides = [1, 1]} : vector<64x128xf32> to vector<8x128xf32>
    %cst_22 = arith.constant dense<0.000000e+00> : vector<8x128xf32>
    %54 = tpu.matmul %31, %7, %cst_22 {dimension_numbers = #tpu.dot_dimension_numbers<[1], [0], [0], [1], [0, 0, 1, 1], [], []>} : vector<8x32xf32>, vector<32x128xf32>, vector<8x128xf32> -> vector<8x128xf32>
    %55 = arith.addf %53, %54 : vector<8x128xf32>
    %56 = arith.negf %55 : vector<8x128xf32>
    %57 = math.exp %56 : vector<8x128xf32>
    %cst_23 = arith.constant 1.000000e+00 : f32
    %58 = vector.broadcast %cst_23 : f32 to vector<8x128xf32>
    %59 = arith.addf %58, %57 : vector<8x128xf32>
    %60 = arith.divf %58, %59 : vector<8x128xf32>
    %61 = math.tanh %55 : vector<8x128xf32>
    %62 = vector.extract_strided_slice %60 {offsets = [0, 0], sizes = [8, 32], strides = [1, 1]} : vector<8x128xf32> to vector<8x32xf32>
    %63 = vector.extract_strided_slice %60 {offsets = [0, 32], sizes = [8, 32], strides = [1, 1]} : vector<8x128xf32> to vector<8x32xf32>
    %64 = vector.extract_strided_slice %60 {offsets = [0, 96], sizes = [8, 32], strides = [1, 1]} : vector<8x128xf32> to vector<8x32xf32>
    %65 = vector.extract_strided_slice %61 {offsets = [0, 64], sizes = [8, 32], strides = [1, 1]} : vector<8x128xf32> to vector<8x32xf32>
    %66 = arith.mulf %63, %29 : vector<8x32xf32>
    %67 = arith.mulf %62, %65 : vector<8x32xf32>
    %68 = arith.addf %66, %67 : vector<8x32xf32>
    %69 = math.tanh %68 : vector<8x32xf32>
    %70 = arith.mulf %64, %69 : vector<8x32xf32>
    %71 = tpu.concatenate %70, %50 in 1 : vector<8x32xf32>, vector<8x32xf32> -> vector<8x64xf32>
    %cst_24 = arith.constant dense<0.000000e+00> : vector<8x128xf32>
    %72 = tpu.matmul %71, %8, %cst_24 {dimension_numbers = #tpu.dot_dimension_numbers<[1], [0], [0], [1], [0, 0, 1, 1], [], []>} : vector<8x64xf32>, vector<64x128xf32>, vector<8x128xf32> -> vector<8x128xf32>
    %73 = vector.broadcast %9 : vector<1x128xf32> to vector<8x128xf32>
    %74 = arith.addf %72, %73 : vector<8x128xf32>
    %75 = arith.negf %74 : vector<8x128xf32>
    %76 = math.exp %75 : vector<8x128xf32>
    %cst_25 = arith.constant 1.000000e+00 : f32
    %77 = vector.broadcast %cst_25 : f32 to vector<8x128xf32>
    %78 = arith.addf %77, %76 : vector<8x128xf32>
    %79 = arith.divf %77, %78 : vector<8x128xf32>
    %80 = math.tanh %74 : vector<8x128xf32>
    %81 = vector.extract_strided_slice %79 {offsets = [0, 0], sizes = [8, 32], strides = [1, 1]} : vector<8x128xf32> to vector<8x32xf32>
    %82 = vector.extract_strided_slice %79 {offsets = [0, 32], sizes = [8, 32], strides = [1, 1]} : vector<8x128xf32> to vector<8x32xf32>
    %83 = vector.extract_strided_slice %79 {offsets = [0, 96], sizes = [8, 32], strides = [1, 1]} : vector<8x128xf32> to vector<8x32xf32>
    %84 = vector.extract_strided_slice %80 {offsets = [0, 64], sizes = [8, 32], strides = [1, 1]} : vector<8x128xf32> to vector<8x32xf32>
    %85 = arith.mulf %82, %48 : vector<8x32xf32>
    %86 = arith.mulf %81, %84 : vector<8x32xf32>
    %87 = arith.addf %85, %86 : vector<8x32xf32>
    %88 = math.tanh %87 : vector<8x32xf32>
    %89 = arith.mulf %83, %88 : vector<8x32xf32>
    %90 = math.tanh %89 : vector<8x32xf32>
    %c8 = arith.constant 8 : index
    %c0_26 = arith.constant 0 : index
    %91 = vector.load %arg13[%c8, %c0_26] : memref<64x32xf32, #tpu.memory_space<vmem>>, vector<8x32xf32>
    tpu.vector_store %arg13[%c8, %c0_26], %90 {strides = array<i32>} : memref<64x32xf32, #tpu.memory_space<vmem>>, vector<8x32xf32>,
    %92 = vector.extract_strided_slice %6 {offsets = [16, 0], sizes = [8, 128], strides = [1, 1]} : vector<64x128xf32> to vector<8x128xf32>
    %cst_27 = arith.constant dense<0.000000e+00> : vector<8x128xf32>
    %93 = tpu.matmul %70, %7, %cst_27 {dimension_numbers = #tpu.dot_dimension_numbers<[1], [0], [0], [1], [0, 0, 1, 1], [], []>} : vector<8x32xf32>, vector<32x128xf32>, vector<8x128xf32> -> vector<8x128xf32>
    %94 = arith.addf %92, %93 : vector<8x128xf32>
    %95 = arith.negf %94 : vector<8x128xf32>
    %96 = math.exp %95 : vector<8x128xf32>
    %cst_28 = arith.constant 1.000000e+00 : f32
    %97 = vector.broadcast %cst_28 : f32 to vector<8x128xf32>
    %98 = arith.addf %97, %96 : vector<8x128xf32>
    %99 = arith.divf %97, %98 : vector<8x128xf32>
    %100 = math.tanh %94 : vector<8x128xf32>
    %101 = vector.extract_strided_slice %99 {offsets = [0, 0], sizes = [8, 32], strides = [1, 1]} : vector<8x128xf32> to vector<8x32xf32>
    %102 = vector.extract_strided_slice %99 {offsets = [0, 32], sizes = [8, 32], strides = [1, 1]} : vector<8x128xf32> to vector<8x32xf32>
    %103 = vector.extract_strided_slice %99 {offsets = [0, 96], sizes = [8, 32], strides = [1, 1]} : vector<8x128xf32> to vector<8x32xf32>
    %104 = vector.extract_strided_slice %100 {offsets = [0, 64], sizes = [8, 32], strides = [1, 1]} : vector<8x128xf32> to vector<8x32xf32>
    %105 = arith.mulf %102, %68 : vector<8x32xf32>
    %106 = arith.mulf %101, %104 : vector<8x32xf32>
    %107 = arith.addf %105, %106 : vector<8x32xf32>
    %108 = math.tanh %107 : vector<8x32xf32>
    %109 = arith.mulf %103, %108 : vector<8x32xf32>
    %110 = tpu.concatenate %109, %89 in 1 : vector<8x32xf32>, vector<8x32xf32> -> vector<8x64xf32>
    %cst_29 = arith.constant dense<0.000000e+00> : vector<8x128xf32>
    %111 = tpu.matmul %110, %8, %cst_29 {dimension_numbers = #tpu.dot_dimension_numbers<[1], [0], [0], [1], [0, 0, 1, 1], [], []>} : vector<8x64xf32>, vector<64x128xf32>, vector<8x128xf32> -> vector<8x128xf32>
    %112 = vector.broadcast %9 : vector<1x128xf32> to vector<8x128xf32>
    %113 = arith.addf %111, %112 : vector<8x128xf32>
    %114 = arith.negf %113 : vector<8x128xf32>
    %115 = math.exp %114 : vector<8x128xf32>
    %cst_30 = arith.constant 1.000000e+00 : f32
    %116 = vector.broadcast %cst_30 : f32 to vector<8x128xf32>
    %117 = arith.addf %116, %115 : vector<8x128xf32>
    %118 = arith.divf %116, %117 : vector<8x128xf32>
    %119 = math.tanh %113 : vector<8x128xf32>
    %120 = vector.extract_strided_slice %118 {offsets = [0, 0], sizes = [8, 32], strides = [1, 1]} : vector<8x128xf32> to vector<8x32xf32>
    %121 = vector.extract_strided_slice %118 {offsets = [0, 32], sizes = [8, 32], strides = [1, 1]} : vector<8x128xf32> to vector<8x32xf32>
    %122 = vector.extract_strided_slice %118 {offsets = [0, 96], sizes = [8, 32], strides = [1, 1]} : vector<8x128xf32> to vector<8x32xf32>
    %123 = vector.extract_strided_slice %119 {offsets = [0, 64], sizes = [8, 32], strides = [1, 1]} : vector<8x128xf32> to vector<8x32xf32>
    %124 = arith.mulf %121, %87 : vector<8x32xf32>
    %125 = arith.mulf %120, %123 : vector<8x32xf32>
    %126 = arith.addf %124, %125 : vector<8x32xf32>
    %127 = math.tanh %126 : vector<8x32xf32>
    %128 = arith.mulf %122, %127 : vector<8x32xf32>
    %129 = math.tanh %128 : vector<8x32xf32>
    %c16 = arith.constant 16 : index
    %c0_31 = arith.constant 0 : index
    %130 = vector.load %arg13[%c16, %c0_31] : memref<64x32xf32, #tpu.memory_space<vmem>>, vector<8x32xf32>
    tpu.vector_store %arg13[%c16, %c0_31], %129 {strides = array<i32>} : memref<64x32xf32, #tpu.memory_space<vmem>>, vector<8x32xf32>,
    %131 = vector.extract_strided_slice %6 {offsets = [24, 0], sizes = [8, 128], strides = [1, 1]} : vector<64x128xf32> to vector<8x128xf32>
    %cst_32 = arith.constant dense<0.000000e+00> : vector<8x128xf32>
    %132 = tpu.matmul %109, %7, %cst_32 {dimension_numbers = #tpu.dot_dimension_numbers<[1], [0], [0], [1], [0, 0, 1, 1], [], []>} : vector<8x32xf32>, vector<32x128xf32>, vector<8x128xf32> -> vector<8x128xf32>
    %133 = arith.addf %131, %132 : vector<8x128xf32>
    %134 = arith.negf %133 : vector<8x128xf32>
    %135 = math.exp %134 : vector<8x128xf32>
    %cst_33 = arith.constant 1.000000e+00 : f32
    %136 = vector.broadcast %cst_33 : f32 to vector<8x128xf32>
    %137 = arith.addf %136, %135 : vector<8x128xf32>
    %138 = arith.divf %136, %137 : vector<8x128xf32>
    %139 = math.tanh %133 : vector<8x128xf32>
    %140 = vector.extract_strided_slice %138 {offsets = [0, 0], sizes = [8, 32], strides = [1, 1]} : vector<8x128xf32> to vector<8x32xf32>
    %141 = vector.extract_strided_slice %138 {offsets = [0, 32], sizes = [8, 32], strides = [1, 1]} : vector<8x128xf32> to vector<8x32xf32>
    %142 = vector.extract_strided_slice %138 {offsets = [0, 96], sizes = [8, 32], strides = [1, 1]} : vector<8x128xf32> to vector<8x32xf32>
    %143 = vector.extract_strided_slice %139 {offsets = [0, 64], sizes = [8, 32], strides = [1, 1]} : vector<8x128xf32> to vector<8x32xf32>
    %144 = arith.mulf %141, %107 : vector<8x32xf32>
    %145 = arith.mulf %140, %143 : vector<8x32xf32>
    %146 = arith.addf %144, %145 : vector<8x32xf32>
    %147 = math.tanh %146 : vector<8x32xf32>
    %148 = arith.mulf %142, %147 : vector<8x32xf32>
    %149 = tpu.concatenate %148, %128 in 1 : vector<8x32xf32>, vector<8x32xf32> -> vector<8x64xf32>
    %cst_34 = arith.constant dense<0.000000e+00> : vector<8x128xf32>
    %150 = tpu.matmul %149, %8, %cst_34 {dimension_numbers = #tpu.dot_dimension_numbers<[1], [0], [0], [1], [0, 0, 1, 1], [], []>} : vector<8x64xf32>, vector<64x128xf32>, vector<8x128xf32> -> vector<8x128xf32>
    %151 = vector.broadcast %9 : vector<1x128xf32> to vector<8x128xf32>
    %152 = arith.addf %150, %151 : vector<8x128xf32>
    %153 = arith.negf %152 : vector<8x128xf32>
    %154 = math.exp %153 : vector<8x128xf32>
    %cst_35 = arith.constant 1.000000e+00 : f32
    %155 = vector.broadcast %cst_35 : f32 to vector<8x128xf32>
    %156 = arith.addf %155, %154 : vector<8x128xf32>
    %157 = arith.divf %155, %156 : vector<8x128xf32>
    %158 = math.tanh %152 : vector<8x128xf32>
    %159 = vector.extract_strided_slice %157 {offsets = [0, 0], sizes = [8, 32], strides = [1, 1]} : vector<8x128xf32> to vector<8x32xf32>
    %160 = vector.extract_strided_slice %157 {offsets = [0, 32], sizes = [8, 32], strides = [1, 1]} : vector<8x128xf32> to vector<8x32xf32>
    %161 = vector.extract_strided_slice %157 {offsets = [0, 96], sizes = [8, 32], strides = [1, 1]} : vector<8x128xf32> to vector<8x32xf32>
    %162 = vector.extract_strided_slice %158 {offsets = [0, 64], sizes = [8, 32], strides = [1, 1]} : vector<8x128xf32> to vector<8x32xf32>
    %163 = arith.mulf %160, %126 : vector<8x32xf32>
    %164 = arith.mulf %159, %162 : vector<8x32xf32>
    %165 = arith.addf %163, %164 : vector<8x32xf32>
    %166 = math.tanh %165 : vector<8x32xf32>
    %167 = arith.mulf %161, %166 : vector<8x32xf32>
    %168 = math.tanh %167 : vector<8x32xf32>
    %c24 = arith.constant 24 : index
    %c0_36 = arith.constant 0 : index
    %169 = vector.load %arg13[%c24, %c0_36] : memref<64x32xf32, #tpu.memory_space<vmem>>, vector<8x32xf32>
    tpu.vector_store %arg13[%c24, %c0_36], %168 {strides = array<i32>} : memref<64x32xf32, #tpu.memory_space<vmem>>, vector<8x32xf32>,
    %170 = vector.extract_strided_slice %6 {offsets = [32, 0], sizes = [8, 128], strides = [1, 1]} : vector<64x128xf32> to vector<8x128xf32>
    %cst_37 = arith.constant dense<0.000000e+00> : vector<8x128xf32>
    %171 = tpu.matmul %148, %7, %cst_37 {dimension_numbers = #tpu.dot_dimension_numbers<[1], [0], [0], [1], [0, 0, 1, 1], [], []>} : vector<8x32xf32>, vector<32x128xf32>, vector<8x128xf32> -> vector<8x128xf32>
    %172 = arith.addf %170, %171 : vector<8x128xf32>
    %173 = arith.negf %172 : vector<8x128xf32>
    %174 = math.exp %173 : vector<8x128xf32>
    %cst_38 = arith.constant 1.000000e+00 : f32
    %175 = vector.broadcast %cst_38 : f32 to vector<8x128xf32>
    %176 = arith.addf %175, %174 : vector<8x128xf32>
    %177 = arith.divf %175, %176 : vector<8x128xf32>
    %178 = math.tanh %172 : vector<8x128xf32>
    %179 = vector.extract_strided_slice %177 {offsets = [0, 0], sizes = [8, 32], strides = [1, 1]} : vector<8x128xf32> to vector<8x32xf32>
    %180 = vector.extract_strided_slice %177 {offsets = [0, 32], sizes = [8, 32], strides = [1, 1]} : vector<8x128xf32> to vector<8x32xf32>
    %181 = vector.extract_strided_slice %177 {offsets = [0, 96], sizes = [8, 32], strides = [1, 1]} : vector<8x128xf32> to vector<8x32xf32>
    %182 = vector.extract_strided_slice %178 {offsets = [0, 64], sizes = [8, 32], strides = [1, 1]} : vector<8x128xf32> to vector<8x32xf32>
    %183 = arith.mulf %180, %146 : vector<8x32xf32>
    %184 = arith.mulf %179, %182 : vector<8x32xf32>
    %185 = arith.addf %183, %184 : vector<8x32xf32>
    %186 = math.tanh %185 : vector<8x32xf32>
    %187 = arith.mulf %181, %186 : vector<8x32xf32>
    %188 = tpu.concatenate %187, %167 in 1 : vector<8x32xf32>, vector<8x32xf32> -> vector<8x64xf32>
    %cst_39 = arith.constant dense<0.000000e+00> : vector<8x128xf32>
    %189 = tpu.matmul %188, %8, %cst_39 {dimension_numbers = #tpu.dot_dimension_numbers<[1], [0], [0], [1], [0, 0, 1, 1], [], []>} : vector<8x64xf32>, vector<64x128xf32>, vector<8x128xf32> -> vector<8x128xf32>
    %190 = vector.broadcast %9 : vector<1x128xf32> to vector<8x128xf32>
    %191 = arith.addf %189, %190 : vector<8x128xf32>
    %192 = arith.negf %191 : vector<8x128xf32>
    %193 = math.exp %192 : vector<8x128xf32>
    %cst_40 = arith.constant 1.000000e+00 : f32
    %194 = vector.broadcast %cst_40 : f32 to vector<8x128xf32>
    %195 = arith.addf %194, %193 : vector<8x128xf32>
    %196 = arith.divf %194, %195 : vector<8x128xf32>
    %197 = math.tanh %191 : vector<8x128xf32>
    %198 = vector.extract_strided_slice %196 {offsets = [0, 0], sizes = [8, 32], strides = [1, 1]} : vector<8x128xf32> to vector<8x32xf32>
    %199 = vector.extract_strided_slice %196 {offsets = [0, 32], sizes = [8, 32], strides = [1, 1]} : vector<8x128xf32> to vector<8x32xf32>
    %200 = vector.extract_strided_slice %196 {offsets = [0, 96], sizes = [8, 32], strides = [1, 1]} : vector<8x128xf32> to vector<8x32xf32>
    %201 = vector.extract_strided_slice %197 {offsets = [0, 64], sizes = [8, 32], strides = [1, 1]} : vector<8x128xf32> to vector<8x32xf32>
    %202 = arith.mulf %199, %165 : vector<8x32xf32>
    %203 = arith.mulf %198, %201 : vector<8x32xf32>
    %204 = arith.addf %202, %203 : vector<8x32xf32>
    %205 = math.tanh %204 : vector<8x32xf32>
    %206 = arith.mulf %200, %205 : vector<8x32xf32>
    %207 = math.tanh %206 : vector<8x32xf32>
    %c32 = arith.constant 32 : index
    %c0_41 = arith.constant 0 : index
    %208 = vector.load %arg13[%c32, %c0_41] : memref<64x32xf32, #tpu.memory_space<vmem>>, vector<8x32xf32>
    tpu.vector_store %arg13[%c32, %c0_41], %207 {strides = array<i32>} : memref<64x32xf32, #tpu.memory_space<vmem>>, vector<8x32xf32>,
    %209 = vector.extract_strided_slice %6 {offsets = [40, 0], sizes = [8, 128], strides = [1, 1]} : vector<64x128xf32> to vector<8x128xf32>
    %cst_42 = arith.constant dense<0.000000e+00> : vector<8x128xf32>
    %210 = tpu.matmul %187, %7, %cst_42 {dimension_numbers = #tpu.dot_dimension_numbers<[1], [0], [0], [1], [0, 0, 1, 1], [], []>} : vector<8x32xf32>, vector<32x128xf32>, vector<8x128xf32> -> vector<8x128xf32>
    %211 = arith.addf %209, %210 : vector<8x128xf32>
    %212 = arith.negf %211 : vector<8x128xf32>
    %213 = math.exp %212 : vector<8x128xf32>
    %cst_43 = arith.constant 1.000000e+00 : f32
    %214 = vector.broadcast %cst_43 : f32 to vector<8x128xf32>
    %215 = arith.addf %214, %213 : vector<8x128xf32>
    %216 = arith.divf %214, %215 : vector<8x128xf32>
    %217 = math.tanh %211 : vector<8x128xf32>
    %218 = vector.extract_strided_slice %216 {offsets = [0, 0], sizes = [8, 32], strides = [1, 1]} : vector<8x128xf32> to vector<8x32xf32>
    %219 = vector.extract_strided_slice %216 {offsets = [0, 32], sizes = [8, 32], strides = [1, 1]} : vector<8x128xf32> to vector<8x32xf32>
    %220 = vector.extract_strided_slice %216 {offsets = [0, 96], sizes = [8, 32], strides = [1, 1]} : vector<8x128xf32> to vector<8x32xf32>
    %221 = vector.extract_strided_slice %217 {offsets = [0, 64], sizes = [8, 32], strides = [1, 1]} : vector<8x128xf32> to vector<8x32xf32>
    %222 = arith.mulf %219, %185 : vector<8x32xf32>
    %223 = arith.mulf %218, %221 : vector<8x32xf32>
    %224 = arith.addf %222, %223 : vector<8x32xf32>
    %225 = math.tanh %224 : vector<8x32xf32>
    %226 = arith.mulf %220, %225 : vector<8x32xf32>
    %227 = tpu.concatenate %226, %206 in 1 : vector<8x32xf32>, vector<8x32xf32> -> vector<8x64xf32>
    %cst_44 = arith.constant dense<0.000000e+00> : vector<8x128xf32>
    %228 = tpu.matmul %227, %8, %cst_44 {dimension_numbers = #tpu.dot_dimension_numbers<[1], [0], [0], [1], [0, 0, 1, 1], [], []>} : vector<8x64xf32>, vector<64x128xf32>, vector<8x128xf32> -> vector<8x128xf32>
    %229 = vector.broadcast %9 : vector<1x128xf32> to vector<8x128xf32>
    %230 = arith.addf %228, %229 : vector<8x128xf32>
    %231 = arith.negf %230 : vector<8x128xf32>
    %232 = math.exp %231 : vector<8x128xf32>
    %cst_45 = arith.constant 1.000000e+00 : f32
    %233 = vector.broadcast %cst_45 : f32 to vector<8x128xf32>
    %234 = arith.addf %233, %232 : vector<8x128xf32>
    %235 = arith.divf %233, %234 : vector<8x128xf32>
    %236 = math.tanh %230 : vector<8x128xf32>
    %237 = vector.extract_strided_slice %235 {offsets = [0, 0], sizes = [8, 32], strides = [1, 1]} : vector<8x128xf32> to vector<8x32xf32>
    %238 = vector.extract_strided_slice %235 {offsets = [0, 32], sizes = [8, 32], strides = [1, 1]} : vector<8x128xf32> to vector<8x32xf32>
    %239 = vector.extract_strided_slice %235 {offsets = [0, 96], sizes = [8, 32], strides = [1, 1]} : vector<8x128xf32> to vector<8x32xf32>
    %240 = vector.extract_strided_slice %236 {offsets = [0, 64], sizes = [8, 32], strides = [1, 1]} : vector<8x128xf32> to vector<8x32xf32>
    %241 = arith.mulf %238, %204 : vector<8x32xf32>
    %242 = arith.mulf %237, %240 : vector<8x32xf32>
    %243 = arith.addf %241, %242 : vector<8x32xf32>
    %244 = math.tanh %243 : vector<8x32xf32>
    %245 = arith.mulf %239, %244 : vector<8x32xf32>
    %246 = math.tanh %245 : vector<8x32xf32>
    %c40 = arith.constant 40 : index
    %c0_46 = arith.constant 0 : index
    %247 = vector.load %arg13[%c40, %c0_46] : memref<64x32xf32, #tpu.memory_space<vmem>>, vector<8x32xf32>
    tpu.vector_store %arg13[%c40, %c0_46], %246 {strides = array<i32>} : memref<64x32xf32, #tpu.memory_space<vmem>>, vector<8x32xf32>,
    %248 = vector.extract_strided_slice %6 {offsets = [48, 0], sizes = [8, 128], strides = [1, 1]} : vector<64x128xf32> to vector<8x128xf32>
    %cst_47 = arith.constant dense<0.000000e+00> : vector<8x128xf32>
    %249 = tpu.matmul %226, %7, %cst_47 {dimension_numbers = #tpu.dot_dimension_numbers<[1], [0], [0], [1], [0, 0, 1, 1], [], []>} : vector<8x32xf32>, vector<32x128xf32>, vector<8x128xf32> -> vector<8x128xf32>
    %250 = arith.addf %248, %249 : vector<8x128xf32>
    %251 = arith.negf %250 : vector<8x128xf32>
    %252 = math.exp %251 : vector<8x128xf32>
    %cst_48 = arith.constant 1.000000e+00 : f32
    %253 = vector.broadcast %cst_48 : f32 to vector<8x128xf32>
    %254 = arith.addf %253, %252 : vector<8x128xf32>
    %255 = arith.divf %253, %254 : vector<8x128xf32>
    %256 = math.tanh %250 : vector<8x128xf32>
    %257 = vector.extract_strided_slice %255 {offsets = [0, 0], sizes = [8, 32], strides = [1, 1]} : vector<8x128xf32> to vector<8x32xf32>
    %258 = vector.extract_strided_slice %255 {offsets = [0, 32], sizes = [8, 32], strides = [1, 1]} : vector<8x128xf32> to vector<8x32xf32>
    %259 = vector.extract_strided_slice %255 {offsets = [0, 96], sizes = [8, 32], strides = [1, 1]} : vector<8x128xf32> to vector<8x32xf32>
    %260 = vector.extract_strided_slice %256 {offsets = [0, 64], sizes = [8, 32], strides = [1, 1]} : vector<8x128xf32> to vector<8x32xf32>
    %261 = arith.mulf %258, %224 : vector<8x32xf32>
    %262 = arith.mulf %257, %260 : vector<8x32xf32>
    %263 = arith.addf %261, %262 : vector<8x32xf32>
    %264 = math.tanh %263 : vector<8x32xf32>
    %265 = arith.mulf %259, %264 : vector<8x32xf32>
    %266 = tpu.concatenate %265, %245 in 1 : vector<8x32xf32>, vector<8x32xf32> -> vector<8x64xf32>
    %cst_49 = arith.constant dense<0.000000e+00> : vector<8x128xf32>
    %267 = tpu.matmul %266, %8, %cst_49 {dimension_numbers = #tpu.dot_dimension_numbers<[1], [0], [0], [1], [0, 0, 1, 1], [], []>} : vector<8x64xf32>, vector<64x128xf32>, vector<8x128xf32> -> vector<8x128xf32>
    %268 = vector.broadcast %9 : vector<1x128xf32> to vector<8x128xf32>
    %269 = arith.addf %267, %268 : vector<8x128xf32>
    %270 = arith.negf %269 : vector<8x128xf32>
    %271 = math.exp %270 : vector<8x128xf32>
    %cst_50 = arith.constant 1.000000e+00 : f32
    %272 = vector.broadcast %cst_50 : f32 to vector<8x128xf32>
    %273 = arith.addf %272, %271 : vector<8x128xf32>
    %274 = arith.divf %272, %273 : vector<8x128xf32>
    %275 = math.tanh %269 : vector<8x128xf32>
    %276 = vector.extract_strided_slice %274 {offsets = [0, 0], sizes = [8, 32], strides = [1, 1]} : vector<8x128xf32> to vector<8x32xf32>
    %277 = vector.extract_strided_slice %274 {offsets = [0, 32], sizes = [8, 32], strides = [1, 1]} : vector<8x128xf32> to vector<8x32xf32>
    %278 = vector.extract_strided_slice %274 {offsets = [0, 96], sizes = [8, 32], strides = [1, 1]} : vector<8x128xf32> to vector<8x32xf32>
    %279 = vector.extract_strided_slice %275 {offsets = [0, 64], sizes = [8, 32], strides = [1, 1]} : vector<8x128xf32> to vector<8x32xf32>
    %280 = arith.mulf %277, %243 : vector<8x32xf32>
    %281 = arith.mulf %276, %279 : vector<8x32xf32>
    %282 = arith.addf %280, %281 : vector<8x32xf32>
    %283 = math.tanh %282 : vector<8x32xf32>
    %284 = arith.mulf %278, %283 : vector<8x32xf32>
    %285 = math.tanh %284 : vector<8x32xf32>
    %c48 = arith.constant 48 : index
    %c0_51 = arith.constant 0 : index
    %286 = vector.load %arg13[%c48, %c0_51] : memref<64x32xf32, #tpu.memory_space<vmem>>, vector<8x32xf32>
    tpu.vector_store %arg13[%c48, %c0_51], %285 {strides = array<i32>} : memref<64x32xf32, #tpu.memory_space<vmem>>, vector<8x32xf32>,
    %287 = vector.extract_strided_slice %6 {offsets = [56, 0], sizes = [8, 128], strides = [1, 1]} : vector<64x128xf32> to vector<8x128xf32>
    %cst_52 = arith.constant dense<0.000000e+00> : vector<8x128xf32>
    %288 = tpu.matmul %265, %7, %cst_52 {dimension_numbers = #tpu.dot_dimension_numbers<[1], [0], [0], [1], [0, 0, 1, 1], [], []>} : vector<8x32xf32>, vector<32x128xf32>, vector<8x128xf32> -> vector<8x128xf32>
    %289 = arith.addf %287, %288 : vector<8x128xf32>
    %290 = arith.negf %289 : vector<8x128xf32>
    %291 = math.exp %290 : vector<8x128xf32>
    %cst_53 = arith.constant 1.000000e+00 : f32
    %292 = vector.broadcast %cst_53 : f32 to vector<8x128xf32>
    %293 = arith.addf %292, %291 : vector<8x128xf32>
    %294 = arith.divf %292, %293 : vector<8x128xf32>
    %295 = math.tanh %289 : vector<8x128xf32>
    %296 = vector.extract_strided_slice %294 {offsets = [0, 0], sizes = [8, 32], strides = [1, 1]} : vector<8x128xf32> to vector<8x32xf32>
    %297 = vector.extract_strided_slice %294 {offsets = [0, 32], sizes = [8, 32], strides = [1, 1]} : vector<8x128xf32> to vector<8x32xf32>
    %298 = vector.extract_strided_slice %294 {offsets = [0, 96], sizes = [8, 32], strides = [1, 1]} : vector<8x128xf32> to vector<8x32xf32>
    %299 = vector.extract_strided_slice %295 {offsets = [0, 64], sizes = [8, 32], strides = [1, 1]} : vector<8x128xf32> to vector<8x32xf32>
    %300 = arith.mulf %297, %263 : vector<8x32xf32>
    %301 = arith.mulf %296, %299 : vector<8x32xf32>
    %302 = arith.addf %300, %301 : vector<8x32xf32>
    %303 = math.tanh %302 : vector<8x32xf32>
    %304 = arith.mulf %298, %303 : vector<8x32xf32>
    %305 = tpu.concatenate %304, %284 in 1 : vector<8x32xf32>, vector<8x32xf32> -> vector<8x64xf32>
    %cst_54 = arith.constant dense<0.000000e+00> : vector<8x128xf32>
    %306 = tpu.matmul %305, %8, %cst_54 {dimension_numbers = #tpu.dot_dimension_numbers<[1], [0], [0], [1], [0, 0, 1, 1], [], []>} : vector<8x64xf32>, vector<64x128xf32>, vector<8x128xf32> -> vector<8x128xf32>
    %307 = vector.broadcast %9 : vector<1x128xf32> to vector<8x128xf32>
    %308 = arith.addf %306, %307 : vector<8x128xf32>
    %309 = arith.negf %308 : vector<8x128xf32>
    %310 = math.exp %309 : vector<8x128xf32>
    %cst_55 = arith.constant 1.000000e+00 : f32
    %311 = vector.broadcast %cst_55 : f32 to vector<8x128xf32>
    %312 = arith.addf %311, %310 : vector<8x128xf32>
    %313 = arith.divf %311, %312 : vector<8x128xf32>
    %314 = math.tanh %308 : vector<8x128xf32>
    %315 = vector.extract_strided_slice %313 {offsets = [0, 0], sizes = [8, 32], strides = [1, 1]} : vector<8x128xf32> to vector<8x32xf32>
    %316 = vector.extract_strided_slice %313 {offsets = [0, 32], sizes = [8, 32], strides = [1, 1]} : vector<8x128xf32> to vector<8x32xf32>
    %317 = vector.extract_strided_slice %313 {offsets = [0, 96], sizes = [8, 32], strides = [1, 1]} : vector<8x128xf32> to vector<8x32xf32>
    %318 = vector.extract_strided_slice %314 {offsets = [0, 64], sizes = [8, 32], strides = [1, 1]} : vector<8x128xf32> to vector<8x32xf32>
    %319 = arith.mulf %316, %282 : vector<8x32xf32>
    %320 = arith.mulf %315, %318 : vector<8x32xf32>
    %321 = arith.addf %319, %320 : vector<8x32xf32>
    %322 = math.tanh %321 : vector<8x32xf32>
    %323 = arith.mulf %317, %322 : vector<8x32xf32>
    %324 = math.tanh %323 : vector<8x32xf32>
    %c56 = arith.constant 56 : index
    %c0_56 = arith.constant 0 : index
    %325 = vector.load %arg13[%c56, %c0_56] : memref<64x32xf32, #tpu.memory_space<vmem>>, vector<8x32xf32>
    tpu.vector_store %arg13[%c56, %c0_56], %324 {strides = array<i32>} : memref<64x32xf32, #tpu.memory_space<vmem>>, vector<8x32xf32>,
    %c0_57 = arith.constant 0 : index
    %c0_58 = arith.constant 0 : index
    %326 = vector.load %arg13[%c0_57, %c0_58] : memref<64x32xf32, #tpu.memory_space<vmem>>, vector<64x32xf32>
    %c0_59 = arith.constant 0 : index
    %c0_60 = arith.constant 0 : index
    %327 = vector.load %arg7[%c0_59, %c0_60] : memref<32x4xf32, #tpu.memory_space<vmem>>, vector<32x4xf32>
    %cst_61 = arith.constant dense<0.000000e+00> : vector<64x4xf32>
    %328 = tpu.matmul %326, %327, %cst_61 {dimension_numbers = #tpu.dot_dimension_numbers<[1], [0], [0], [1], [0, 0, 1, 1], [], []>} : vector<64x32xf32>, vector<32x4xf32>, vector<64x4xf32> -> vector<64x4xf32>
    %cst_62 = arith.constant 0.000000e+00 : f32
    %329 = vector.broadcast %cst_62 : f32 to vector<64x4xf32>
    %330 = arith.maximumf %328, %329 : vector<64x4xf32>
    %c0_63 = arith.constant 0 : index
    %c0_64 = arith.constant 0 : index
    %331 = vector.load %arg8[%c0_63, %c0_64] : memref<4x32xf32, #tpu.memory_space<vmem>>, vector<4x32xf32>
    %cst_65 = arith.constant dense<0.000000e+00> : vector<64x32xf32>
    %332 = tpu.matmul %330, %331, %cst_65 {dimension_numbers = #tpu.dot_dimension_numbers<[1], [0], [0], [1], [0, 0, 1, 1], [], []>} : vector<64x4xf32>, vector<4x32xf32>, vector<64x32xf32> -> vector<64x32xf32>
    %333 = vector.extract_strided_slice %332 {offsets = [0, 0], sizes = [8, 32], strides = [1, 1]} : vector<64x32xf32> to vector<8x32xf32>
    %334 = vector.extract_strided_slice %332 {offsets = [0, 0], sizes = [8, 32], strides = [1, 1]} : vector<64x32xf32> to vector<8x32xf32>
    %335 = vector.extract_strided_slice %332 {offsets = [8, 0], sizes = [8, 32], strides = [1, 1]} : vector<64x32xf32> to vector<8x32xf32>
    %336 = arith.addf %333, %335 : vector<8x32xf32>
    %337 = arith.maximumf %334, %335 : vector<8x32xf32>
    %338 = vector.extract_strided_slice %332 {offsets = [16, 0], sizes = [8, 32], strides = [1, 1]} : vector<64x32xf32> to vector<8x32xf32>
    %339 = arith.addf %336, %338 : vector<8x32xf32>
    %340 = arith.maximumf %337, %338 : vector<8x32xf32>
    %341 = vector.extract_strided_slice %332 {offsets = [24, 0], sizes = [8, 32], strides = [1, 1]} : vector<64x32xf32> to vector<8x32xf32>
    %342 = arith.addf %339, %341 : vector<8x32xf32>
    %343 = arith.maximumf %340, %341 : vector<8x32xf32>
    %344 = vector.extract_strided_slice %332 {offsets = [32, 0], sizes = [8, 32], strides = [1, 1]} : vector<64x32xf32> to vector<8x32xf32>
    %345 = arith.addf %342, %344 : vector<8x32xf32>
    %346 = arith.maximumf %343, %344 : vector<8x32xf32>
    %347 = vector.extract_strided_slice %332 {offsets = [40, 0], sizes = [8, 32], strides = [1, 1]} : vector<64x32xf32> to vector<8x32xf32>
    %348 = arith.addf %345, %347 : vector<8x32xf32>
    %349 = arith.maximumf %346, %347 : vector<8x32xf32>
    %350 = vector.extract_strided_slice %332 {offsets = [48, 0], sizes = [8, 32], strides = [1, 1]} : vector<64x32xf32> to vector<8x32xf32>
    %351 = arith.addf %348, %350 : vector<8x32xf32>
    %352 = arith.maximumf %349, %350 : vector<8x32xf32>
    %353 = vector.extract_strided_slice %332 {offsets = [56, 0], sizes = [8, 32], strides = [1, 1]} : vector<64x32xf32> to vector<8x32xf32>
    %354 = arith.addf %351, %353 : vector<8x32xf32>
    %355 = arith.maximumf %352, %353 : vector<8x32xf32>
    %cst_66 = arith.constant 1.250000e-01 : f32
    %356 = vector.broadcast %cst_66 : f32 to vector<8x32xf32>
    %357 = arith.mulf %354, %356 : vector<8x32xf32>
    %358 = arith.addf %357, %355 : vector<8x32xf32>
    %359 = arith.negf %358 : vector<8x32xf32>
    %360 = math.exp %359 : vector<8x32xf32>
    %cst_67 = arith.constant 1.000000e+00 : f32
    %361 = vector.broadcast %cst_67 : f32 to vector<8x32xf32>
    %362 = arith.addf %361, %360 : vector<8x32xf32>
    %363 = arith.divf %361, %362 : vector<8x32xf32>
    %364 = tpu.concatenate %363, %363, %363, %363, %363, %363, %363, %363 in 0 : vector<8x32xf32>, vector<8x32xf32>, vector<8x32xf32>, vector<8x32xf32>, vector<8x32xf32>, vector<8x32xf32>, vector<8x32xf32>, vector<8x32xf32> -> vector<64x32xf32>
    %365 = arith.mulf %326, %364 : vector<64x32xf32>
    %cst_68 = arith.constant dense<0.000000e+00> : vector<64xf32>
    %366 = vector.multi_reduction <add>, %365, %cst_68 [1] : vector<64x32xf32> to vector<64xf32>
    %367 = vector.shape_cast %366 : vector<64xf32> to vector<64x1xf32>
    %cst_69 = arith.constant 3.200000e+01 : f32
    %368 = vector.broadcast %cst_69 : f32 to vector<64x1xf32>
    %369 = arith.divf %367, %368 : vector<64x1xf32>
    %cst_70 = arith.constant dense<0xFF800000> : vector<64xf32>
    %370 = vector.multi_reduction <maximumf>, %365, %cst_70 [1] : vector<64x32xf32> to vector<64xf32>
    %371 = vector.shape_cast %370 : vector<64xf32> to vector<64x1xf32>
    %cst_71 = arith.constant 0.000000e+00 : f32
    %372 = vector.broadcast %cst_71 : f32 to vector<24x1xf32>
    %373 = tpu.concatenate %372, %369, %372 in 0 : vector<24x1xf32>, vector<64x1xf32>, vector<24x1xf32> -> vector<112x1xf32>
    %374 = tpu.concatenate %372, %371, %372 in 0 : vector<24x1xf32>, vector<64x1xf32>, vector<24x1xf32> -> vector<112x1xf32>
    %cst_72 = arith.constant 0.000000e+00 : f32
    %375 = vector.broadcast %cst_72 : f32 to vector<64x1xf32>
    %c0_73 = arith.constant 0 : index
    %376 = memref.load %arg9[%c0_73] : memref<14xf32, #tpu.memory_space<smem>>
    %377 = vector.extract_strided_slice %373 {offsets = [0, 0], sizes = [64, 1], strides = [1, 1]} : vector<112x1xf32> to vector<64x1xf32>
    %378 = vector.broadcast %376 : f32 to vector<64x1xf32>
    %379 = arith.mulf %378, %377 : vector<64x1xf32>
    %380 = arith.addf %375, %379 : vector<64x1xf32>
    %c7 = arith.constant 7 : index
    %381 = memref.load %arg9[%c7] : memref<14xf32, #tpu.memory_space<smem>>
    %382 = vector.extract_strided_slice %374 {offsets = [0, 0], sizes = [64, 1], strides = [1, 1]} : vector<112x1xf32> to vector<64x1xf32>
    %383 = vector.broadcast %381 : f32 to vector<64x1xf32>
    %384 = arith.mulf %383, %382 : vector<64x1xf32>
    %385 = arith.addf %380, %384 : vector<64x1xf32>
    %c1 = arith.constant 1 : index
    %386 = memref.load %arg9[%c1] : memref<14xf32, #tpu.memory_space<smem>>
    %387 = vector.extract_strided_slice %373 {offsets = [8, 0], sizes = [64, 1], strides = [1, 1]} : vector<112x1xf32> to vector<64x1xf32>
    %388 = vector.broadcast %386 : f32 to vector<64x1xf32>
    %389 = arith.mulf %388, %387 : vector<64x1xf32>
    %390 = arith.addf %385, %389 : vector<64x1xf32>
    %c8_74 = arith.constant 8 : index
    %391 = memref.load %arg9[%c8_74] : memref<14xf32, #tpu.memory_space<smem>>
    %392 = vector.extract_strided_slice %374 {offsets = [8, 0], sizes = [64, 1], strides = [1, 1]} : vector<112x1xf32> to vector<64x1xf32>
    %393 = vector.broadcast %391 : f32 to vector<64x1xf32>
    %394 = arith.mulf %393, %392 : vector<64x1xf32>
    %395 = arith.addf %390, %394 : vector<64x1xf32>
    %c2 = arith.constant 2 : index
    %396 = memref.load %arg9[%c2] : memref<14xf32, #tpu.memory_space<smem>>
    %397 = vector.extract_strided_slice %373 {offsets = [16, 0], sizes = [64, 1], strides = [1, 1]} : vector<112x1xf32> to vector<64x1xf32>
    %398 = vector.broadcast %396 : f32 to vector<64x1xf32>
    %399 = arith.mulf %398, %397 : vector<64x1xf32>
    %400 = arith.addf %395, %399 : vector<64x1xf32>
    %c9 = arith.constant 9 : index
    %401 = memref.load %arg9[%c9] : memref<14xf32, #tpu.memory_space<smem>>
    %402 = vector.extract_strided_slice %374 {offsets = [16, 0], sizes = [64, 1], strides = [1, 1]} : vector<112x1xf32> to vector<64x1xf32>
    %403 = vector.broadcast %401 : f32 to vector<64x1xf32>
    %404 = arith.mulf %403, %402 : vector<64x1xf32>
    %405 = arith.addf %400, %404 : vector<64x1xf32>
    %c3 = arith.constant 3 : index
    %406 = memref.load %arg9[%c3] : memref<14xf32, #tpu.memory_space<smem>>
    %407 = vector.extract_strided_slice %373 {offsets = [24, 0], sizes = [64, 1], strides = [1, 1]} : vector<112x1xf32> to vector<64x1xf32>
    %408 = vector.broadcast %406 : f32 to vector<64x1xf32>
    %409 = arith.mulf %408, %407 : vector<64x1xf32>
    %410 = arith.addf %405, %409 : vector<64x1xf32>
    %c10 = arith.constant 10 : index
    %411 = memref.load %arg9[%c10] : memref<14xf32, #tpu.memory_space<smem>>
    %412 = vector.extract_strided_slice %374 {offsets = [24, 0], sizes = [64, 1], strides = [1, 1]} : vector<112x1xf32> to vector<64x1xf32>
    %413 = vector.broadcast %411 : f32 to vector<64x1xf32>
    %414 = arith.mulf %413, %412 : vector<64x1xf32>
    %415 = arith.addf %410, %414 : vector<64x1xf32>
    %c4 = arith.constant 4 : index
    %416 = memref.load %arg9[%c4] : memref<14xf32, #tpu.memory_space<smem>>
    %417 = vector.extract_strided_slice %373 {offsets = [32, 0], sizes = [64, 1], strides = [1, 1]} : vector<112x1xf32> to vector<64x1xf32>
    %418 = vector.broadcast %416 : f32 to vector<64x1xf32>
    %419 = arith.mulf %418, %417 : vector<64x1xf32>
    %420 = arith.addf %415, %419 : vector<64x1xf32>
    %c11 = arith.constant 11 : index
    %421 = memref.load %arg9[%c11] : memref<14xf32, #tpu.memory_space<smem>>
    %422 = vector.extract_strided_slice %374 {offsets = [32, 0], sizes = [64, 1], strides = [1, 1]} : vector<112x1xf32> to vector<64x1xf32>
    %423 = vector.broadcast %421 : f32 to vector<64x1xf32>
    %424 = arith.mulf %423, %422 : vector<64x1xf32>
    %425 = arith.addf %420, %424 : vector<64x1xf32>
    %c5 = arith.constant 5 : index
    %426 = memref.load %arg9[%c5] : memref<14xf32, #tpu.memory_space<smem>>
    %427 = vector.extract_strided_slice %373 {offsets = [40, 0], sizes = [64, 1], strides = [1, 1]} : vector<112x1xf32> to vector<64x1xf32>
    %428 = vector.broadcast %426 : f32 to vector<64x1xf32>
    %429 = arith.mulf %428, %427 : vector<64x1xf32>
    %430 = arith.addf %425, %429 : vector<64x1xf32>
    %c12 = arith.constant 12 : index
    %431 = memref.load %arg9[%c12] : memref<14xf32, #tpu.memory_space<smem>>
    %432 = vector.extract_strided_slice %374 {offsets = [40, 0], sizes = [64, 1], strides = [1, 1]} : vector<112x1xf32> to vector<64x1xf32>
    %433 = vector.broadcast %431 : f32 to vector<64x1xf32>
    %434 = arith.mulf %433, %432 : vector<64x1xf32>
    %435 = arith.addf %430, %434 : vector<64x1xf32>
    %c6 = arith.constant 6 : index
    %436 = memref.load %arg9[%c6] : memref<14xf32, #tpu.memory_space<smem>>
    %437 = vector.extract_strided_slice %373 {offsets = [48, 0], sizes = [64, 1], strides = [1, 1]} : vector<112x1xf32> to vector<64x1xf32>
    %438 = vector.broadcast %436 : f32 to vector<64x1xf32>
    %439 = arith.mulf %438, %437 : vector<64x1xf32>
    %440 = arith.addf %435, %439 : vector<64x1xf32>
    %c13 = arith.constant 13 : index
    %441 = memref.load %arg9[%c13] : memref<14xf32, #tpu.memory_space<smem>>
    %442 = vector.extract_strided_slice %374 {offsets = [48, 0], sizes = [64, 1], strides = [1, 1]} : vector<112x1xf32> to vector<64x1xf32>
    %443 = vector.broadcast %441 : f32 to vector<64x1xf32>
    %444 = arith.mulf %443, %442 : vector<64x1xf32>
    %445 = arith.addf %440, %444 : vector<64x1xf32>
    %446 = arith.negf %445 : vector<64x1xf32>
    %447 = math.exp %446 : vector<64x1xf32>
    %cst_75 = arith.constant 1.000000e+00 : f32
    %448 = vector.broadcast %cst_75 : f32 to vector<64x1xf32>
    %449 = arith.addf %448, %447 : vector<64x1xf32>
    %450 = arith.divf %448, %449 : vector<64x1xf32>
    %451 = vector.broadcast %450 : vector<64x1xf32> to vector<64x32xf32>
    %452 = arith.mulf %365, %451 : vector<64x32xf32>
    %453 = vector.extract_strided_slice %452 {offsets = [0, 0], sizes = [8, 32], strides = [1, 1]} : vector<64x32xf32> to vector<8x32xf32>
    %454 = vector.extract_strided_slice %452 {offsets = [8, 0], sizes = [8, 32], strides = [1, 1]} : vector<64x32xf32> to vector<8x32xf32>
    %455 = arith.maximumf %453, %454 : vector<8x32xf32>
    %456 = vector.extract_strided_slice %452 {offsets = [16, 0], sizes = [8, 32], strides = [1, 1]} : vector<64x32xf32> to vector<8x32xf32>
    %457 = arith.maximumf %455, %456 : vector<8x32xf32>
    %458 = vector.extract_strided_slice %452 {offsets = [24, 0], sizes = [8, 32], strides = [1, 1]} : vector<64x32xf32> to vector<8x32xf32>
    %459 = arith.maximumf %457, %458 : vector<8x32xf32>
    %460 = vector.extract_strided_slice %452 {offsets = [32, 0], sizes = [8, 32], strides = [1, 1]} : vector<64x32xf32> to vector<8x32xf32>
    %461 = arith.maximumf %459, %460 : vector<8x32xf32>
    %462 = vector.extract_strided_slice %452 {offsets = [40, 0], sizes = [8, 32], strides = [1, 1]} : vector<64x32xf32> to vector<8x32xf32>
    %463 = arith.maximumf %461, %462 : vector<8x32xf32>
    %464 = vector.extract_strided_slice %452 {offsets = [48, 0], sizes = [8, 32], strides = [1, 1]} : vector<64x32xf32> to vector<8x32xf32>
    %465 = arith.maximumf %463, %464 : vector<8x32xf32>
    %466 = vector.extract_strided_slice %452 {offsets = [56, 0], sizes = [8, 32], strides = [1, 1]} : vector<64x32xf32> to vector<8x32xf32>
    %467 = arith.maximumf %465, %466 : vector<8x32xf32>
    %c0_76 = arith.constant 0 : index
    %c0_77 = arith.constant 0 : index
    %468 = vector.load %arg10[%c0_76, %c0_77] : memref<32x2xf32, #tpu.memory_space<vmem>>, vector<32x2xf32>
    %cst_78 = arith.constant dense<0.000000e+00> : vector<8x2xf32>
    %469 = tpu.matmul %467, %468, %cst_78 {dimension_numbers = #tpu.dot_dimension_numbers<[1], [0], [0], [1], [0, 0, 1, 1], [], []>} : vector<8x32xf32>, vector<32x2xf32>, vector<8x2xf32> -> vector<8x2xf32>
    %c0_79 = arith.constant 0 : index
    %c0_80 = arith.constant 0 : index
    %470 = vector.load %arg11[%c0_79, %c0_80] : memref<1x2xf32, #tpu.memory_space<vmem>>, vector<1x2xf32>
    %471 = vector.broadcast %470 : vector<1x2xf32> to vector<8x2xf32>
    %472 = arith.addf %469, %471 : vector<8x2xf32>
    %473 = arith.negf %472 : vector<8x2xf32>
    %474 = math.exp %473 : vector<8x2xf32>
    %cst_81 = arith.constant 1.000000e+00 : f32
    %475 = vector.broadcast %cst_81 : f32 to vector<8x2xf32>
    %476 = arith.addf %475, %474 : vector<8x2xf32>
    %477 = arith.divf %475, %476 : vector<8x2xf32>
    %c0_82 = arith.constant 0 : index
    %c0_83 = arith.constant 0 : index
    %478 = vector.load %arg12[%c0_82, %c0_83] : memref<8x2xf32, #tpu.memory_space<vmem>>, vector<8x2xf32>
    tpu.vector_store %arg12[%c0_82, %c0_83], %477 {strides = array<i32>} : memref<8x2xf32, #tpu.memory_space<vmem>>, vector<8x2xf32>,
    return
  }
  func.func @transform_0(%arg0: i32) -> (i32, i32, i32) {
    %c0_i32 = arith.constant 0 : i32
    %c0_i32_0 = arith.constant 0 : i32
    %c0_i32_1 = arith.constant 0 : i32
    return %arg0, %c0_i32, %c0_i32_0 : i32, i32, i32
  }
  func.func @transform_1(%arg0: i32) -> (i32, i32) {
    %c0_i32 = arith.constant 0 : i32
    %c0_i32_0 = arith.constant 0 : i32
    %c0_i32_1 = arith.constant 0 : i32
    return %c0_i32, %c0_i32_0 : i32, i32
  }
  func.func @transform_2(%arg0: i32) -> (i32, i32) {
    %c0_i32 = arith.constant 0 : i32
    %c0_i32_0 = arith.constant 0 : i32
    %c0_i32_1 = arith.constant 0 : i32
    return %c0_i32, %c0_i32_0 : i32, i32
  }
  func.func @transform_3(%arg0: i32) -> (i32, i32) {
    %c0_i32 = arith.constant 0 : i32
    %c0_i32_0 = arith.constant 0 : i32
    %c0_i32_1 = arith.constant 0 : i32
    return %c0_i32, %c0_i32_0 : i32, i32
  }
  func.func @transform_4(%arg0: i32) -> (i32, i32) {
    %c0_i32 = arith.constant 0 : i32
    %c0_i32_0 = arith.constant 0 : i32
    %c0_i32_1 = arith.constant 0 : i32
    return %c0_i32, %c0_i32_0 : i32, i32
  }
  func.func @transform_5(%arg0: i32) -> (i32, i32) {
    %c0_i32 = arith.constant 0 : i32
    %c0_i32_0 = arith.constant 0 : i32
    %c0_i32_1 = arith.constant 0 : i32
    return %c0_i32, %c0_i32_0 : i32, i32
  }
  func.func @transform_6(%arg0: i32) -> (i32, i32) {
    %c0_i32 = arith.constant 0 : i32
    %c0_i32_0 = arith.constant 0 : i32
    %c0_i32_1 = arith.constant 0 : i32
    return %c0_i32, %c0_i32_0 : i32, i32
  }
  func.func @transform_7(%arg0: i32) -> (i32, i32) {
    %c0_i32 = arith.constant 0 : i32
    %c0_i32_0 = arith.constant 0 : i32
    %c0_i32_1 = arith.constant 0 : i32
    return %c0_i32, %c0_i32_0 : i32, i32
  }
  func.func @transform_8(%arg0: i32) -> i32 {
    %c0_i32 = arith.constant 0 : i32
    %c0_i32_0 = arith.constant 0 : i32
    return %c0_i32 : i32
  }
  func.func @transform_9(%arg0: i32) -> (i32, i32) {
    %c0_i32 = arith.constant 0 : i32
    %c0_i32_0 = arith.constant 0 : i32
    %c0_i32_1 = arith.constant 0 : i32
    return %c0_i32, %c0_i32_0 : i32, i32
  }
  func.func @transform_10(%arg0: i32) -> (i32, i32) {
    %c0_i32 = arith.constant 0 : i32
    %c0_i32_0 = arith.constant 0 : i32
    %c0_i32_1 = arith.constant 0 : i32
    return %c0_i32, %c0_i32_0 : i32, i32
  }
  func.func @transform_11(%arg0: i32) -> (i32, i32) {
    %c0_i32 = arith.constant 0 : i32
    %c0_i32_0 = arith.constant 0 : i32
    return %arg0, %c0_i32 : i32, i32
  }
}

</mosaic_0001>

<llo_original>
// kernel: model_forward.1
$region0: #{model_forward.1}
  #allocation0 [shape = 'u32[]', space=smem, size = 0x4, offset = 0x4, fixed_abs, tag = 'smem constant byte address 0x4 - core index']
  #allocation1 [shape = 'u32[144,128]{1,0:T(1,128)}', space=vmem, size = 0x12000, scoped, tag = 'internal scratch']
  #allocation2 [shape = 'f32[64,32]{1,0:T(8,128)}', space=vmem, size = 0x8000, scoped, tag = 'scratch operand']
  %s0 = inlined_call_operand.vmem [shape: f32[2,64,16], index: 0, kind: input, shape index: {}]
  %s1 = inlined_call_operand.vmem [shape: f32[16,128], index: 1, kind: input, shape index: {}]
  %s2 = inlined_call_operand.vmem [shape: f32[32,128], index: 2, kind: input, shape index: {}]
  %s3 = inlined_call_operand.vmem [shape: f32[1,128], index: 3, kind: input, shape index: {}]
  %s4 = inlined_call_operand.vmem [shape: f32[64,128], index: 4, kind: input, shape index: {}]
  %s5 = inlined_call_operand.vmem [shape: f32[1,128], index: 5, kind: input, shape index: {}]
  %s6 = inlined_call_operand.vmem [shape: f32[32,4], index: 6, kind: input, shape index: {}]
  %s7 = inlined_call_operand.vmem [shape: f32[4,32], index: 7, kind: input, shape index: {}]
  %s8 = inlined_call_operand.vmem [shape: f32[14], index: 8, kind: input, shape index: {}]
  %s9 = inlined_call_operand.vmem [shape: f32[32,2], index: 9, kind: input, shape index: {}]
  %s10 = inlined_call_operand.vmem [shape: f32[1,2], index: 10, kind: input, shape index: {}]
  %s11 = inlined_call_operand.vmem [shape: f32[16,2], index: 11, kind: output, shape index: {}]
  %s12 = sld [smem:[#allocation0]]
  $region81: #{model_forward.1} parent=0
    _
  %s14 = ssub.s32 1, %s12
  %s15 = scalar_select 0, %s14, %s12
  $region1: #{model_forward.1} parent=0
    #allocation3 [shape = 'u8[512]{0}', space=smem, size = 0x200, scoped, tag = 'input window, operand 8, single buffered']
    #allocation4 [shape = 's32[2]{0}', space=sflag, size = 0x8, scoped, tag = 'scoped memory for model_forward.1']
    %16 = vsyncpa [#allocation4], 0
    loop: start=0, step=1, limit=4
    $region2: #{model_forward.1} parent=1 // loop_pre_header
      _
    $region3: #{model_forward.1} parent=1 // loop_header
      %s18 = sphi 0, %s22
      %p19 = scmp.ge.s32.totalorder %s18, 4
      %s28 = sphi 0, %s30
      %s31 = sphi 0, %s28
      %s32 = sphi 0, %s31
      %s48 = sphi 0, %s32
      %s52 = sphi 0, %s52
      %s54 = sphi 0, %s52
      %s55 = sphi 0, %s54
      %s69 = sphi 0, %s55
      %s73 = sphi 0, %s73
      %s75 = sphi 0, %s73
      %s76 = sphi 0, %s75
      %s90 = sphi 0, %s76
      %s94 = sphi 0, %s94
      %s96 = sphi 0, %s94
      %s97 = sphi 0, %s96
      %s111 = sphi 0, %s97
      %s115 = sphi 0, %s115
      %s117 = sphi 0, %s115
      %s118 = sphi 0, %s117
      %s132 = sphi 0, %s118
      %s136 = sphi 0, %s136
      %s138 = sphi 0, %s136
      %s139 = sphi 0, %s138
      %s153 = sphi 0, %s139
      %s157 = sphi 0, %s157
      %s159 = sphi 0, %s157
      %s160 = sphi 0, %s159
      %s174 = sphi 0, %s160
      %s178 = sphi 0, %s178
      %s180 = sphi 0, %s178
      %s181 = sphi 0, %s180
      %s195 = sphi 0, %s181
      %s199 = sphi 0, %s199
      %s201 = sphi 0, %s199
      %s202 = sphi 0, %s201
      %s216 = sphi 0, %s202
      %s220 = sphi 0, %s220
      %s222 = sphi 0, %s220
      %s223 = sphi 0, %s222
      %s237 = sphi 0, %s223
      %s241 = sphi 0, %s241
      %s243 = sphi 0, %s241
      %s244 = sphi 0, %s243
      %s258 = sphi 0, %s244
      %s264 = sphi 0, %s266
      %s267 = sphi 0, %s264
      %s268 = sphi 0, %s267
      %s284 = sphi 0, %s268
    $region4: #{model_forward.1} parent=1 // loop_header_branch
      %21 = sbr.rel (%p19) target = $region8
    $region5: #{model_forward.1} parent=1 // loop_body
      %s23 = ssub.s32 %s18, 1
      %s24 = ssub.s32 %s18, 2
      %s25 = sadd.s32 %s18, 1
      %s26 = ssub.s32 %s18, %s25
      %p27 = scmp.eq.s32.totalorder %s26, 0
      %s29 = sadd.s32 %s28, 1
      %s30 = scalar_select %p27, %s28, %s29
      %p33 = pneg %p27
      %p34 = scmp.eq.s32.totalorder %s18, 1
      %p35 = por %p33, %p34
      %p36 = scmp.ne.s32.totalorder %s28, %s31
      %p37 = scmp.eq.s32.totalorder %s18, 0
      %p38 = por %p36, %p37
      %p39 = scmp.ne.s32.totalorder %s28, %s31
      %p40 = scmp.eq.s32.totalorder %s23, 1
      %p41 = por %p39, %p40
      %p42 = scmp.ne.s32.totalorder %s31, %s32
      %p43 = scmp.eq.s32.totalorder %s23, 0
      %p44 = por %p42, %p43
      %p45 = scmp.ne.s32.totalorder %s31, %s32
      %p46 = scmp.eq.s32.totalorder %s24, 1
      %p47 = por %p45, %p46
      %p49 = scmp.ne.s32.totalorder %s32, %s48
      %p50 = scmp.eq.s32.totalorder %s24, 0
      %p51 = por %p49, %p50
      %s53 = sadd.s32 %s52, 1
      %p56 = scmp.eq.s32.totalorder %s18, 1
      %p57 = scmp.ne.s32.totalorder %s52, %s54
      %p58 = scmp.eq.s32.totalorder %s18, 0
      %p59 = por %p57, %p58
      %p60 = scmp.ne.s32.totalorder %s52, %s54
      %p61 = scmp.eq.s32.totalorder %s23, 1
      %p62 = por %p60, %p61
      %p63 = scmp.ne.s32.totalorder %s54, %s55
      %p64 = scmp.eq.s32.totalorder %s23, 0
      %p65 = por %p63, %p64
      %p66 = scmp.ne.s32.totalorder %s54, %s55
      %p67 = scmp.eq.s32.totalorder %s24, 1
      %p68 = por %p66, %p67
      %p70 = scmp.ne.s32.totalorder %s55, %s69
      %p71 = scmp.eq.s32.totalorder %s24, 0
      %p72 = por %p70, %p71
      %s74 = sadd.s32 %s73, 1
      %p77 = scmp.eq.s32.totalorder %s18, 1
      %p78 = scmp.ne.s32.totalorder %s73, %s75
      %p79 = scmp.eq.s32.totalorder %s18, 0
      %p80 = por %p78, %p79
      %p81 = scmp.ne.s32.totalorder %s73, %s75
      %p82 = scmp.eq.s32.totalorder %s23, 1
      %p83 = por %p81, %p82
      %p84 = scmp.ne.s32.totalorder %s75, %s76
      %p85 = scmp.eq.s32.totalorder %s23, 0
      %p86 = por %p84, %p85
      %p87 = scmp.ne.s32.totalorder %s75, %s76
      %p88 = scmp.eq.s32.totalorder %s24, 1
      %p89 = por %p87, %p88
      %p91 = scmp.ne.s32.totalorder %s76, %s90
      %p92 = scmp.eq.s32.totalorder %s24, 0
      %p93 = por %p91, %p92
      %s95 = sadd.s32 %s94, 1
      %p98 = scmp.eq.s32.totalorder %s18, 1
      %p99 = scmp.ne.s32.totalorder %s94, %s96
      %p100 = scmp.eq.s32.totalorder %s18, 0
      %p101 = por %p99, %p100
      %p102 = scmp.ne.s32.totalorder %s94, %s96
      %p103 = scmp.eq.s32.totalorder %s23, 1
      %p104 = por %p102, %p103
      %p105 = scmp.ne.s32.totalorder %s96, %s97
      %p106 = scmp.eq.s32.totalorder %s23, 0
      %p107 = por %p105, %p106
      %p108 = scmp.ne.s32.totalorder %s96, %s97
      %p109 = scmp.eq.s32.totalorder %s24, 1
      %p110 = por %p108, %p109
      %p112 = scmp.ne.s32.totalorder %s97, %s111
      %p113 = scmp.eq.s32.totalorder %s24, 0
      %p114 = por %p112, %p113
      %s116 = sadd.s32 %s115, 1
      %p119 = scmp.eq.s32.totalorder %s18, 1
      %p120 = scmp.ne.s32.totalorder %s115, %s117
      %p121 = scmp.eq.s32.totalorder %s18, 0
      %p122 = por %p120, %p121
      %p123 = scmp.ne.s32.totalorder %s115, %s117
      %p124 = scmp.eq.s32.totalorder %s23, 1
      %p125 = por %p123, %p124
      %p126 = scmp.ne.s32.totalorder %s117, %s118
      %p127 = scmp.eq.s32.totalorder %s23, 0
      %p128 = por %p126, %p127
      %p129 = scmp.ne.s32.totalorder %s117, %s118
      %p130 = scmp.eq.s32.totalorder %s24, 1
      %p131 = por %p129, %p130
      %p133 = scmp.ne.s32.totalorder %s118, %s132
      %p134 = scmp.eq.s32.totalorder %s24, 0
      %p135 = por %p133, %p134
      %s137 = sadd.s32 %s136, 1
      %p140 = scmp.eq.s32.totalorder %s18, 1
      %p141 = scmp.ne.s32.totalorder %s136, %s138
      %p142 = scmp.eq.s32.totalorder %s18, 0
      %p143 = por %p141, %p142
      %p144 = scmp.ne.s32.totalorder %s136, %s138
      %p145 = scmp.eq.s32.totalorder %s23, 1
      %p146 = por %p144, %p145
      %p147 = scmp.ne.s32.totalorder %s138, %s139
      %p148 = scmp.eq.s32.totalorder %s23, 0
      %p149 = por %p147, %p148
      %p150 = scmp.ne.s32.totalorder %s138, %s139
      %p151 = scmp.eq.s32.totalorder %s24, 1
      %p152 = por %p150, %p151
      %p154 = scmp.ne.s32.totalorder %s139, %s153
      %p155 = scmp.eq.s32.totalorder %s24, 0
      %p156 = por %p154, %p155
      %s158 = sadd.s32 %s157, 1
      %p161 = scmp.eq.s32.totalorder %s18, 1
      %p162 = scmp.ne.s32.totalorder %s157, %s159
      %p163 = scmp.eq.s32.totalorder %s18, 0
      %p164 = por %p162, %p163
      %p165 = scmp.ne.s32.totalorder %s157, %s159
      %p166 = scmp.eq.s32.totalorder %s23, 1
      %p167 = por %p165, %p166
      %p168 = scmp.ne.s32.totalorder %s159, %s160
      %p169 = scmp.eq.s32.totalorder %s23, 0
      %p170 = por %p168, %p169
      %p171 = scmp.ne.s32.totalorder %s159, %s160
      %p172 = scmp.eq.s32.totalorder %s24, 1
      %p173 = por %p171, %p172
      %p175 = scmp.ne.s32.totalorder %s160, %s174
      %p176 = scmp.eq.s32.totalorder %s24, 0
      %p177 = por %p175, %p176
      %s179 = sadd.s32 %s178, 1
      %p182 = scmp.eq.s32.totalorder %s18, 1
      %p183 = scmp.ne.s32.totalorder %s178, %s180
      %p184 = scmp.eq.s32.totalorder %s18, 0
      %p185 = por %p183, %p184
      %p186 = scmp.ne.s32.totalorder %s178, %s180
      %p187 = scmp.eq.s32.totalorder %s23, 1
      %p188 = por %p186, %p187
      %p189 = scmp.ne.s32.totalorder %s180, %s181
      %p190 = scmp.eq.s32.totalorder %s23, 0
      %p191 = por %p189, %p190
      %p192 = scmp.ne.s32.totalorder %s180, %s181
      %p193 = scmp.eq.s32.totalorder %s24, 1
      %p194 = por %p192, %p193
      %p196 = scmp.ne.s32.totalorder %s181, %s195
      %p197 = scmp.eq.s32.totalorder %s24, 0
      %p198 = por %p196, %p197
      %s200 = sadd.s32 %s199, 1
      %p203 = scmp.eq.s32.totalorder %s18, 1
      %p204 = scmp.ne.s32.totalorder %s199, %s201
      %p205 = scmp.eq.s32.totalorder %s18, 0
      %p206 = por %p204, %p205
      %p207 = scmp.ne.s32.totalorder %s199, %s201
      %p208 = scmp.eq.s32.totalorder %s23, 1
      %p209 = por %p207, %p208
      %p210 = scmp.ne.s32.totalorder %s201, %s202
      %p211 = scmp.eq.s32.totalorder %s23, 0
      %p212 = por %p210, %p211
      %p213 = scmp.ne.s32.totalorder %s201, %s202
      %p214 = scmp.eq.s32.totalorder %s24, 1
      %p215 = por %p213, %p214
      %p217 = scmp.ne.s32.totalorder %s202, %s216
      %p218 = scmp.eq.s32.totalorder %s24, 0
      %p219 = por %p217, %p218
      %s221 = sadd.s32 %s220, 1
      %p224 = scmp.eq.s32.totalorder %s18, 1
      %p225 = scmp.ne.s32.totalorder %s220, %s222
      %p226 = scmp.eq.s32.totalorder %s18, 0
      %p227 = por %p225, %p226
      %p228 = scmp.ne.s32.totalorder %s220, %s222
      %p229 = scmp.eq.s32.totalorder %s23, 1
      %p230 = por %p228, %p229
      %p231 = scmp.ne.s32.totalorder %s222, %s223
      %p232 = scmp.eq.s32.totalorder %s23, 0
      %p233 = por %p231, %p232
      %p234 = scmp.ne.s32.totalorder %s222, %s223
      %p235 = scmp.eq.s32.totalorder %s24, 1
      %p236 = por %p234, %p235
      %p238 = scmp.ne.s32.totalorder %s223, %s237
      %p239 = scmp.eq.s32.totalorder %s24, 0
      %p240 = por %p238, %p239
      %s242 = sadd.s32 %s241, 1
      %p245 = scmp.eq.s32.totalorder %s18, 1
      %p246 = scmp.ne.s32.totalorder %s241, %s243
      %p247 = scmp.eq.s32.totalorder %s18, 0
      %p248 = por %p246, %p247
      %p249 = scmp.ne.s32.totalorder %s241, %s243
      %p250 = scmp.eq.s32.totalorder %s23, 1
      %p251 = por %p249, %p250
      %p252 = scmp.ne.s32.totalorder %s243, %s244
      %p253 = scmp.eq.s32.totalorder %s23, 0
      %p254 = por %p252, %p253
      %p255 = scmp.ne.s32.totalorder %s243, %s244
      %p256 = scmp.eq.s32.totalorder %s24, 1
      %p257 = por %p255, %p256
      %p259 = scmp.ne.s32.totalorder %s244, %s258
      %p260 = scmp.eq.s32.totalorder %s24, 0
      %p261 = por %p259, %p260
      %s262 = ssub.s32 %s18, %s25
      %p263 = scmp.eq.s32.totalorder %s262, 0
      %s265 = sadd.s32 %s264, 1
      %s266 = scalar_select %p263, %s264, %s265
      %p269 = pneg %p263
      %p270 = scmp.eq.s32.totalorder %s18, 1
      %p271 = por %p269, %p270
      %p272 = scmp.ne.s32.totalorder %s264, %s267
      %p273 = scmp.eq.s32.totalorder %s18, 0
      %p274 = por %p272, %p273
      %p275 = scmp.ne.s32.totalorder %s264, %s267
      %p276 = scmp.eq.s32.totalorder %s23, 1
      %p277 = por %p275, %p276
      %p278 = scmp.ne.s32.totalorder %s267, %s268
      %p279 = scmp.eq.s32.totalorder %s23, 0
      %p280 = por %p278, %p279
      %p281 = scmp.ne.s32.totalorder %s267, %s268
      %p282 = scmp.eq.s32.totalorder %s24, 1
      %p283 = por %p281, %p282
      %p285 = scmp.ne.s32.totalorder %s268, %s284
      %p286 = scmp.eq.s32.totalorder %s24, 0
      %p287 = por %p285, %p286
      %p288 = scmp.le.s32.totalorder 1, %s18
      %p289 = scmp.lt.s32.totalorder %s18, 3
      %p290 = pnand %p288, %p289
      %p291 = pneg %p290
      // Predicated region
      $region9: #{model_forward.1} parent=5 // pred_check
        _
      $region10: #{model_forward.1} parent=5 // pred_check_branch
        %293 = sbr.rel (%p290) target = $region12
      $region11: #{model_forward.1} parent=5 // pred_region
        %s294 = ssub.s32 %s18, 1
        // Predicated region
        $region13: #{model_forward.1} parent=11 // pred_check
          %p295 = pneg %p65
        $region14: #{model_forward.1} parent=11 // pred_check_branch
          %297 = sbr.rel (%p295) target = $region16
        $region15: #{model_forward.1} parent=11 // pred_region
          _
        $region16: #{model_forward.1} parent=11 // pred_fallthru
          _
        // Predicated region
        $region17: #{model_forward.1} parent=11 // pred_check
          %p298 = pneg %p86
        $region18: #{model_forward.1} parent=11 // pred_check_branch
          %300 = sbr.rel (%p298) target = $region20
        $region19: #{model_forward.1} parent=11 // pred_region
          _
        $region20: #{model_forward.1} parent=11 // pred_fallthru
          _
        // Predicated region
        $region21: #{model_forward.1} parent=11 // pred_check
          %p301 = pneg %p107
        $region22: #{model_forward.1} parent=11 // pred_check_branch
          %303 = sbr.rel (%p301) target = $region24
        $region23: #{model_forward.1} parent=11 // pred_region
          _
        $region24: #{model_forward.1} parent=11 // pred_fallthru
          _
        // Predicated region
        $region25: #{model_forward.1} parent=11 // pred_check
          %p304 = pneg %p128
        $region26: #{model_forward.1} parent=11 // pred_check_branch
          %306 = sbr.rel (%p304) target = $region28
        $region27: #{model_forward.1} parent=11 // pred_region
          _
        $region28: #{model_forward.1} parent=11 // pred_fallthru
          _
        // Predicated region
        $region29: #{model_forward.1} parent=11 // pred_check
          %p307 = pneg %p149
        $region30: #{model_forward.1} parent=11 // pred_check_branch
          %309 = sbr.rel (%p307) target = $region32
        $region31: #{model_forward.1} parent=11 // pred_region
          _
        $region32: #{model_forward.1} parent=11 // pred_fallthru
          _
        // Predicated region
        $region33: #{model_forward.1} parent=11 // pred_check
          %p310 = pneg %p170
        $region34: #{model_forward.1} parent=11 // pred_check_branch
          %312 = sbr.rel (%p310) target = $region36
        $region35: #{model_forward.1} parent=11 // pred_region
          _
        $region36: #{model_forward.1} parent=11 // pred_fallthru
          _
        // Predicated region
        $region37: #{model_forward.1} parent=11 // pred_check
          %p313 = pneg %p191
        $region38: #{model_forward.1} parent=11 // pred_check_branch
          %315 = sbr.rel (%p313) target = $region40
        $region39: #{model_forward.1} parent=11 // pred_region
          _
        $region40: #{model_forward.1} parent=11 // pred_fallthru
          _
        // Predicated region
        $region41: #{model_forward.1} parent=11 // pred_check
          %p316 = pneg %p212
        $region42: #{model_forward.1} parent=11 // pred_check_branch
          %318 = sbr.rel (%p316) target = $region44
        $region43: #{model_forward.1} parent=11 // pred_region
          %s320 = ssub.s32 16, 16
          %321 = vsyncadd [#allocation4], %s320
          %s323 = sshll.u32 %s8, 4
          %s324 = int_to_ptr.vmem [resolvable:$true] %s323
          %326 = dma.vmem_to_smem %s324, 16, [#allocation3], [#allocation4]
        $region44: #{model_forward.1} parent=11 // pred_fallthru
          _
        // Predicated region
        $region45: #{model_forward.1} parent=11 // pred_check
          %p327 = pneg %p233
        $region46: #{model_forward.1} parent=11 // pred_check_branch
          %329 = sbr.rel (%p327) target = $region48
        $region47: #{model_forward.1} parent=11 // pred_region
          _
        $region48: #{model_forward.1} parent=11 // pred_fallthru
          _
        // Predicated region
        $region49: #{model_forward.1} parent=11 // pred_check
          %p330 = pneg %p254
        $region50: #{model_forward.1} parent=11 // pred_check_branch
          %332 = sbr.rel (%p330) target = $region52
        $region51: #{model_forward.1} parent=11 // pred_region
          _
        $region52: #{model_forward.1} parent=11 // pred_fallthru
          _
      $region12: #{model_forward.1} parent=5 // pred_fallthru
        _
      %p333 = scmp.lt.s32.totalorder %s18, 2
      // Predicated region
      $region53: #{model_forward.1} parent=5 // pred_check
        %p334 = pneg %p333
      $region54: #{model_forward.1} parent=5 // pred_check_branch
        %336 = sbr.rel (%p334) target = $region56
      $region55: #{model_forward.1} parent=5 // pred_region
        // Predicated region
        $region57: #{model_forward.1} parent=55 // pred_check
          %p337 = pneg %p38
        $region58: #{model_forward.1} parent=55 // pred_check_branch
          %339 = sbr.rel (%p337) target = $region60
        $region59: #{model_forward.1} parent=55 // pred_region
          %p340 = scmp.lt.s32.totalorder %s18, 1
          %s341 = scalar_select %p340, %s18, 1
          %s342 = smul.addr %s341, 8
          %s343 = smul.addr %s342, 8
          %s344 = scalar_lea.vmem %s0, %s343
        $region60: #{model_forward.1} parent=55 // pred_fallthru
          _
      $region56: #{model_forward.1} parent=5 // pred_fallthru
        _
      %p345 = scmp.le.s32.totalorder 1, %s18
      %p346 = scmp.lt.s32.totalorder %s18, 3
      %p347 = pnand %p345, %p346
      %p348 = pneg %p347
      // Predicated region
      $region61: #{model_forward.1} parent=5 // pred_check
        _
      $region62: #{model_forward.1} parent=5 // pred_check_branch
        %350 = sbr.rel (%p347) target = $region64
      $region63: #{model_forward.1} parent=5 // pred_region
        %s351 = ssub.s32 %s18, 1
        // Predicated region
        $region65: #{model_forward.1} parent=63 // pred_check
          %p352 = pneg %p212
        $region66: #{model_forward.1} parent=63 // pred_check_branch
          %354 = sbr.rel (%p352) target = $region68
        $region67: #{model_forward.1} parent=63 // pred_region
          %355 = dma.done [#allocation4], 16
        $region68: #{model_forward.1} parent=63 // pred_fallthru
          _
        %356 = sfence
        %p357 = scmp.lt.s32.totalorder %s23, 1
        %s358 = scalar_select %p357, %s23, 1
        %s359 = smul.addr %s358, 8
        %s360 = smul.addr %s359, 8
        %s361 = scalar_lea.vmem %s0, %s360
        %p362 = pneg %p44
        %p363 = pneg %p41
        %p364 = pneg %p65
        %p365 = pneg %p62
        %p366 = pneg %p86
        %p367 = pneg %p83
        %p368 = pneg %p107
        %p369 = pneg %p104
        %p370 = pneg %p128
        %p371 = pneg %p125
        %p372 = pneg %p149
        %p373 = pneg %p146
        %p374 = pneg %p170
        %p375 = pneg %p167
        %p376 = pneg %p191
        %p377 = pneg %p188
        %p378 = pneg %p212
        %p379 = pneg %p209
        %p380 = pneg %p233
        %p381 = pneg %p230
        %p382 = pneg %p254
        %p383 = pneg %p251
        %p384 = pneg %p280
        %p385 = pneg %p277
        %p386 = scmp.lt.s32.totalorder %s23, 1
        %s387 = scalar_select %p386, %s23, 1
        %s388 = smul.addr %s387, 8
        %s389 = scalar_lea.vmem %s11, %s388
        %p390 = scmp.lt.s32.totalorder %s23, 1
        %s391 = scalar_select %p390, %s23, 1
        %s392 = smul.addr %s391, 8
        %s393 = smul.addr %s392, 8
        %s394 = scalar_lea.vmem %s0, %s393
        %p395 = scmp.lt.s32.totalorder %s23, 1
        %s396 = scalar_select %p395, %s23, 1
        %s397 = smul.addr %s396, 8
        %s398 = scalar_lea.vmem %s11, %s397
        %v399 = vld [vmem:[%s394] sm:$0xff]
        %v400 = vld [vmem:[%s394 + $0x8] sm:$0xff]
        %v401 = vld [vmem:[%s394 + $0x10] sm:$0xff]
        %v402 = vld [vmem:[%s394 + $0x18] sm:$0xff]
        %v403 = vld [vmem:[%s394 + $0x20] sm:$0xff]
        %v404 = vld [vmem:[%s394 + $0x28] sm:$0xff]
        %v405 = vld [vmem:[%s394 + $0x30] sm:$0xff]
        %v406 = vld [vmem:[%s394 + $0x38] sm:$0xff]
        %v407 = vld [vmem:[%s1] sm:$0xff]
        %v408 = vld [vmem:[%s1 + $0x8] sm:$0xff]
        %v409 = vld [vmem:[%s3] sm:$0x1]
        %v411 = vlaneseq
        %v412 = vshrl.u32 %v411, 7
        %v413 = vsub.s32 0, %v412
        %v414 = vrot.slane %v409, %v413
        %vm416 = vcmask 130048
        %v418 = vsel %vm416, %v399, 0
        %v421 = vsel %vm416, %v400, 0
        %v424 = vsel %vm416, %v401, 0
        %v427 = vsel %vm416, %v402, 0
        %v430 = vsel %vm416, %v403, 0
        %v433 = vsel %vm416, %v404, 0
        %v436 = vsel %vm416, %v405, 0
        %v439 = vsel %vm416, %v406, 0
        %441 = vmatprep.subr.mxu0 0.0
        %442 = vmatpush1.msra.mxu0 %v407
        %443 = vmatprep.subr.mxu0 0.0
        %444 = vmatpush1.msra.mxu0 %v408
        %445 = vmatprep.subr.mxu0 0.0
        %446 = vmatpush1.msra.mxu0 0.0
        %447 = vmatprep.subr.mxu0 0.0
        %448 = vmatpush1.msra.mxu0 0.0
        %449 = vmatprep.subr.mxu0 0.0
        %450 = vmatpush1.msra.mxu0 0.0
        %451 = vmatprep.subr.mxu0 0.0
        %452 = vmatpush1.msra.mxu0 0.0
        %453 = vmatprep.subr.mxu0 0.0
        %454 = vmatpush1.msra.mxu0 0.0
        %455 = vmatprep.subr.mxu0 0.0
        %456 = vmatpush1.msra.mxu0 0.0
        %457 = vmatprep.subr.mxu0 0.0
        %458 = vmatpush1.msra.mxu0 0.0
        %459 = vmatprep.subr.mxu0 0.0
        %460 = vmatpush1.msra.mxu0 0.0
        %461 = vmatprep.subr.mxu0 0.0
        %462 = vmatpush1.msra.mxu0 0.0
        %463 = vmatprep.subr.mxu0 0.0
        %464 = vmatpush1.msra.mxu0 0.0
        %465 = vmatprep.subr.mxu0 0.0
        %466 = vmatpush1.msra.mxu0 0.0
        %467 = vmatprep.subr.mxu0 0.0
        %468 = vmatpush1.msra.mxu0 0.0
        %469 = vmatprep.subr.mxu0 0.0
        %470 = vmatpush1.msra.mxu0 0.0
        %471 = vmatprep.subr.mxu0 0.0
        %472 = vmatpush1.msra.mxu0 0.0
        %473 = vmatprep.subr.mxu0 0.0
        %474 = vmatpush1.msra.mxu0 0.0
        %475 = vmatprep.subr.mxu0 0.0
        %476 = vmatpush1.msra.mxu0 0.0
        %477 = vmatprep.subr.mxu0 0.0
        %478 = vmatpush1.msra.mxu0 0.0
        %479 = vmatprep.subr.mxu0 0.0
        %480 = vmatpush1.msra.mxu0 0.0
        %481 = vmatprep.subr.mxu0 0.0
        %482 = vmatpush1.msra.mxu0 0.0
        %483 = vmatprep.subr.mxu0 0.0
        %484 = vmatpush1.msra.mxu0 0.0
        %485 = vmatprep.subr.mxu0 0.0
        %486 = vmatpush1.msra.mxu0 0.0
        %487 = vmatprep.subr.mxu0 0.0
        %488 = vmatpush1.msra.mxu0 0.0
        %489 = vmatprep.subr.mxu0 0.0
        %490 = vmatpush1.msra.mxu0 0.0
        %491 = vmatprep.subr.mxu0 0.0
        %492 = vmatpush1.msra.mxu0 0.0
        %493 = vmatprep.subr.mxu0 0.0
        %494 = vmatpush1.msra.mxu0 0.0
        %495 = vmatprep.subr.mxu0 0.0
        %496 = vmatpush1.msra.mxu0 0.0
        %497 = vmatprep.subr.mxu0 0.0
        %498 = vmatpush1.msra.mxu0 0.0
        %499 = vmatprep.subr.mxu0 0.0
        %500 = vmatpush1.msra.mxu0 0.0
        %501 = vmatprep.subr.mxu0 0.0
        %502 = vmatpush1.msra.mxu0 0.0
        %503 = vmatprep.subr.mxu0 0.0
        %504 = vmatpush1.msra.mxu0 0.0
        %505 = vmatprep.mubr.f32.mxu0 0.0
        %506 = vmatmul.mubr.f32.gmra.mrb[0].mxu0 %v418
        %v507 = vpop.f32.mrb[0].mxu0
        %v508 = vadd.f32 %v414, %v507
        %v509 = vpop.f32.mrb[0].mxu0
        %510 = vmatprep.mubr.f32.mxu0 0.0
        %511 = vmatmul.mubr.f32.gmra.mrb[0].mxu0 %v421
        %v512 = vpop.f32.mrb[0].mxu0
        %v513 = vadd.f32 %v414, %v512
        %v514 = vpop.f32.mrb[0].mxu0
        %515 = vmatprep.mubr.f32.mxu0 0.0
        %516 = vmatmul.mubr.f32.gmra.mrb[0].mxu0 %v424
        %v517 = vpop.f32.mrb[0].mxu0
        %v518 = vadd.f32 %v414, %v517
        %v519 = vpop.f32.mrb[0].mxu0
        %520 = vmatprep.mubr.f32.mxu0 0.0
        %521 = vmatmul.mubr.f32.gmra.mrb[0].mxu0 %v427
        %v522 = vpop.f32.mrb[0].mxu0
        %v523 = vadd.f32 %v414, %v522
        %v524 = vpop.f32.mrb[0].mxu0
        %525 = vmatprep.mubr.f32.mxu0 0.0
        %526 = vmatmul.mubr.f32.gmra.mrb[0].mxu0 %v430
        %v527 = vpop.f32.mrb[0].mxu0
        %v528 = vadd.f32 %v414, %v527
        %v529 = vpop.f32.mrb[0].mxu0
        %530 = vmatprep.mubr.f32.mxu0 0.0
        %531 = vmatmul.mubr.f32.gmra.mrb[0].mxu0 %v433
        %v532 = vpop.f32.mrb[0].mxu0
        %v533 = vadd.f32 %v414, %v532
        %v534 = vpop.f32.mrb[0].mxu0
        %535 = vmatprep.mubr.f32.mxu0 0.0
        %536 = vmatmul.mubr.f32.gmra.mrb[0].mxu0 %v436
        %v537 = vpop.f32.mrb[0].mxu0
        %v538 = vadd.f32 %v414, %v537
        %v539 = vpop.f32.mrb[0].mxu0
        %540 = vmatprep.mubr.f32.mxu0 0.0
        %541 = vmatmul.mubr.f32.gmra.mrb[0].mxu0 %v439
        %v542 = vpop.f32.mrb[0].mxu0
        %v543 = vadd.f32 %v414, %v542
        %v544 = vpop.f32.mrb[0].mxu0
        %545 = vdwg.mxu0
        %v546 = vld [vmem:[%s2] sm:$0xff]
        %v547 = vld [vmem:[%s2 + $0x8] sm:$0xff]
        %v548 = vld [vmem:[%s2 + $0x10] sm:$0xff]
        %v549 = vld [vmem:[%s2 + $0x18] sm:$0xff]
        %v550 = vld [vmem:[%s4] sm:$0xff]
        %v551 = vld [vmem:[%s4 + $0x8] sm:$0xff]
        %v552 = vld [vmem:[%s4 + $0x10] sm:$0xff]
        %v553 = vld [vmem:[%s4 + $0x18] sm:$0xff]
        %v554 = vld [vmem:[%s4 + $0x20] sm:$0xff]
        %v555 = vld [vmem:[%s4 + $0x28] sm:$0xff]
        %v556 = vld [vmem:[%s4 + $0x30] sm:$0xff]
        %v557 = vld [vmem:[%s4 + $0x38] sm:$0xff]
        %v558 = vld [vmem:[%s5] sm:$0x1]
        %vm559 = vcmask 261120
        %v561 = vsel %vm559, 0.0, 0
        %563 = vmatprep.subr.mxu0 0.0
        %564 = vmatpush1.msra.mxu0 %v546
        %565 = vmatprep.subr.mxu0 0.0
        %566 = vmatpush1.msra.mxu0 %v547
        %567 = vmatprep.subr.mxu0 0.0
        %568 = vmatpush1.msra.mxu0 %v548
        %569 = vmatprep.subr.mxu0 0.0
        %570 = vmatpush1.msra.mxu0 %v549
        %571 = vmatprep.subr.mxu0 0.0
        %572 = vmatpush1.msra.mxu0 0.0
        %573 = vmatprep.subr.mxu0 0.0
        %574 = vmatpush1.msra.mxu0 0.0
        %575 = vmatprep.subr.mxu0 0.0
        %576 = vmatpush1.msra.mxu0 0.0
        %577 = vmatprep.subr.mxu0 0.0
        %578 = vmatpush1.msra.mxu0 0.0
        %579 = vmatprep.subr.mxu0 0.0
        %580 = vmatpush1.msra.mxu0 0.0
        %581 = vmatprep.subr.mxu0 0.0
        %582 = vmatpush1.msra.mxu0 0.0
        %583 = vmatprep.subr.mxu0 0.0
        %584 = vmatpush1.msra.mxu0 0.0
        %585 = vmatprep.subr.mxu0 0.0
        %586 = vmatpush1.msra.mxu0 0.0
        %587 = vmatprep.subr.mxu0 0.0
        %588 = vmatpush1.msra.mxu0 0.0
        %589 = vmatprep.subr.mxu0 0.0
        %590 = vmatpush1.msra.mxu0 0.0
        %591 = vmatprep.subr.mxu0 0.0
        %592 = vmatpush1.msra.mxu0 0.0
        %593 = vmatprep.subr.mxu0 0.0
        %594 = vmatpush1.msra.mxu0 0.0
        %595 = vmatprep.subr.mxu0 0.0
        %596 = vmatpush1.msra.mxu0 0.0
        %597 = vmatprep.subr.mxu0 0.0
        %598 = vmatpush1.msra.mxu0 0.0
        %599 = vmatprep.subr.mxu0 0.0
        %600 = vmatpush1.msra.mxu0 0.0
        %601 = vmatprep.subr.mxu0 0.0
        %602 = vmatpush1.msra.mxu0 0.0
        %603 = vmatprep.subr.mxu0 0.0
        %604 = vmatpush1.msra.mxu0 0.0
        %605 = vmatprep.subr.mxu0 0.0
        %606 = vmatpush1.msra.mxu0 0.0
        %607 = vmatprep.subr.mxu0 0.0
        %608 = vmatpush1.msra.mxu0 0.0
        %609 = vmatprep.subr.mxu0 0.0
        %610 = vmatpush1.msra.mxu0 0.0
        %611 = vmatprep.subr.mxu0 0.0
        %612 = vmatpush1.msra.mxu0 0.0
        %613 = vmatprep.subr.mxu0 0.0
        %614 = vmatpush1.msra.mxu0 0.0
        %615 = vmatprep.subr.mxu0 0.0
        %616 = vmatpush1.msra.mxu0 0.0
        %617 = vmatprep.subr.mxu0 0.0
        %618 = vmatpush1.msra.mxu0 0.0
        %619 = vmatprep.subr.mxu0 0.0
        %620 = vmatpush1.msra.mxu0 0.0
        %621 = vmatprep.subr.mxu0 0.0
        %622 = vmatpush1.msra.mxu0 0.0
        %623 = vmatprep.subr.mxu0 0.0
        %624 = vmatpush1.msra.mxu0 0.0
        %625 = vmatprep.subr.mxu0 0.0
        %626 = vmatpush1.msra.mxu0 0.0
        %627 = vmatprep.mubr.f32.mxu0 0.0
        %628 = vmatmul.mubr.f32.gmra.mrb[0].mxu0 %v561
        %v629 = vpop.f32.mrb[0].mxu0
        %v630 = vadd.f32 0.0, %v629
        %v631 = vpop.f32.mrb[0].mxu0
        %632 = vdwg.mxu0
        %v633 = vadd.f32 %v508, %v630
        %v634 = vxor.u32 %v633, 2147483648
        %v635 = vmul.f32 %v634, 1.442695
        %v636 = vpow.pop %v635
        %v637 = vadd.f32 %v636, 1.0
        %v638 = vrcp.pop %v637
        %v639 = vmul.f32 1.0, %v638
        %v640 = vtanh.pop %v633
        %v641 = vmul.f32 %v639, 0.0
        %643 = vrot.lane.b32.xlu0 %v640, 64
        %v644 = vpop.permute.xlu0 %643
        %v646 = vmul.f32 %v639, %v644
        %648 = vrot.lane.b32.xlu0 %v646, 32
        %v649 = vpop.permute.xlu0 %648
        %v651 = vadd.f32 %v641, %v649
        %v652 = vtanh.pop %v651
        %654 = vrot.lane.b32.xlu0 %v652, 64
        %v655 = vpop.permute.xlu0 %654
        %v657 = vmul.f32 %v639, %v655
        %659 = vrot.lane.b32.xlu0 %v657, 32
        %v660 = vpop.permute.xlu0 %659
        %v662 = vsel %vm559, %v660, 0.0
        %v664 = vlaneseq
        %v665 = vshrl.u32 %v664, 7
        %v666 = vsub.s32 0, %v665
        %v667 = vrot.slane %v558, %v666
        %vm669 = vcmask 523264
        %v671 = vsel %vm669, %v662, 0
        %673 = vmatprep.subr.mxu0 0.0
        %674 = vmatpush1.msra.mxu0 %v550
        %675 = vmatprep.subr.mxu0 0.0
        %676 = vmatpush1.msra.mxu0 %v551
        %677 = vmatprep.subr.mxu0 0.0
        %678 = vmatpush1.msra.mxu0 %v552
        %679 = vmatprep.subr.mxu0 0.0
        %680 = vmatpush1.msra.mxu0 %v553
        %681 = vmatprep.subr.mxu0 0.0
        %682 = vmatpush1.msra.mxu0 %v554
        %683 = vmatprep.subr.mxu0 0.0
        %684 = vmatpush1.msra.mxu0 %v555
        %685 = vmatprep.subr.mxu0 0.0
        %686 = vmatpush1.msra.mxu0 %v556
        %687 = vmatprep.subr.mxu0 0.0
        %688 = vmatpush1.msra.mxu0 %v557
        %689 = vmatprep.subr.mxu0 0.0
        %690 = vmatpush1.msra.mxu0 0.0
        %691 = vmatprep.subr.mxu0 0.0
        %692 = vmatpush1.msra.mxu0 0.0
        %693 = vmatprep.subr.mxu0 0.0
        %694 = vmatpush1.msra.mxu0 0.0
        %695 = vmatprep.subr.mxu0 0.0
        %696 = vmatpush1.msra.mxu0 0.0
        %697 = vmatprep.subr.mxu0 0.0
        %698 = vmatpush1.msra.mxu0 0.0
        %699 = vmatprep.subr.mxu0 0.0
        %700 = vmatpush1.msra.mxu0 0.0
        %701 = vmatprep.subr.mxu0 0.0
        %702 = vmatpush1.msra.mxu0 0.0
        %703 = vmatprep.subr.mxu0 0.0
        %704 = vmatpush1.msra.mxu0 0.0
        %705 = vmatprep.subr.mxu0 0.0
        %706 = vmatpush1.msra.mxu0 0.0
        %707 = vmatprep.subr.mxu0 0.0
        %708 = vmatpush1.msra.mxu0 0.0
        %709 = vmatprep.subr.mxu0 0.0
        %710 = vmatpush1.msra.mxu0 0.0
        %711 = vmatprep.subr.mxu0 0.0
        %712 = vmatpush1.msra.mxu0 0.0
        %713 = vmatprep.subr.mxu0 0.0
        %714 = vmatpush1.msra.mxu0 0.0
        %715 = vmatprep.subr.mxu0 0.0
        %716 = vmatpush1.msra.mxu0 0.0
        %717 = vmatprep.subr.mxu0 0.0
        %718 = vmatpush1.msra.mxu0 0.0
        %719 = vmatprep.subr.mxu0 0.0
        %720 = vmatpush1.msra.mxu0 0.0
        %721 = vmatprep.subr.mxu0 0.0
        %722 = vmatpush1.msra.mxu0 0.0
        %723 = vmatprep.subr.mxu0 0.0
        %724 = vmatpush1.msra.mxu0 0.0
        %725 = vmatprep.subr.mxu0 0.0
        %726 = vmatpush1.msra.mxu0 0.0
        %727 = vmatprep.subr.mxu0 0.0
        %728 = vmatpush1.msra.mxu0 0.0
        %729 = vmatprep.subr.mxu0 0.0
        %730 = vmatpush1.msra.mxu0 0.0
        %731 = vmatprep.subr.mxu0 0.0
        %732 = vmatpush1.msra.mxu0 0.0
        %733 = vmatprep.subr.mxu0 0.0
        %734 = vmatpush1.msra.mxu0 0.0
        %735 = vmatprep.subr.mxu0 0.0
        %736 = vmatpush1.msra.mxu0 0.0
        %737 = vmatprep.mubr.f32.mxu0 0.0
        %738 = vmatmul.mubr.f32.gmra.mrb[0].mxu0 %v671
        %v739 = vpop.f32.mrb[0].mxu0
        %v740 = vadd.f32 %v667, %v739
        %v741 = vpop.f32.mrb[0].mxu0
        %742 = vdwg.mxu0
        %v743 = vxor.u32 %v740, 2147483648
        %v744 = vmul.f32 %v743, 1.442695
        %v745 = vpow.pop %v744
        %v746 = vadd.f32 %v745, 1.0
        %v747 = vrcp.pop %v746
        %v748 = vmul.f32 1.0, %v747
        %v749 = vtanh.pop %v740
        %v750 = vmul.f32 %v748, 0.0
        %752 = vrot.lane.b32.xlu0 %v749, 64
        %v753 = vpop.permute.xlu0 %752
        %v755 = vmul.f32 %v748, %v753
        %757 = vrot.lane.b32.xlu0 %v755, 32
        %v758 = vpop.permute.xlu0 %757
        %v760 = vadd.f32 %v750, %v758
        %v761 = vtanh.pop %v760
        %763 = vrot.lane.b32.xlu0 %v761, 64
        %v764 = vpop.permute.xlu0 %763
        %v766 = vmul.f32 %v748, %v764
        %v767 = vtanh.pop %v766
        %769 = vrot.lane.b32.xlu0 %v767, 32
        %v770 = vpop.permute.xlu0 %769
        %772 = vst.msk [vmem:[#allocation2] sm:$0xff] %vm559, %v770
        %v773 = vsel %vm559, %v660, 0
        %775 = vmatprep.subr.mxu0 0.0
        %776 = vmatpush1.msra.mxu0 %v546
        %777 = vmatprep.subr.mxu0 0.0
        %778 = vmatpush1.msra.mxu0 %v547
        %779 = vmatprep.subr.mxu0 0.0
        %780 = vmatpush1.msra.mxu0 %v548
        %781 = vmatprep.subr.mxu0 0.0
        %782 = vmatpush1.msra.mxu0 %v549
        %783 = vmatprep.subr.mxu0 0.0
        %784 = vmatpush1.msra.mxu0 0.0
        %785 = vmatprep.subr.mxu0 0.0
        %786 = vmatpush1.msra.mxu0 0.0
        %787 = vmatprep.subr.mxu0 0.0
        %788 = vmatpush1.msra.mxu0 0.0
        %789 = vmatprep.subr.mxu0 0.0
        %790 = vmatpush1.msra.mxu0 0.0
        %791 = vmatprep.subr.mxu0 0.0
        %792 = vmatpush1.msra.mxu0 0.0
        %793 = vmatprep.subr.mxu0 0.0
        %794 = vmatpush1.msra.mxu0 0.0
        %795 = vmatprep.subr.mxu0 0.0
        %796 = vmatpush1.msra.mxu0 0.0
        %797 = vmatprep.subr.mxu0 0.0
        %798 = vmatpush1.msra.mxu0 0.0
        %799 = vmatprep.subr.mxu0 0.0
        %800 = vmatpush1.msra.mxu0 0.0
        %801 = vmatprep.subr.mxu0 0.0
        %802 = vmatpush1.msra.mxu0 0.0
        %803 = vmatprep.subr.mxu0 0.0
        %804 = vmatpush1.msra.mxu0 0.0
        %805 = vmatprep.subr.mxu0 0.0
        %806 = vmatpush1.msra.mxu0 0.0
        %807 = vmatprep.subr.mxu0 0.0
        %808 = vmatpush1.msra.mxu0 0.0
        %809 = vmatprep.subr.mxu0 0.0
        %810 = vmatpush1.msra.mxu0 0.0
        %811 = vmatprep.subr.mxu0 0.0
        %812 = vmatpush1.msra.mxu0 0.0
        %813 = vmatprep.subr.mxu0 0.0
        %814 = vmatpush1.msra.mxu0 0.0
        %815 = vmatprep.subr.mxu0 0.0
        %816 = vmatpush1.msra.mxu0 0.0
        %817 = vmatprep.subr.mxu0 0.0
        %818 = vmatpush1.msra.mxu0 0.0
        %819 = vmatprep.subr.mxu0 0.0
        %820 = vmatpush1.msra.mxu0 0.0
        %821 = vmatprep.subr.mxu0 0.0
        %822 = vmatpush1.msra.mxu0 0.0
        %823 = vmatprep.subr.mxu0 0.0
        %824 = vmatpush1.msra.mxu0 0.0
        %825 = vmatprep.subr.mxu0 0.0
        %826 = vmatpush1.msra.mxu0 0.0
        %827 = vmatprep.subr.mxu0 0.0
        %828 = vmatpush1.msra.mxu0 0.0
        %829 = vmatprep.subr.mxu0 0.0
        %830 = vmatpush1.msra.mxu0 0.0
        %831 = vmatprep.subr.mxu0 0.0
        %832 = vmatpush1.msra.mxu0 0.0
        %833 = vmatprep.subr.mxu0 0.0
        %834 = vmatpush1.msra.mxu0 0.0
        %835 = vmatprep.subr.mxu0 0.0
        %836 = vmatpush1.msra.mxu0 0.0
        %837 = vmatprep.subr.mxu0 0.0
        %838 = vmatpush1.msra.mxu0 0.0
        %839 = vmatprep.mubr.f32.mxu0 0.0
        %840 = vmatmul.mubr.f32.gmra.mrb[0].mxu0 %v773
        %v841 = vpop.f32.mrb[0].mxu0
        %v842 = vadd.f32 0.0, %v841
        %v843 = vpop.f32.mrb[0].mxu0
        %844 = vdwg.mxu0
        %v845 = vadd.f32 %v513, %v842
        %v846 = vxor.u32 %v845, 2147483648
        %v847 = vmul.f32 %v846, 1.442695
        %v848 = vpow.pop %v847
        %v849 = vadd.f32 %v848, 1.0
        %v850 = vrcp.pop %v849
        %v851 = vmul.f32 1.0, %v850
        %v852 = vtanh.pop %v845
        %v853 = vmul.f32 %v851, %v651
        %855 = vrot.lane.b32.xlu0 %v852, 64
        %v856 = vpop.permute.xlu0 %855
        %v858 = vmul.f32 %v851, %v856
        %860 = vrot.lane.b32.xlu0 %v858, 32
        %v861 = vpop.permute.xlu0 %860
        %v863 = vadd.f32 %v853, %v861
        %v864 = vtanh.pop %v863
        %866 = vrot.lane.b32.xlu0 %v864, 64
        %v867 = vpop.permute.xlu0 %866
        %v869 = vmul.f32 %v851, %v867
        %871 = vrot.lane.b32.xlu0 %v869, 32
        %v872 = vpop.permute.xlu0 %871
        %875 = vrot.lane.b32.xlu0 %v766, 64
        %v876 = vpop.permute.xlu0 %875
        %v878 = vsel %vm559, %v872, %v876
        %v880 = vsel %vm669, %v878, 0
        %882 = vmatprep.subr.mxu0 0.0
        %883 = vmatpush1.msra.mxu0 %v550
        %884 = vmatprep.subr.mxu0 0.0
        %885 = vmatpush1.msra.mxu0 %v551
        %886 = vmatprep.subr.mxu0 0.0
        %887 = vmatpush1.msra.mxu0 %v552
        %888 = vmatprep.subr.mxu0 0.0
        %889 = vmatpush1.msra.mxu0 %v553
        %890 = vmatprep.subr.mxu0 0.0
        %891 = vmatpush1.msra.mxu0 %v554
        %892 = vmatprep.subr.mxu0 0.0
        %893 = vmatpush1.msra.mxu0 %v555
        %894 = vmatprep.subr.mxu0 0.0
        %895 = vmatpush1.msra.mxu0 %v556
        %896 = vmatprep.subr.mxu0 0.0
        %897 = vmatpush1.msra.mxu0 %v557
        %898 = vmatprep.subr.mxu0 0.0
        %899 = vmatpush1.msra.mxu0 0.0
        %900 = vmatprep.subr.mxu0 0.0
        %901 = vmatpush1.msra.mxu0 0.0
        %902 = vmatprep.subr.mxu0 0.0
        %903 = vmatpush1.msra.mxu0 0.0
        %904 = vmatprep.subr.mxu0 0.0
        %905 = vmatpush1.msra.mxu0 0.0
        %906 = vmatprep.subr.mxu0 0.0
        %907 = vmatpush1.msra.mxu0 0.0
        %908 = vmatprep.subr.mxu0 0.0
        %909 = vmatpush1.msra.mxu0 0.0
        %910 = vmatprep.subr.mxu0 0.0
        %911 = vmatpush1.msra.mxu0 0.0
        %912 = vmatprep.subr.mxu0 0.0
        %913 = vmatpush1.msra.mxu0 0.0
        %914 = vmatprep.subr.mxu0 0.0
        %915 = vmatpush1.msra.mxu0 0.0
        %916 = vmatprep.subr.mxu0 0.0
        %917 = vmatpush1.msra.mxu0 0.0
        %918 = vmatprep.subr.mxu0 0.0
        %919 = vmatpush1.msra.mxu0 0.0
        %920 = vmatprep.subr.mxu0 0.0
        %921 = vmatpush1.msra.mxu0 0.0
        %922 = vmatprep.subr.mxu0 0.0
        %923 = vmatpush1.msra.mxu0 0.0
        %924 = vmatprep.subr.mxu0 0.0
        %925 = vmatpush1.msra.mxu0 0.0
        %926 = vmatprep.subr.mxu0 0.0
        %927 = vmatpush1.msra.mxu0 0.0
        %928 = vmatprep.subr.mxu0 0.0
        %929 = vmatpush1.msra.mxu0 0.0
        %930 = vmatprep.subr.mxu0 0.0
        %931 = vmatpush1.msra.mxu0 0.0
        %932 = vmatprep.subr.mxu0 0.0
        %933 = vmatpush1.msra.mxu0 0.0
        %934 = vmatprep.subr.mxu0 0.0
        %935 = vmatpush1.msra.mxu0 0.0
        %936 = vmatprep.subr.mxu0 0.0
        %937 = vmatpush1.msra.mxu0 0.0
        %938 = vmatprep.subr.mxu0 0.0
        %939 = vmatpush1.msra.mxu0 0.0
        %940 = vmatprep.subr.mxu0 0.0
        %941 = vmatpush1.msra.mxu0 0.0
        %942 = vmatprep.subr.mxu0 0.0
        %943 = vmatpush1.msra.mxu0 0.0
        %944 = vmatprep.subr.mxu0 0.0
        %945 = vmatpush1.msra.mxu0 0.0
        %946 = vmatprep.mubr.f32.mxu0 0.0
        %947 = vmatmul.mubr.f32.gmra.mrb[0].mxu0 %v880
        %v948 = vpop.f32.mrb[0].mxu0
        %v949 = vadd.f32 %v667, %v948
        %v950 = vpop.f32.mrb[0].mxu0
        %951 = vdwg.mxu0
        %v952 = vxor.u32 %v949, 2147483648
        %v953 = vmul.f32 %v952, 1.442695
        %v954 = vpow.pop %v953
        %v955 = vadd.f32 %v954, 1.0
        %v956 = vrcp.pop %v955
        %v957 = vmul.f32 1.0, %v956
        %v958 = vtanh.pop %v949
        %v959 = vmul.f32 %v957, %v760
        %961 = vrot.lane.b32.xlu0 %v958, 64
        %v962 = vpop.permute.xlu0 %961
        %v964 = vmul.f32 %v957, %v962
        %966 = vrot.lane.b32.xlu0 %v964, 32
        %v967 = vpop.permute.xlu0 %966
        %v969 = vadd.f32 %v959, %v967
        %v970 = vtanh.pop %v969
        %972 = vrot.lane.b32.xlu0 %v970, 64
        %v973 = vpop.permute.xlu0 %972
        %v975 = vmul.f32 %v957, %v973
        %v976 = vtanh.pop %v975
        %978 = vrot.lane.b32.xlu0 %v976, 32
        %v979 = vpop.permute.xlu0 %978
        %981 = vst.msk [vmem:[#allocation2 + $0x8] sm:$0xff] %vm559, %v979
        %v982 = vsel %vm559, %v872, 0
        %984 = vmatprep.subr.mxu0 0.0
        %985 = vmatpush1.msra.mxu0 %v546
        %986 = vmatprep.subr.mxu0 0.0
        %987 = vmatpush1.msra.mxu0 %v547
        %988 = vmatprep.subr.mxu0 0.0
        %989 = vmatpush1.msra.mxu0 %v548
        %990 = vmatprep.subr.mxu0 0.0
        %991 = vmatpush1.msra.mxu0 %v549
        %992 = vmatprep.subr.mxu0 0.0
        %993 = vmatpush1.msra.mxu0 0.0
        %994 = vmatprep.subr.mxu0 0.0
        %995 = vmatpush1.msra.mxu0 0.0
        %996 = vmatprep.subr.mxu0 0.0
        %997 = vmatpush1.msra.mxu0 0.0
        %998 = vmatprep.subr.mxu0 0.0
        %999 = vmatpush1.msra.mxu0 0.0
        %1000 = vmatprep.subr.mxu0 0.0
        %1001 = vmatpush1.msra.mxu0 0.0
        %1002 = vmatprep.subr.mxu0 0.0
        %1003 = vmatpush1.msra.mxu0 0.0
        %1004 = vmatprep.subr.mxu0 0.0
        %1005 = vmatpush1.msra.mxu0 0.0
        %1006 = vmatprep.subr.mxu0 0.0
        %1007 = vmatpush1.msra.mxu0 0.0
        %1008 = vmatprep.subr.mxu0 0.0
        %1009 = vmatpush1.msra.mxu0 0.0
        %1010 = vmatprep.subr.mxu0 0.0
        %1011 = vmatpush1.msra.mxu0 0.0
        %1012 = vmatprep.subr.mxu0 0.0
        %1013 = vmatpush1.msra.mxu0 0.0
        %1014 = vmatprep.subr.mxu0 0.0
        %1015 = vmatpush1.msra.mxu0 0.0
        %1016 = vmatprep.subr.mxu0 0.0
        %1017 = vmatpush1.msra.mxu0 0.0
        %1018 = vmatprep.subr.mxu0 0.0
        %1019 = vmatpush1.msra.mxu0 0.0
        %1020 = vmatprep.subr.mxu0 0.0
        %1021 = vmatpush1.msra.mxu0 0.0
        %1022 = vmatprep.subr.mxu0 0.0
        %1023 = vmatpush1.msra.mxu0 0.0
        %1024 = vmatprep.subr.mxu0 0.0
        %1025 = vmatpush1.msra.mxu0 0.0
        %1026 = vmatprep.subr.mxu0 0.0
        %1027 = vmatpush1.msra.mxu0 0.0
        %1028 = vmatprep.subr.mxu0 0.0
        %1029 = vmatpush1.msra.mxu0 0.0
        %1030 = vmatprep.subr.mxu0 0.0
        %1031 = vmatpush1.msra.mxu0 0.0
        %1032 = vmatprep.subr.mxu0 0.0
        %1033 = vmatpush1.msra.mxu0 0.0
        %1034 = vmatprep.subr.mxu0 0.0
        %1035 = vmatpush1.msra.mxu0 0.0
        %1036 = vmatprep.subr.mxu0 0.0
        %1037 = vmatpush1.msra.mxu0 0.0
        %1038 = vmatprep.subr.mxu0 0.0
        %1039 = vmatpush1.msra.mxu0 0.0
        %1040 = vmatprep.subr.mxu0 0.0
        %1041 = vmatpush1.msra.mxu0 0.0
        %1042 = vmatprep.subr.mxu0 0.0
        %1043 = vmatpush1.msra.mxu0 0.0
        %1044 = vmatprep.subr.mxu0 0.0
        %1045 = vmatpush1.msra.mxu0 0.0
        %1046 = vmatprep.subr.mxu0 0.0
        %1047 = vmatpush1.msra.mxu0 0.0
        %1048 = vmatprep.mubr.f32.mxu0 0.0
        %1049 = vmatmul.mubr.f32.gmra.mrb[0].mxu0 %v982
        %v1050 = vpop.f32.mrb[0].mxu0
        %v1051 = vadd.f32 0.0, %v1050
        %v1052 = vpop.f32.mrb[0].mxu0
        %1053 = vdwg.mxu0
        %v1054 = vadd.f32 %v518, %v1051
        %v1055 = vxor.u32 %v1054, 2147483648
        %v1056 = vmul.f32 %v1055, 1.442695
        %v1057 = vpow.pop %v1056
        %v1058 = vadd.f32 %v1057, 1.0
        %v1059 = vrcp.pop %v1058
        %v1060 = vmul.f32 1.0, %v1059
        %v1061 = vtanh.pop %v1054
        %v1062 = vmul.f32 %v1060, %v863
        %1064 = vrot.lane.b32.xlu0 %v1061, 64
        %v1065 = vpop.permute.xlu0 %1064
        %v1067 = vmul.f32 %v1060, %v1065
        %1069 = vrot.lane.b32.xlu0 %v1067, 32
        %v1070 = vpop.permute.xlu0 %1069
        %v1072 = vadd.f32 %v1062, %v1070
        %v1073 = vtanh.pop %v1072
        %1075 = vrot.lane.b32.xlu0 %v1073, 64
        %v1076 = vpop.permute.xlu0 %1075
        %v1078 = vmul.f32 %v1060, %v1076
        %1080 = vrot.lane.b32.xlu0 %v1078, 32
        %v1081 = vpop.permute.xlu0 %1080
        %1084 = vrot.lane.b32.xlu0 %v975, 64
        %v1085 = vpop.permute.xlu0 %1084
        %v1087 = vsel %vm559, %v1081, %v1085
        %v1089 = vsel %vm669, %v1087, 0
        %1091 = vmatprep.subr.mxu0 0.0
        %1092 = vmatpush1.msra.mxu0 %v550
        %1093 = vmatprep.subr.mxu0 0.0
        %1094 = vmatpush1.msra.mxu0 %v551
        %1095 = vmatprep.subr.mxu0 0.0
        %1096 = vmatpush1.msra.mxu0 %v552
        %1097 = vmatprep.subr.mxu0 0.0
        %1098 = vmatpush1.msra.mxu0 %v553
        %1099 = vmatprep.subr.mxu0 0.0
        %1100 = vmatpush1.msra.mxu0 %v554
        %1101 = vmatprep.subr.mxu0 0.0
        %1102 = vmatpush1.msra.mxu0 %v555
        %1103 = vmatprep.subr.mxu0 0.0
        %1104 = vmatpush1.msra.mxu0 %v556
        %1105 = vmatprep.subr.mxu0 0.0
        %1106 = vmatpush1.msra.mxu0 %v557
        %1107 = vmatprep.subr.mxu0 0.0
        %1108 = vmatpush1.msra.mxu0 0.0
        %1109 = vmatprep.subr.mxu0 0.0
        %1110 = vmatpush1.msra.mxu0 0.0
        %1111 = vmatprep.subr.mxu0 0.0
        %1112 = vmatpush1.msra.mxu0 0.0
        %1113 = vmatprep.subr.mxu0 0.0
        %1114 = vmatpush1.msra.mxu0 0.0
        %1115 = vmatprep.subr.mxu0 0.0
        %1116 = vmatpush1.msra.mxu0 0.0
        %1117 = vmatprep.subr.mxu0 0.0
        %1118 = vmatpush1.msra.mxu0 0.0
        %1119 = vmatprep.subr.mxu0 0.0
        %1120 = vmatpush1.msra.mxu0 0.0
        %1121 = vmatprep.subr.mxu0 0.0
        %1122 = vmatpush1.msra.mxu0 0.0
        %1123 = vmatprep.subr.mxu0 0.0
        %1124 = vmatpush1.msra.mxu0 0.0
        %1125 = vmatprep.subr.mxu0 0.0
        %1126 = vmatpush1.msra.mxu0 0.0
        %1127 = vmatprep.subr.mxu0 0.0
        %1128 = vmatpush1.msra.mxu0 0.0
        %1129 = vmatprep.subr.mxu0 0.0
        %1130 = vmatpush1.msra.mxu0 0.0
        %1131 = vmatprep.subr.mxu0 0.0
        %1132 = vmatpush1.msra.mxu0 0.0
        %1133 = vmatprep.subr.mxu0 0.0
        %1134 = vmatpush1.msra.mxu0 0.0
        %1135 = vmatprep.subr.mxu0 0.0
        %1136 = vmatpush1.msra.mxu0 0.0
        %1137 = vmatprep.subr.mxu0 0.0
        %1138 = vmatpush1.msra.mxu0 0.0
        %1139 = vmatprep.subr.mxu0 0.0
        %1140 = vmatpush1.msra.mxu0 0.0
        %1141 = vmatprep.subr.mxu0 0.0
        %1142 = vmatpush1.msra.mxu0 0.0
        %1143 = vmatprep.subr.mxu0 0.0
        %1144 = vmatpush1.msra.mxu0 0.0
        %1145 = vmatprep.subr.mxu0 0.0
        %1146 = vmatpush1.msra.mxu0 0.0
        %1147 = vmatprep.subr.mxu0 0.0
        %1148 = vmatpush1.msra.mxu0 0.0
        %1149 = vmatprep.subr.mxu0 0.0
        %1150 = vmatpush1.msra.mxu0 0.0
        %1151 = vmatprep.subr.mxu0 0.0
        %1152 = vmatpush1.msra.mxu0 0.0
        %1153 = vmatprep.subr.mxu0 0.0
        %1154 = vmatpush1.msra.mxu0 0.0
        %1155 = vmatprep.mubr.f32.mxu0 0.0
        %1156 = vmatmul.mubr.f32.gmra.mrb[0].mxu0 %v1089
        %v1157 = vpop.f32.mrb[0].mxu0
        %v1158 = vadd.f32 %v667, %v1157
        %v1159 = vpop.f32.mrb[0].mxu0
        %1160 = vdwg.mxu0
        %v1161 = vxor.u32 %v1158, 2147483648
        %v1162 = vmul.f32 %v1161, 1.442695
        %v1163 = vpow.pop %v1162
        %v1164 = vadd.f32 %v1163, 1.0
        %v1165 = vrcp.pop %v1164
        %v1166 = vmul.f32 1.0, %v1165
        %v1167 = vtanh.pop %v1158
        %v1168 = vmul.f32 %v1166, %v969
        %1170 = vrot.lane.b32.xlu0 %v1167, 64
        %v1171 = vpop.permute.xlu0 %1170
        %v1173 = vmul.f32 %v1166, %v1171
        %1175 = vrot.lane.b32.xlu0 %v1173, 32
        %v1176 = vpop.permute.xlu0 %1175
        %v1178 = vadd.f32 %v1168, %v1176
        %v1179 = vtanh.pop %v1178
        %1181 = vrot.lane.b32.xlu0 %v1179, 64
        %v1182 = vpop.permute.xlu0 %1181
        %v1184 = vmul.f32 %v1166, %v1182
        %v1185 = vtanh.pop %v1184
        %1187 = vrot.lane.b32.xlu0 %v1185, 32
        %v1188 = vpop.permute.xlu0 %1187
        %1190 = vst.msk [vmem:[#allocation2 + $0x10] sm:$0xff] %vm559, %v1188
        %v1191 = vsel %vm559, %v1081, 0
        %1193 = vmatprep.subr.mxu0 0.0
        %1194 = vmatpush1.msra.mxu0 %v546
        %1195 = vmatprep.subr.mxu0 0.0
        %1196 = vmatpush1.msra.mxu0 %v547
        %1197 = vmatprep.subr.mxu0 0.0
        %1198 = vmatpush1.msra.mxu0 %v548
        %1199 = vmatprep.subr.mxu0 0.0
        %1200 = vmatpush1.msra.mxu0 %v549
        %1201 = vmatprep.subr.mxu0 0.0
        %1202 = vmatpush1.msra.mxu0 0.0
        %1203 = vmatprep.subr.mxu0 0.0
        %1204 = vmatpush1.msra.mxu0 0.0
        %1205 = vmatprep.subr.mxu0 0.0
        %1206 = vmatpush1.msra.mxu0 0.0
        %1207 = vmatprep.subr.mxu0 0.0
        %1208 = vmatpush1.msra.mxu0 0.0
        %1209 = vmatprep.subr.mxu0 0.0
        %1210 = vmatpush1.msra.mxu0 0.0
        %1211 = vmatprep.subr.mxu0 0.0
        %1212 = vmatpush1.msra.mxu0 0.0
        %1213 = vmatprep.subr.mxu0 0.0
        %1214 = vmatpush1.msra.mxu0 0.0
        %1215 = vmatprep.subr.mxu0 0.0
        %1216 = vmatpush1.msra.mxu0 0.0
        %1217 = vmatprep.subr.mxu0 0.0
        %1218 = vmatpush1.msra.mxu0 0.0
        %1219 = vmatprep.subr.mxu0 0.0
        %1220 = vmatpush1.msra.mxu0 0.0
        %1221 = vmatprep.subr.mxu0 0.0
        %1222 = vmatpush1.msra.mxu0 0.0
        %1223 = vmatprep.subr.mxu0 0.0
        %1224 = vmatpush1.msra.mxu0 0.0
        %1225 = vmatprep.subr.mxu0 0.0
        %1226 = vmatpush1.msra.mxu0 0.0
        %1227 = vmatprep.subr.mxu0 0.0
        %1228 = vmatpush1.msra.mxu0 0.0
        %1229 = vmatprep.subr.mxu0 0.0
        %1230 = vmatpush1.msra.mxu0 0.0
        %1231 = vmatprep.subr.mxu0 0.0
        %1232 = vmatpush1.msra.mxu0 0.0
        %1233 = vmatprep.subr.mxu0 0.0
        %1234 = vmatpush1.msra.mxu0 0.0
        %1235 = vmatprep.subr.mxu0 0.0
        %1236 = vmatpush1.msra.mxu0 0.0
        %1237 = vmatprep.subr.mxu0 0.0
        %1238 = vmatpush1.msra.mxu0 0.0
        %1239 = vmatprep.subr.mxu0 0.0
        %1240 = vmatpush1.msra.mxu0 0.0
        %1241 = vmatprep.subr.mxu0 0.0
        %1242 = vmatpush1.msra.mxu0 0.0
        %1243 = vmatprep.subr.mxu0 0.0
        %1244 = vmatpush1.msra.mxu0 0.0
        %1245 = vmatprep.subr.mxu0 0.0
        %1246 = vmatpush1.msra.mxu0 0.0
        %1247 = vmatprep.subr.mxu0 0.0
        %1248 = vmatpush1.msra.mxu0 0.0
        %1249 = vmatprep.subr.mxu0 0.0
        %1250 = vmatpush1.msra.mxu0 0.0
        %1251 = vmatprep.subr.mxu0 0.0
        %1252 = vmatpush1.msra.mxu0 0.0
        %1253 = vmatprep.subr.mxu0 0.0
        %1254 = vmatpush1.msra.mxu0 0.0
        %1255 = vmatprep.subr.mxu0 0.0
        %1256 = vmatpush1.msra.mxu0 0.0
        %1257 = vmatprep.mubr.f32.mxu0 0.0
        %1258 = vmatmul.mubr.f32.gmra.mrb[0].mxu0 %v1191
        %v1259 = vpop.f32.mrb[0].mxu0
        %v1260 = vadd.f32 0.0, %v1259
        %v1261 = vpop.f32.mrb[0].mxu0
        %1262 = vdwg.mxu0
        %v1263 = vadd.f32 %v523, %v1260
        %v1264 = vxor.u32 %v1263, 2147483648
        %v1265 = vmul.f32 %v1264, 1.442695
        %v1266 = vpow.pop %v1265
        %v1267 = vadd.f32 %v1266, 1.0
        %v1268 = vrcp.pop %v1267
        %v1269 = vmul.f32 1.0, %v1268
        %v1270 = vtanh.pop %v1263
        %v1271 = vmul.f32 %v1269, %v1072
        %1273 = vrot.lane.b32.xlu0 %v1270, 64
        %v1274 = vpop.permute.xlu0 %1273
        %v1276 = vmul.f32 %v1269, %v1274
        %1278 = vrot.lane.b32.xlu0 %v1276, 32
        %v1279 = vpop.permute.xlu0 %1278
        %v1281 = vadd.f32 %v1271, %v1279
        %v1282 = vtanh.pop %v1281
        %1284 = vrot.lane.b32.xlu0 %v1282, 64
        %v1285 = vpop.permute.xlu0 %1284
        %v1287 = vmul.f32 %v1269, %v1285
        %1289 = vrot.lane.b32.xlu0 %v1287, 32
        %v1290 = vpop.permute.xlu0 %1289
        %1293 = vrot.lane.b32.xlu0 %v1184, 64
        %v1294 = vpop.permute.xlu0 %1293
        %v1296 = vsel %vm559, %v1290, %v1294
        %v1298 = vsel %vm669, %v1296, 0
        %1300 = vmatprep.subr.mxu0 0.0
        %1301 = vmatpush1.msra.mxu0 %v550
        %1302 = vmatprep.subr.mxu0 0.0
        %1303 = vmatpush1.msra.mxu0 %v551
        %1304 = vmatprep.subr.mxu0 0.0
        %1305 = vmatpush1.msra.mxu0 %v552
        %1306 = vmatprep.subr.mxu0 0.0
        %1307 = vmatpush1.msra.mxu0 %v553
        %1308 = vmatprep.subr.mxu0 0.0
        %1309 = vmatpush1.msra.mxu0 %v554
        %1310 = vmatprep.subr.mxu0 0.0
        %1311 = vmatpush1.msra.mxu0 %v555
        %1312 = vmatprep.subr.mxu0 0.0
        %1313 = vmatpush1.msra.mxu0 %v556
        %1314 = vmatprep.subr.mxu0 0.0
        %1315 = vmatpush1.msra.mxu0 %v557
        %1316 = vmatprep.subr.mxu0 0.0
        %1317 = vmatpush1.msra.mxu0 0.0
        %1318 = vmatprep.subr.mxu0 0.0
        %1319 = vmatpush1.msra.mxu0 0.0
        %1320 = vmatprep.subr.mxu0 0.0
        %1321 = vmatpush1.msra.mxu0 0.0
        %1322 = vmatprep.subr.mxu0 0.0
        %1323 = vmatpush1.msra.mxu0 0.0
        %1324 = vmatprep.subr.mxu0 0.0
        %1325 = vmatpush1.msra.mxu0 0.0
        %1326 = vmatprep.subr.mxu0 0.0
        %1327 = vmatpush1.msra.mxu0 0.0
        %1328 = vmatprep.subr.mxu0 0.0
        %1329 = vmatpush1.msra.mxu0 0.0
        %1330 = vmatprep.subr.mxu0 0.0
        %1331 = vmatpush1.msra.mxu0 0.0
        %1332 = vmatprep.subr.mxu0 0.0
        %1333 = vmatpush1.msra.mxu0 0.0
        %1334 = vmatprep.subr.mxu0 0.0
        %1335 = vmatpush1.msra.mxu0 0.0
        %1336 = vmatprep.subr.mxu0 0.0
        %1337 = vmatpush1.msra.mxu0 0.0
        %1338 = vmatprep.subr.mxu0 0.0
        %1339 = vmatpush1.msra.mxu0 0.0
        %1340 = vmatprep.subr.mxu0 0.0
        %1341 = vmatpush1.msra.mxu0 0.0
        %1342 = vmatprep.subr.mxu0 0.0
        %1343 = vmatpush1.msra.mxu0 0.0
        %1344 = vmatprep.subr.mxu0 0.0
        %1345 = vmatpush1.msra.mxu0 0.0
        %1346 = vmatprep.subr.mxu0 0.0
        %1347 = vmatpush1.msra.mxu0 0.0
        %1348 = vmatprep.subr.mxu0 0.0
        %1349 = vmatpush1.msra.mxu0 0.0
        %1350 = vmatprep.subr.mxu0 0.0
        %1351 = vmatpush1.msra.mxu0 0.0
        %1352 = vmatprep.subr.mxu0 0.0
        %1353 = vmatpush1.msra.mxu0 0.0
        %1354 = vmatprep.subr.mxu0 0.0
        %1355 = vmatpush1.msra.mxu0 0.0
        %1356 = vmatprep.subr.mxu0 0.0
        %1357 = vmatpush1.msra.mxu0 0.0
        %1358 = vmatprep.subr.mxu0 0.0
        %1359 = vmatpush1.msra.mxu0 0.0
        %1360 = vmatprep.subr.mxu0 0.0
        %1361 = vmatpush1.msra.mxu0 0.0
        %1362 = vmatprep.subr.mxu0 0.0
        %1363 = vmatpush1.msra.mxu0 0.0
        %1364 = vmatprep.mubr.f32.mxu0 0.0
        %1365 = vmatmul.mubr.f32.gmra.mrb[0].mxu0 %v1298
        %v1366 = vpop.f32.mrb[0].mxu0
        %v1367 = vadd.f32 %v667, %v1366
        %v1368 = vpop.f32.mrb[0].mxu0
        %1369 = vdwg.mxu0
        %v1370 = vxor.u32 %v1367, 2147483648
        %v1371 = vmul.f32 %v1370, 1.442695
        %v1372 = vpow.pop %v1371
        %v1373 = vadd.f32 %v1372, 1.0
        %v1374 = vrcp.pop %v1373
        %v1375 = vmul.f32 1.0, %v1374
        %v1376 = vtanh.pop %v1367
        %v1377 = vmul.f32 %v1375, %v1178
        %1379 = vrot.lane.b32.xlu0 %v1376, 64
        %v1380 = vpop.permute.xlu0 %1379
        %v1382 = vmul.f32 %v1375, %v1380
        %1384 = vrot.lane.b32.xlu0 %v1382, 32
        %v1385 = vpop.permute.xlu0 %1384
        %v1387 = vadd.f32 %v1377, %v1385
        %v1388 = vtanh.pop %v1387
        %1390 = vrot.lane.b32.xlu0 %v1388, 64
        %v1391 = vpop.permute.xlu0 %1390
        %v1393 = vmul.f32 %v1375, %v1391
        %v1394 = vtanh.pop %v1393
        %1396 = vrot.lane.b32.xlu0 %v1394, 32
        %v1397 = vpop.permute.xlu0 %1396
        %1399 = vst.msk [vmem:[#allocation2 + $0x18] sm:$0xff] %vm559, %v1397
        %v1400 = vsel %vm559, %v1290, 0
        %1402 = vmatprep.subr.mxu0 0.0
        %1403 = vmatpush1.msra.mxu0 %v546
        %1404 = vmatprep.subr.mxu0 0.0
        %1405 = vmatpush1.msra.mxu0 %v547
        %1406 = vmatprep.subr.mxu0 0.0
        %1407 = vmatpush1.msra.mxu0 %v548
        %1408 = vmatprep.subr.mxu0 0.0
        %1409 = vmatpush1.msra.mxu0 %v549
        %1410 = vmatprep.subr.mxu0 0.0
        %1411 = vmatpush1.msra.mxu0 0.0
        %1412 = vmatprep.subr.mxu0 0.0
        %1413 = vmatpush1.msra.mxu0 0.0
        %1414 = vmatprep.subr.mxu0 0.0
        %1415 = vmatpush1.msra.mxu0 0.0
        %1416 = vmatprep.subr.mxu0 0.0
        %1417 = vmatpush1.msra.mxu0 0.0
        %1418 = vmatprep.subr.mxu0 0.0
        %1419 = vmatpush1.msra.mxu0 0.0
        %1420 = vmatprep.subr.mxu0 0.0
        %1421 = vmatpush1.msra.mxu0 0.0
        %1422 = vmatprep.subr.mxu0 0.0
        %1423 = vmatpush1.msra.mxu0 0.0
        %1424 = vmatprep.subr.mxu0 0.0
        %1425 = vmatpush1.msra.mxu0 0.0
        %1426 = vmatprep.subr.mxu0 0.0
        %1427 = vmatpush1.msra.mxu0 0.0
        %1428 = vmatprep.subr.mxu0 0.0
        %1429 = vmatpush1.msra.mxu0 0.0
        %1430 = vmatprep.subr.mxu0 0.0
        %1431 = vmatpush1.msra.mxu0 0.0
        %1432 = vmatprep.subr.mxu0 0.0
        %1433 = vmatpush1.msra.mxu0 0.0
        %1434 = vmatprep.subr.mxu0 0.0
        %1435 = vmatpush1.msra.mxu0 0.0
        %1436 = vmatprep.subr.mxu0 0.0
        %1437 = vmatpush1.msra.mxu0 0.0
        %1438 = vmatprep.subr.mxu0 0.0
        %1439 = vmatpush1.msra.mxu0 0.0
        %1440 = vmatprep.subr.mxu0 0.0
        %1441 = vmatpush1.msra.mxu0 0.0
        %1442 = vmatprep.subr.mxu0 0.0
        %1443 = vmatpush1.msra.mxu0 0.0
        %1444 = vmatprep.subr.mxu0 0.0
        %1445 = vmatpush1.msra.mxu0 0.0
        %1446 = vmatprep.subr.mxu0 0.0
        %1447 = vmatpush1.msra.mxu0 0.0
        %1448 = vmatprep.subr.mxu0 0.0
        %1449 = vmatpush1.msra.mxu0 0.0
        %1450 = vmatprep.subr.mxu0 0.0
        %1451 = vmatpush1.msra.mxu0 0.0
        %1452 = vmatprep.subr.mxu0 0.0
        %1453 = vmatpush1.msra.mxu0 0.0
        %1454 = vmatprep.subr.mxu0 0.0
        %1455 = vmatpush1.msra.mxu0 0.0
        %1456 = vmatprep.subr.mxu0 0.0
        %1457 = vmatpush1.msra.mxu0 0.0
        %1458 = vmatprep.subr.mxu0 0.0
        %1459 = vmatpush1.msra.mxu0 0.0
        %1460 = vmatprep.subr.mxu0 0.0
        %1461 = vmatpush1.msra.mxu0 0.0
        %1462 = vmatprep.subr.mxu0 0.0
        %1463 = vmatpush1.msra.mxu0 0.0
        %1464 = vmatprep.subr.mxu0 0.0
        %1465 = vmatpush1.msra.mxu0 0.0
        %1466 = vmatprep.mubr.f32.mxu0 0.0
        %1467 = vmatmul.mubr.f32.gmra.mrb[0].mxu0 %v1400
        %v1468 = vpop.f32.mrb[0].mxu0
        %v1469 = vadd.f32 0.0, %v1468
        %v1470 = vpop.f32.mrb[0].mxu0
        %1471 = vdwg.mxu0
        %v1472 = vadd.f32 %v528, %v1469
        %v1473 = vxor.u32 %v1472, 2147483648
        %v1474 = vmul.f32 %v1473, 1.442695
        %v1475 = vpow.pop %v1474
        %v1476 = vadd.f32 %v1475, 1.0
        %v1477 = vrcp.pop %v1476
        %v1478 = vmul.f32 1.0, %v1477
        %v1479 = vtanh.pop %v1472
        %v1480 = vmul.f32 %v1478, %v1281
        %1482 = vrot.lane.b32.xlu0 %v1479, 64
        %v1483 = vpop.permute.xlu0 %1482
        %v1485 = vmul.f32 %v1478, %v1483
        %1487 = vrot.lane.b32.xlu0 %v1485, 32
        %v1488 = vpop.permute.xlu0 %1487
        %v1490 = vadd.f32 %v1480, %v1488
        %v1491 = vtanh.pop %v1490
        %1493 = vrot.lane.b32.xlu0 %v1491, 64
        %v1494 = vpop.permute.xlu0 %1493
        %v1496 = vmul.f32 %v1478, %v1494
        %1498 = vrot.lane.b32.xlu0 %v1496, 32
        %v1499 = vpop.permute.xlu0 %1498
        %1502 = vrot.lane.b32.xlu0 %v1393, 64
        %v1503 = vpop.permute.xlu0 %1502
        %v1505 = vsel %vm559, %v1499, %v1503
        %v1507 = vsel %vm669, %v1505, 0
        %1509 = vmatprep.subr.mxu0 0.0
        %1510 = vmatpush1.msra.mxu0 %v550
        %1511 = vmatprep.subr.mxu0 0.0
        %1512 = vmatpush1.msra.mxu0 %v551
        %1513 = vmatprep.subr.mxu0 0.0
        %1514 = vmatpush1.msra.mxu0 %v552
        %1515 = vmatprep.subr.mxu0 0.0
        %1516 = vmatpush1.msra.mxu0 %v553
        %1517 = vmatprep.subr.mxu0 0.0
        %1518 = vmatpush1.msra.mxu0 %v554
        %1519 = vmatprep.subr.mxu0 0.0
        %1520 = vmatpush1.msra.mxu0 %v555
        %1521 = vmatprep.subr.mxu0 0.0
        %1522 = vmatpush1.msra.mxu0 %v556
        %1523 = vmatprep.subr.mxu0 0.0
        %1524 = vmatpush1.msra.mxu0 %v557
        %1525 = vmatprep.subr.mxu0 0.0
        %1526 = vmatpush1.msra.mxu0 0.0
        %1527 = vmatprep.subr.mxu0 0.0
        %1528 = vmatpush1.msra.mxu0 0.0
        %1529 = vmatprep.subr.mxu0 0.0
        %1530 = vmatpush1.msra.mxu0 0.0
        %1531 = vmatprep.subr.mxu0 0.0
        %1532 = vmatpush1.msra.mxu0 0.0
        %1533 = vmatprep.subr.mxu0 0.0
        %1534 = vmatpush1.msra.mxu0 0.0
        %1535 = vmatprep.subr.mxu0 0.0
        %1536 = vmatpush1.msra.mxu0 0.0
        %1537 = vmatprep.subr.mxu0 0.0
        %1538 = vmatpush1.msra.mxu0 0.0
        %1539 = vmatprep.subr.mxu0 0.0
        %1540 = vmatpush1.msra.mxu0 0.0
        %1541 = vmatprep.subr.mxu0 0.0
        %1542 = vmatpush1.msra.mxu0 0.0
        %1543 = vmatprep.subr.mxu0 0.0
        %1544 = vmatpush1.msra.mxu0 0.0
        %1545 = vmatprep.subr.mxu0 0.0
        %1546 = vmatpush1.msra.mxu0 0.0
        %1547 = vmatprep.subr.mxu0 0.0
        %1548 = vmatpush1.msra.mxu0 0.0
        %1549 = vmatprep.subr.mxu0 0.0
        %1550 = vmatpush1.msra.mxu0 0.0
        %1551 = vmatprep.subr.mxu0 0.0
        %1552 = vmatpush1.msra.mxu0 0.0
        %1553 = vmatprep.subr.mxu0 0.0
        %1554 = vmatpush1.msra.mxu0 0.0
        %1555 = vmatprep.subr.mxu0 0.0
        %1556 = vmatpush1.msra.mxu0 0.0
        %1557 = vmatprep.subr.mxu0 0.0
        %1558 = vmatpush1.msra.mxu0 0.0
        %1559 = vmatprep.subr.mxu0 0.0
        %1560 = vmatpush1.msra.mxu0 0.0
        %1561 = vmatprep.subr.mxu0 0.0
        %1562 = vmatpush1.msra.mxu0 0.0
        %1563 = vmatprep.subr.mxu0 0.0
        %1564 = vmatpush1.msra.mxu0 0.0
        %1565 = vmatprep.subr.mxu0 0.0
        %1566 = vmatpush1.msra.mxu0 0.0
        %1567 = vmatprep.subr.mxu0 0.0
        %1568 = vmatpush1.msra.mxu0 0.0
        %1569 = vmatprep.subr.mxu0 0.0
        %1570 = vmatpush1.msra.mxu0 0.0
        %1571 = vmatprep.subr.mxu0 0.0
        %1572 = vmatpush1.msra.mxu0 0.0
        %1573 = vmatprep.mubr.f32.mxu0 0.0
        %1574 = vmatmul.mubr.f32.gmra.mrb[0].mxu0 %v1507
        %v1575 = vpop.f32.mrb[0].mxu0
        %v1576 = vadd.f32 %v667, %v1575
        %v1577 = vpop.f32.mrb[0].mxu0
        %1578 = vdwg.mxu0
        %v1579 = vxor.u32 %v1576, 2147483648
        %v1580 = vmul.f32 %v1579, 1.442695
        %v1581 = vpow.pop %v1580
        %v1582 = vadd.f32 %v1581, 1.0
        %v1583 = vrcp.pop %v1582
        %v1584 = vmul.f32 1.0, %v1583
        %v1585 = vtanh.pop %v1576
        %v1586 = vmul.f32 %v1584, %v1387
        %1588 = vrot.lane.b32.xlu0 %v1585, 64
        %v1589 = vpop.permute.xlu0 %1588
        %v1591 = vmul.f32 %v1584, %v1589
        %1593 = vrot.lane.b32.xlu0 %v1591, 32
        %v1594 = vpop.permute.xlu0 %1593
        %v1596 = vadd.f32 %v1586, %v1594
        %v1597 = vtanh.pop %v1596
        %1599 = vrot.lane.b32.xlu0 %v1597, 64
        %v1600 = vpop.permute.xlu0 %1599
        %v1602 = vmul.f32 %v1584, %v1600
        %v1603 = vtanh.pop %v1602
        %1605 = vrot.lane.b32.xlu0 %v1603, 32
        %v1606 = vpop.permute.xlu0 %1605
        %1608 = vst.msk [vmem:[#allocation2 + $0x20] sm:$0xff] %vm559, %v1606
        %v1609 = vsel %vm559, %v1499, 0
        %1611 = vmatprep.subr.mxu0 0.0
        %1612 = vmatpush1.msra.mxu0 %v546
        %1613 = vmatprep.subr.mxu0 0.0
        %1614 = vmatpush1.msra.mxu0 %v547
        %1615 = vmatprep.subr.mxu0 0.0
        %1616 = vmatpush1.msra.mxu0 %v548
        %1617 = vmatprep.subr.mxu0 0.0
        %1618 = vmatpush1.msra.mxu0 %v549
        %1619 = vmatprep.subr.mxu0 0.0
        %1620 = vmatpush1.msra.mxu0 0.0
        %1621 = vmatprep.subr.mxu0 0.0
        %1622 = vmatpush1.msra.mxu0 0.0
        %1623 = vmatprep.subr.mxu0 0.0
        %1624 = vmatpush1.msra.mxu0 0.0
        %1625 = vmatprep.subr.mxu0 0.0
        %1626 = vmatpush1.msra.mxu0 0.0
        %1627 = vmatprep.subr.mxu0 0.0
        %1628 = vmatpush1.msra.mxu0 0.0
        %1629 = vmatprep.subr.mxu0 0.0
        %1630 = vmatpush1.msra.mxu0 0.0
        %1631 = vmatprep.subr.mxu0 0.0
        %1632 = vmatpush1.msra.mxu0 0.0
        %1633 = vmatprep.subr.mxu0 0.0
        %1634 = vmatpush1.msra.mxu0 0.0
        %1635 = vmatprep.subr.mxu0 0.0
        %1636 = vmatpush1.msra.mxu0 0.0
        %1637 = vmatprep.subr.mxu0 0.0
        %1638 = vmatpush1.msra.mxu0 0.0
        %1639 = vmatprep.subr.mxu0 0.0
        %1640 = vmatpush1.msra.mxu0 0.0
        %1641 = vmatprep.subr.mxu0 0.0
        %1642 = vmatpush1.msra.mxu0 0.0
        %1643 = vmatprep.subr.mxu0 0.0
        %1644 = vmatpush1.msra.mxu0 0.0
        %1645 = vmatprep.subr.mxu0 0.0
        %1646 = vmatpush1.msra.mxu0 0.0
        %1647 = vmatprep.subr.mxu0 0.0
        %1648 = vmatpush1.msra.mxu0 0.0
        %1649 = vmatprep.subr.mxu0 0.0
        %1650 = vmatpush1.msra.mxu0 0.0
        %1651 = vmatprep.subr.mxu0 0.0
        %1652 = vmatpush1.msra.mxu0 0.0
        %1653 = vmatprep.subr.mxu0 0.0
        %1654 = vmatpush1.msra.mxu0 0.0
        %1655 = vmatprep.subr.mxu0 0.0
        %1656 = vmatpush1.msra.mxu0 0.0
        %1657 = vmatprep.subr.mxu0 0.0
        %1658 = vmatpush1.msra.mxu0 0.0
        %1659 = vmatprep.subr.mxu0 0.0
        %1660 = vmatpush1.msra.mxu0 0.0
        %1661 = vmatprep.subr.mxu0 0.0
        %1662 = vmatpush1.msra.mxu0 0.0
        %1663 = vmatprep.subr.mxu0 0.0
        %1664 = vmatpush1.msra.mxu0 0.0
        %1665 = vmatprep.subr.mxu0 0.0
        %1666 = vmatpush1.msra.mxu0 0.0
        %1667 = vmatprep.subr.mxu0 0.0
        %1668 = vmatpush1.msra.mxu0 0.0
        %1669 = vmatprep.subr.mxu0 0.0
        %1670 = vmatpush1.msra.mxu0 0.0
        %1671 = vmatprep.subr.mxu0 0.0
        %1672 = vmatpush1.msra.mxu0 0.0
        %1673 = vmatprep.subr.mxu0 0.0
        %1674 = vmatpush1.msra.mxu0 0.0
        %1675 = vmatprep.mubr.f32.mxu0 0.0
        %1676 = vmatmul.mubr.f32.gmra.mrb[0].mxu0 %v1609
        %v1677 = vpop.f32.mrb[0].mxu0
        %v1678 = vadd.f32 0.0, %v1677
        %v1679 = vpop.f32.mrb[0].mxu0
        %1680 = vdwg.mxu0
        %v1681 = vadd.f32 %v533, %v1678
        %v1682 = vxor.u32 %v1681, 2147483648
        %v1683 = vmul.f32 %v1682, 1.442695
        %v1684 = vpow.pop %v1683
        %v1685 = vadd.f32 %v1684, 1.0
        %v1686 = vrcp.pop %v1685
        %v1687 = vmul.f32 1.0, %v1686
        %v1688 = vtanh.pop %v1681
        %v1689 = vmul.f32 %v1687, %v1490
        %1691 = vrot.lane.b32.xlu0 %v1688, 64
        %v1692 = vpop.permute.xlu0 %1691
        %v1694 = vmul.f32 %v1687, %v1692
        %1696 = vrot.lane.b32.xlu0 %v1694, 32
        %v1697 = vpop.permute.xlu0 %1696
        %v1699 = vadd.f32 %v1689, %v1697
        %v1700 = vtanh.pop %v1699
        %1702 = vrot.lane.b32.xlu0 %v1700, 64
        %v1703 = vpop.permute.xlu0 %1702
        %v1705 = vmul.f32 %v1687, %v1703
        %1707 = vrot.lane.b32.xlu0 %v1705, 32
        %v1708 = vpop.permute.xlu0 %1707
        %1711 = vrot.lane.b32.xlu0 %v1602, 64
        %v1712 = vpop.permute.xlu0 %1711
        %v1714 = vsel %vm559, %v1708, %v1712
        %v1716 = vsel %vm669, %v1714, 0
        %1718 = vmatprep.subr.mxu0 0.0
        %1719 = vmatpush1.msra.mxu0 %v550
        %1720 = vmatprep.subr.mxu0 0.0
        %1721 = vmatpush1.msra.mxu0 %v551
        %1722 = vmatprep.subr.mxu0 0.0
        %1723 = vmatpush1.msra.mxu0 %v552
        %1724 = vmatprep.subr.mxu0 0.0
        %1725 = vmatpush1.msra.mxu0 %v553
        %1726 = vmatprep.subr.mxu0 0.0
        %1727 = vmatpush1.msra.mxu0 %v554
        %1728 = vmatprep.subr.mxu0 0.0
        %1729 = vmatpush1.msra.mxu0 %v555
        %1730 = vmatprep.subr.mxu0 0.0
        %1731 = vmatpush1.msra.mxu0 %v556
        %1732 = vmatprep.subr.mxu0 0.0
        %1733 = vmatpush1.msra.mxu0 %v557
        %1734 = vmatprep.subr.mxu0 0.0
        %1735 = vmatpush1.msra.mxu0 0.0
        %1736 = vmatprep.subr.mxu0 0.0
        %1737 = vmatpush1.msra.mxu0 0.0
        %1738 = vmatprep.subr.mxu0 0.0
        %1739 = vmatpush1.msra.mxu0 0.0
        %1740 = vmatprep.subr.mxu0 0.0
        %1741 = vmatpush1.msra.mxu0 0.0
        %1742 = vmatprep.subr.mxu0 0.0
        %1743 = vmatpush1.msra.mxu0 0.0
        %1744 = vmatprep.subr.mxu0 0.0
        %1745 = vmatpush1.msra.mxu0 0.0
        %1746 = vmatprep.subr.mxu0 0.0
        %1747 = vmatpush1.msra.mxu0 0.0
        %1748 = vmatprep.subr.mxu0 0.0
        %1749 = vmatpush1.msra.mxu0 0.0
        %1750 = vmatprep.subr.mxu0 0.0
        %1751 = vmatpush1.msra.mxu0 0.0
        %1752 = vmatprep.subr.mxu0 0.0
        %1753 = vmatpush1.msra.mxu0 0.0
        %1754 = vmatprep.subr.mxu0 0.0
        %1755 = vmatpush1.msra.mxu0 0.0
        %1756 = vmatprep.subr.mxu0 0.0
        %1757 = vmatpush1.msra.mxu0 0.0
        %1758 = vmatprep.subr.mxu0 0.0
        %1759 = vmatpush1.msra.mxu0 0.0
        %1760 = vmatprep.subr.mxu0 0.0
        %1761 = vmatpush1.msra.mxu0 0.0
        %1762 = vmatprep.subr.mxu0 0.0
        %1763 = vmatpush1.msra.mxu0 0.0
        %1764 = vmatprep.subr.mxu0 0.0
        %1765 = vmatpush1.msra.mxu0 0.0
        %1766 = vmatprep.subr.mxu0 0.0
        %1767 = vmatpush1.msra.mxu0 0.0
        %1768 = vmatprep.subr.mxu0 0.0
        %1769 = vmatpush1.msra.mxu0 0.0
        %1770 = vmatprep.subr.mxu0 0.0
        %1771 = vmatpush1.msra.mxu0 0.0
        %1772 = vmatprep.subr.mxu0 0.0
        %1773 = vmatpush1.msra.mxu0 0.0
        %1774 = vmatprep.subr.mxu0 0.0
        %1775 = vmatpush1.msra.mxu0 0.0
        %1776 = vmatprep.subr.mxu0 0.0
        %1777 = vmatpush1.msra.mxu0 0.0
        %1778 = vmatprep.subr.mxu0 0.0
        %1779 = vmatpush1.msra.mxu0 0.0
        %1780 = vmatprep.subr.mxu0 0.0
        %1781 = vmatpush1.msra.mxu0 0.0
        %1782 = vmatprep.mubr.f32.mxu0 0.0
        %1783 = vmatmul.mubr.f32.gmra.mrb[0].mxu0 %v1716
        %v1784 = vpop.f32.mrb[0].mxu0
        %v1785 = vadd.f32 %v667, %v1784
        %v1786 = vpop.f32.mrb[0].mxu0
        %1787 = vdwg.mxu0
        %v1788 = vxor.u32 %v1785, 2147483648
        %v1789 = vmul.f32 %v1788, 1.442695
        %v1790 = vpow.pop %v1789
        %v1791 = vadd.f32 %v1790, 1.0
        %v1792 = vrcp.pop %v1791
        %v1793 = vmul.f32 1.0, %v1792
        %v1794 = vtanh.pop %v1785
        %v1795 = vmul.f32 %v1793, %v1596
        %1797 = vrot.lane.b32.xlu0 %v1794, 64
        %v1798 = vpop.permute.xlu0 %1797
        %v1800 = vmul.f32 %v1793, %v1798
        %1802 = vrot.lane.b32.xlu0 %v1800, 32
        %v1803 = vpop.permute.xlu0 %1802
        %v1805 = vadd.f32 %v1795, %v1803
        %v1806 = vtanh.pop %v1805
        %1808 = vrot.lane.b32.xlu0 %v1806, 64
        %v1809 = vpop.permute.xlu0 %1808
        %v1811 = vmul.f32 %v1793, %v1809
        %v1812 = vtanh.pop %v1811
        %1814 = vrot.lane.b32.xlu0 %v1812, 32
        %v1815 = vpop.permute.xlu0 %1814
        %1817 = vst.msk [vmem:[#allocation2 + $0x28] sm:$0xff] %vm559, %v1815
        %v1818 = vsel %vm559, %v1708, 0
        %1820 = vmatprep.subr.mxu0 0.0
        %1821 = vmatpush1.msra.mxu0 %v546
        %1822 = vmatprep.subr.mxu0 0.0
        %1823 = vmatpush1.msra.mxu0 %v547
        %1824 = vmatprep.subr.mxu0 0.0
        %1825 = vmatpush1.msra.mxu0 %v548
        %1826 = vmatprep.subr.mxu0 0.0
        %1827 = vmatpush1.msra.mxu0 %v549
        %1828 = vmatprep.subr.mxu0 0.0
        %1829 = vmatpush1.msra.mxu0 0.0
        %1830 = vmatprep.subr.mxu0 0.0
        %1831 = vmatpush1.msra.mxu0 0.0
        %1832 = vmatprep.subr.mxu0 0.0
        %1833 = vmatpush1.msra.mxu0 0.0
        %1834 = vmatprep.subr.mxu0 0.0
        %1835 = vmatpush1.msra.mxu0 0.0
        %1836 = vmatprep.subr.mxu0 0.0
        %1837 = vmatpush1.msra.mxu0 0.0
        %1838 = vmatprep.subr.mxu0 0.0
        %1839 = vmatpush1.msra.mxu0 0.0
        %1840 = vmatprep.subr.mxu0 0.0
        %1841 = vmatpush1.msra.mxu0 0.0
        %1842 = vmatprep.subr.mxu0 0.0
        %1843 = vmatpush1.msra.mxu0 0.0
        %1844 = vmatprep.subr.mxu0 0.0
        %1845 = vmatpush1.msra.mxu0 0.0
        %1846 = vmatprep.subr.mxu0 0.0
        %1847 = vmatpush1.msra.mxu0 0.0
        %1848 = vmatprep.subr.mxu0 0.0
        %1849 = vmatpush1.msra.mxu0 0.0
        %1850 = vmatprep.subr.mxu0 0.0
        %1851 = vmatpush1.msra.mxu0 0.0
        %1852 = vmatprep.subr.mxu0 0.0
        %1853 = vmatpush1.msra.mxu0 0.0
        %1854 = vmatprep.subr.mxu0 0.0
        %1855 = vmatpush1.msra.mxu0 0.0
        %1856 = vmatprep.subr.mxu0 0.0
        %1857 = vmatpush1.msra.mxu0 0.0
        %1858 = vmatprep.subr.mxu0 0.0
        %1859 = vmatpush1.msra.mxu0 0.0
        %1860 = vmatprep.subr.mxu0 0.0
        %1861 = vmatpush1.msra.mxu0 0.0
        %1862 = vmatprep.subr.mxu0 0.0
        %1863 = vmatpush1.msra.mxu0 0.0
        %1864 = vmatprep.subr.mxu0 0.0
        %1865 = vmatpush1.msra.mxu0 0.0
        %1866 = vmatprep.subr.mxu0 0.0
        %1867 = vmatpush1.msra.mxu0 0.0
        %1868 = vmatprep.subr.mxu0 0.0
        %1869 = vmatpush1.msra.mxu0 0.0
        %1870 = vmatprep.subr.mxu0 0.0
        %1871 = vmatpush1.msra.mxu0 0.0
        %1872 = vmatprep.subr.mxu0 0.0
        %1873 = vmatpush1.msra.mxu0 0.0
        %1874 = vmatprep.subr.mxu0 0.0
        %1875 = vmatpush1.msra.mxu0 0.0
        %1876 = vmatprep.subr.mxu0 0.0
        %1877 = vmatpush1.msra.mxu0 0.0
        %1878 = vmatprep.subr.mxu0 0.0
        %1879 = vmatpush1.msra.mxu0 0.0
        %1880 = vmatprep.subr.mxu0 0.0
        %1881 = vmatpush1.msra.mxu0 0.0
        %1882 = vmatprep.subr.mxu0 0.0
        %1883 = vmatpush1.msra.mxu0 0.0
        %1884 = vmatprep.mubr.f32.mxu0 0.0
        %1885 = vmatmul.mubr.f32.gmra.mrb[0].mxu0 %v1818
        %v1886 = vpop.f32.mrb[0].mxu0
        %v1887 = vadd.f32 0.0, %v1886
        %v1888 = vpop.f32.mrb[0].mxu0
        %1889 = vdwg.mxu0
        %v1890 = vadd.f32 %v538, %v1887
        %v1891 = vxor.u32 %v1890, 2147483648
        %v1892 = vmul.f32 %v1891, 1.442695
        %v1893 = vpow.pop %v1892
        %v1894 = vadd.f32 %v1893, 1.0
        %v1895 = vrcp.pop %v1894
        %v1896 = vmul.f32 1.0, %v1895
        %v1897 = vtanh.pop %v1890
        %v1898 = vmul.f32 %v1896, %v1699
        %1900 = vrot.lane.b32.xlu0 %v1897, 64
        %v1901 = vpop.permute.xlu0 %1900
        %v1903 = vmul.f32 %v1896, %v1901
        %1905 = vrot.lane.b32.xlu0 %v1903, 32
        %v1906 = vpop.permute.xlu0 %1905
        %v1908 = vadd.f32 %v1898, %v1906
        %v1909 = vtanh.pop %v1908
        %1911 = vrot.lane.b32.xlu0 %v1909, 64
        %v1912 = vpop.permute.xlu0 %1911
        %v1914 = vmul.f32 %v1896, %v1912
        %1916 = vrot.lane.b32.xlu0 %v1914, 32
        %v1917 = vpop.permute.xlu0 %1916
        %1920 = vrot.lane.b32.xlu0 %v1811, 64
        %v1921 = vpop.permute.xlu0 %1920
        %v1923 = vsel %vm559, %v1917, %v1921
        %v1925 = vsel %vm669, %v1923, 0
        %1927 = vmatprep.subr.mxu0 0.0
        %1928 = vmatpush1.msra.mxu0 %v550
        %1929 = vmatprep.subr.mxu0 0.0
        %1930 = vmatpush1.msra.mxu0 %v551
        %1931 = vmatprep.subr.mxu0 0.0
        %1932 = vmatpush1.msra.mxu0 %v552
        %1933 = vmatprep.subr.mxu0 0.0
        %1934 = vmatpush1.msra.mxu0 %v553
        %1935 = vmatprep.subr.mxu0 0.0
        %1936 = vmatpush1.msra.mxu0 %v554
        %1937 = vmatprep.subr.mxu0 0.0
        %1938 = vmatpush1.msra.mxu0 %v555
        %1939 = vmatprep.subr.mxu0 0.0
        %1940 = vmatpush1.msra.mxu0 %v556
        %1941 = vmatprep.subr.mxu0 0.0
        %1942 = vmatpush1.msra.mxu0 %v557
        %1943 = vmatprep.subr.mxu0 0.0
        %1944 = vmatpush1.msra.mxu0 0.0
        %1945 = vmatprep.subr.mxu0 0.0
        %1946 = vmatpush1.msra.mxu0 0.0
        %1947 = vmatprep.subr.mxu0 0.0
        %1948 = vmatpush1.msra.mxu0 0.0
        %1949 = vmatprep.subr.mxu0 0.0
        %1950 = vmatpush1.msra.mxu0 0.0
        %1951 = vmatprep.subr.mxu0 0.0
        %1952 = vmatpush1.msra.mxu0 0.0
        %1953 = vmatprep.subr.mxu0 0.0
        %1954 = vmatpush1.msra.mxu0 0.0
        %1955 = vmatprep.subr.mxu0 0.0
        %1956 = vmatpush1.msra.mxu0 0.0
        %1957 = vmatprep.subr.mxu0 0.0
        %1958 = vmatpush1.msra.mxu0 0.0
        %1959 = vmatprep.subr.mxu0 0.0
        %1960 = vmatpush1.msra.mxu0 0.0
        %1961 = vmatprep.subr.mxu0 0.0
        %1962 = vmatpush1.msra.mxu0 0.0
        %1963 = vmatprep.subr.mxu0 0.0
        %1964 = vmatpush1.msra.mxu0 0.0
        %1965 = vmatprep.subr.mxu0 0.0
        %1966 = vmatpush1.msra.mxu0 0.0
        %1967 = vmatprep.subr.mxu0 0.0
        %1968 = vmatpush1.msra.mxu0 0.0
        %1969 = vmatprep.subr.mxu0 0.0
        %1970 = vmatpush1.msra.mxu0 0.0
        %1971 = vmatprep.subr.mxu0 0.0
        %1972 = vmatpush1.msra.mxu0 0.0
        %1973 = vmatprep.subr.mxu0 0.0
        %1974 = vmatpush1.msra.mxu0 0.0
        %1975 = vmatprep.subr.mxu0 0.0
        %1976 = vmatpush1.msra.mxu0 0.0
        %1977 = vmatprep.subr.mxu0 0.0
        %1978 = vmatpush1.msra.mxu0 0.0
        %1979 = vmatprep.subr.mxu0 0.0
        %1980 = vmatpush1.msra.mxu0 0.0
        %1981 = vmatprep.subr.mxu0 0.0
        %1982 = vmatpush1.msra.mxu0 0.0
        %1983 = vmatprep.subr.mxu0 0.0
        %1984 = vmatpush1.msra.mxu0 0.0
        %1985 = vmatprep.subr.mxu0 0.0
        %1986 = vmatpush1.msra.mxu0 0.0
        %1987 = vmatprep.subr.mxu0 0.0
        %1988 = vmatpush1.msra.mxu0 0.0
        %1989 = vmatprep.subr.mxu0 0.0
        %1990 = vmatpush1.msra.mxu0 0.0
        %1991 = vmatprep.mubr.f32.mxu0 0.0
        %1992 = vmatmul.mubr.f32.gmra.mrb[0].mxu0 %v1925
        %v1993 = vpop.f32.mrb[0].mxu0
        %v1994 = vadd.f32 %v667, %v1993
        %v1995 = vpop.f32.mrb[0].mxu0
        %1996 = vdwg.mxu0
        %v1997 = vxor.u32 %v1994, 2147483648
        %v1998 = vmul.f32 %v1997, 1.442695
        %v1999 = vpow.pop %v1998
        %v2000 = vadd.f32 %v1999, 1.0
        %v2001 = vrcp.pop %v2000
        %v2002 = vmul.f32 1.0, %v2001
        %v2003 = vtanh.pop %v1994
        %v2004 = vmul.f32 %v2002, %v1805
        %2006 = vrot.lane.b32.xlu0 %v2003, 64
        %v2007 = vpop.permute.xlu0 %2006
        %v2009 = vmul.f32 %v2002, %v2007
        %2011 = vrot.lane.b32.xlu0 %v2009, 32
        %v2012 = vpop.permute.xlu0 %2011
        %v2014 = vadd.f32 %v2004, %v2012
        %v2015 = vtanh.pop %v2014
        %2017 = vrot.lane.b32.xlu0 %v2015, 64
        %v2018 = vpop.permute.xlu0 %2017
        %v2020 = vmul.f32 %v2002, %v2018
        %v2021 = vtanh.pop %v2020
        %2023 = vrot.lane.b32.xlu0 %v2021, 32
        %v2024 = vpop.permute.xlu0 %2023
        %2026 = vst.msk [vmem:[#allocation2 + $0x30] sm:$0xff] %vm559, %v2024
        %v2027 = vsel %vm559, %v1917, 0
        %2029 = vmatprep.subr.mxu0 0.0
        %2030 = vmatpush1.msra.mxu0 %v546
        %2031 = vmatprep.subr.mxu0 0.0
        %2032 = vmatpush1.msra.mxu0 %v547
        %2033 = vmatprep.subr.mxu0 0.0
        %2034 = vmatpush1.msra.mxu0 %v548
        %2035 = vmatprep.subr.mxu0 0.0
        %2036 = vmatpush1.msra.mxu0 %v549
        %2037 = vmatprep.subr.mxu0 0.0
        %2038 = vmatpush1.msra.mxu0 0.0
        %2039 = vmatprep.subr.mxu0 0.0
        %2040 = vmatpush1.msra.mxu0 0.0
        %2041 = vmatprep.subr.mxu0 0.0
        %2042 = vmatpush1.msra.mxu0 0.0
        %2043 = vmatprep.subr.mxu0 0.0
        %2044 = vmatpush1.msra.mxu0 0.0
        %2045 = vmatprep.subr.mxu0 0.0
        %2046 = vmatpush1.msra.mxu0 0.0
        %2047 = vmatprep.subr.mxu0 0.0
        %2048 = vmatpush1.msra.mxu0 0.0
        %2049 = vmatprep.subr.mxu0 0.0
        %2050 = vmatpush1.msra.mxu0 0.0
        %2051 = vmatprep.subr.mxu0 0.0
        %2052 = vmatpush1.msra.mxu0 0.0
        %2053 = vmatprep.subr.mxu0 0.0
        %2054 = vmatpush1.msra.mxu0 0.0
        %2055 = vmatprep.subr.mxu0 0.0
        %2056 = vmatpush1.msra.mxu0 0.0
        %2057 = vmatprep.subr.mxu0 0.0
        %2058 = vmatpush1.msra.mxu0 0.0
        %2059 = vmatprep.subr.mxu0 0.0
        %2060 = vmatpush1.msra.mxu0 0.0
        %2061 = vmatprep.subr.mxu0 0.0
        %2062 = vmatpush1.msra.mxu0 0.0
        %2063 = vmatprep.subr.mxu0 0.0
        %2064 = vmatpush1.msra.mxu0 0.0
        %2065 = vmatprep.subr.mxu0 0.0
        %2066 = vmatpush1.msra.mxu0 0.0
        %2067 = vmatprep.subr.mxu0 0.0
        %2068 = vmatpush1.msra.mxu0 0.0
        %2069 = vmatprep.subr.mxu0 0.0
        %2070 = vmatpush1.msra.mxu0 0.0
        %2071 = vmatprep.subr.mxu0 0.0
        %2072 = vmatpush1.msra.mxu0 0.0
        %2073 = vmatprep.subr.mxu0 0.0
        %2074 = vmatpush1.msra.mxu0 0.0
        %2075 = vmatprep.subr.mxu0 0.0
        %2076 = vmatpush1.msra.mxu0 0.0
        %2077 = vmatprep.subr.mxu0 0.0
        %2078 = vmatpush1.msra.mxu0 0.0
        %2079 = vmatprep.subr.mxu0 0.0
        %2080 = vmatpush1.msra.mxu0 0.0
        %2081 = vmatprep.subr.mxu0 0.0
        %2082 = vmatpush1.msra.mxu0 0.0
        %2083 = vmatprep.subr.mxu0 0.0
        %2084 = vmatpush1.msra.mxu0 0.0
        %2085 = vmatprep.subr.mxu0 0.0
        %2086 = vmatpush1.msra.mxu0 0.0
        %2087 = vmatprep.subr.mxu0 0.0
        %2088 = vmatpush1.msra.mxu0 0.0
        %2089 = vmatprep.subr.mxu0 0.0
        %2090 = vmatpush1.msra.mxu0 0.0
        %2091 = vmatprep.subr.mxu0 0.0
        %2092 = vmatpush1.msra.mxu0 0.0
        %2093 = vmatprep.mubr.f32.mxu0 0.0
        %2094 = vmatmul.mubr.f32.gmra.mrb[0].mxu0 %v2027
        %v2095 = vpop.f32.mrb[0].mxu0
        %v2096 = vadd.f32 0.0, %v2095
        %v2097 = vpop.f32.mrb[0].mxu0
        %2098 = vdwg.mxu0
        %v2099 = vadd.f32 %v543, %v2096
        %v2100 = vxor.u32 %v2099, 2147483648
        %v2101 = vmul.f32 %v2100, 1.442695
        %v2102 = vpow.pop %v2101
        %v2103 = vadd.f32 %v2102, 1.0
        %v2104 = vrcp.pop %v2103
        %v2105 = vmul.f32 1.0, %v2104
        %v2106 = vtanh.pop %v2099
        %v2107 = vmul.f32 %v2105, %v1908
        %2109 = vrot.lane.b32.xlu0 %v2106, 64
        %v2110 = vpop.permute.xlu0 %2109
        %v2112 = vmul.f32 %v2105, %v2110
        %2114 = vrot.lane.b32.xlu0 %v2112, 32
        %v2115 = vpop.permute.xlu0 %2114
        %v2117 = vadd.f32 %v2107, %v2115
        %v2118 = vtanh.pop %v2117
        %2120 = vrot.lane.b32.xlu0 %v2118, 64
        %v2121 = vpop.permute.xlu0 %2120
        %v2123 = vmul.f32 %v2105, %v2121
        %2125 = vrot.lane.b32.xlu0 %v2123, 32
        %v2126 = vpop.permute.xlu0 %2125
        %2129 = vrot.lane.b32.xlu0 %v2020, 64
        %v2130 = vpop.permute.xlu0 %2129
        %v2132 = vsel %vm559, %v2126, %v2130
        %v2134 = vsel %vm669, %v2132, 0
        %2136 = vmatprep.subr.mxu0 0.0
        %2137 = vmatpush1.msra.mxu0 %v550
        %2138 = vmatprep.subr.mxu0 0.0
        %2139 = vmatpush1.msra.mxu0 %v551
        %2140 = vmatprep.subr.mxu0 0.0
        %2141 = vmatpush1.msra.mxu0 %v552
        %2142 = vmatprep.subr.mxu0 0.0
        %2143 = vmatpush1.msra.mxu0 %v553
        %2144 = vmatprep.subr.mxu0 0.0
        %2145 = vmatpush1.msra.mxu0 %v554
        %2146 = vmatprep.subr.mxu0 0.0
        %2147 = vmatpush1.msra.mxu0 %v555
        %2148 = vmatprep.subr.mxu0 0.0
        %2149 = vmatpush1.msra.mxu0 %v556
        %2150 = vmatprep.subr.mxu0 0.0
        %2151 = vmatpush1.msra.mxu0 %v557
        %2152 = vmatprep.subr.mxu0 0.0
        %2153 = vmatpush1.msra.mxu0 0.0
        %2154 = vmatprep.subr.mxu0 0.0
        %2155 = vmatpush1.msra.mxu0 0.0
        %2156 = vmatprep.subr.mxu0 0.0
        %2157 = vmatpush1.msra.mxu0 0.0
        %2158 = vmatprep.subr.mxu0 0.0
        %2159 = vmatpush1.msra.mxu0 0.0
        %2160 = vmatprep.subr.mxu0 0.0
        %2161 = vmatpush1.msra.mxu0 0.0
        %2162 = vmatprep.subr.mxu0 0.0
        %2163 = vmatpush1.msra.mxu0 0.0
        %2164 = vmatprep.subr.mxu0 0.0
        %2165 = vmatpush1.msra.mxu0 0.0
        %2166 = vmatprep.subr.mxu0 0.0
        %2167 = vmatpush1.msra.mxu0 0.0
        %2168 = vmatprep.subr.mxu0 0.0
        %2169 = vmatpush1.msra.mxu0 0.0
        %2170 = vmatprep.subr.mxu0 0.0
        %2171 = vmatpush1.msra.mxu0 0.0
        %2172 = vmatprep.subr.mxu0 0.0
        %2173 = vmatpush1.msra.mxu0 0.0
        %2174 = vmatprep.subr.mxu0 0.0
        %2175 = vmatpush1.msra.mxu0 0.0
        %2176 = vmatprep.subr.mxu0 0.0
        %2177 = vmatpush1.msra.mxu0 0.0
        %2178 = vmatprep.subr.mxu0 0.0
        %2179 = vmatpush1.msra.mxu0 0.0
        %2180 = vmatprep.subr.mxu0 0.0
        %2181 = vmatpush1.msra.mxu0 0.0
        %2182 = vmatprep.subr.mxu0 0.0
        %2183 = vmatpush1.msra.mxu0 0.0
        %2184 = vmatprep.subr.mxu0 0.0
        %2185 = vmatpush1.msra.mxu0 0.0
        %2186 = vmatprep.subr.mxu0 0.0
        %2187 = vmatpush1.msra.mxu0 0.0
        %2188 = vmatprep.subr.mxu0 0.0
        %2189 = vmatpush1.msra.mxu0 0.0
        %2190 = vmatprep.subr.mxu0 0.0
        %2191 = vmatpush1.msra.mxu0 0.0
        %2192 = vmatprep.subr.mxu0 0.0
        %2193 = vmatpush1.msra.mxu0 0.0
        %2194 = vmatprep.subr.mxu0 0.0
        %2195 = vmatpush1.msra.mxu0 0.0
        %2196 = vmatprep.subr.mxu0 0.0
        %2197 = vmatpush1.msra.mxu0 0.0
        %2198 = vmatprep.subr.mxu0 0.0
        %2199 = vmatpush1.msra.mxu0 0.0
        %2200 = vmatprep.mubr.f32.mxu0 0.0
        %2201 = vmatmul.mubr.f32.gmra.mrb[0].mxu0 %v2134
        %v2202 = vpop.f32.mrb[0].mxu0
        %v2203 = vadd.f32 %v667, %v2202
        %v2204 = vpop.f32.mrb[0].mxu0
        %2205 = vdwg.mxu0
        %v2206 = vxor.u32 %v2203, 2147483648
        %v2207 = vmul.f32 %v2206, 1.442695
        %v2208 = vpow.pop %v2207
        %v2209 = vadd.f32 %v2208, 1.0
        %v2210 = vrcp.pop %v2209
        %v2211 = vmul.f32 1.0, %v2210
        %v2212 = vtanh.pop %v2203
        %v2213 = vmul.f32 %v2211, %v2014
        %2215 = vrot.lane.b32.xlu0 %v2212, 64
        %v2216 = vpop.permute.xlu0 %2215
        %v2218 = vmul.f32 %v2211, %v2216
        %2220 = vrot.lane.b32.xlu0 %v2218, 32
        %v2221 = vpop.permute.xlu0 %2220
        %v2223 = vadd.f32 %v2213, %v2221
        %v2224 = vtanh.pop %v2223
        %2226 = vrot.lane.b32.xlu0 %v2224, 64
        %v2227 = vpop.permute.xlu0 %2226
        %v2229 = vmul.f32 %v2211, %v2227
        %v2230 = vtanh.pop %v2229
        %2232 = vrot.lane.b32.xlu0 %v2230, 32
        %v2233 = vpop.permute.xlu0 %2232
        %2235 = vst.msk [vmem:[#allocation2 + $0x38] sm:$0xff] %vm559, %v2233
        %v2236 = vld [vmem:[#allocation2] sm:$0xff]
        %v2237 = vld [vmem:[#allocation2 + $0x8] sm:$0xff]
        %v2238 = vld [vmem:[#allocation2 + $0x10] sm:$0xff]
        %v2239 = vld [vmem:[#allocation2 + $0x18] sm:$0xff]
        %v2240 = vld [vmem:[#allocation2 + $0x20] sm:$0xff]
        %v2241 = vld [vmem:[#allocation2 + $0x28] sm:$0xff]
        %v2242 = vld [vmem:[#allocation2 + $0x30] sm:$0xff]
        %v2243 = vld [vmem:[#allocation2 + $0x38] sm:$0xff]
        %v2244 = vld [vmem:[%s6] sm:$0xff]
        %v2245 = vld [vmem:[%s6 + $0x8] sm:$0xff]
        %v2246 = vld [vmem:[%s6 + $0x10] sm:$0xff]
        %v2247 = vld [vmem:[%s6 + $0x18] sm:$0xff]
        %v2249 = vsel %vm559, %v2236, 0
        %v2252 = vsel %vm559, %v2237, 0
        %v2255 = vsel %vm559, %v2238, 0
        %v2258 = vsel %vm559, %v2239, 0
        %v2261 = vsel %vm559, %v2240, 0
        %v2264 = vsel %vm559, %v2241, 0
        %v2267 = vsel %vm559, %v2242, 0
        %v2270 = vsel %vm559, %v2243, 0
        %2272 = vmatprep.subr.mxu0 0.0
        %2273 = vmatpush1.msra.mxu0 %v2244
        %2274 = vmatprep.subr.mxu0 0.0
        %2275 = vmatpush1.msra.mxu0 %v2245
        %2276 = vmatprep.subr.mxu0 0.0
        %2277 = vmatpush1.msra.mxu0 %v2246
        %2278 = vmatprep.subr.mxu0 0.0
        %2279 = vmatpush1.msra.mxu0 %v2247
        %2280 = vmatprep.subr.mxu0 0.0
        %2281 = vmatpush1.msra.mxu0 0.0
        %2282 = vmatprep.subr.mxu0 0.0
        %2283 = vmatpush1.msra.mxu0 0.0
        %2284 = vmatprep.subr.mxu0 0.0
        %2285 = vmatpush1.msra.mxu0 0.0
        %2286 = vmatprep.subr.mxu0 0.0
        %2287 = vmatpush1.msra.mxu0 0.0
        %2288 = vmatprep.subr.mxu0 0.0
        %2289 = vmatpush1.msra.mxu0 0.0
        %2290 = vmatprep.subr.mxu0 0.0
        %2291 = vmatpush1.msra.mxu0 0.0
        %2292 = vmatprep.subr.mxu0 0.0
        %2293 = vmatpush1.msra.mxu0 0.0
        %2294 = vmatprep.subr.mxu0 0.0
        %2295 = vmatpush1.msra.mxu0 0.0
        %2296 = vmatprep.subr.mxu0 0.0
        %2297 = vmatpush1.msra.mxu0 0.0
        %2298 = vmatprep.subr.mxu0 0.0
        %2299 = vmatpush1.msra.mxu0 0.0
        %2300 = vmatprep.subr.mxu0 0.0
        %2301 = vmatpush1.msra.mxu0 0.0
        %2302 = vmatprep.subr.mxu0 0.0
        %2303 = vmatpush1.msra.mxu0 0.0
        %2304 = vmatprep.subr.mxu0 0.0
        %2305 = vmatpush1.msra.mxu0 0.0
        %2306 = vmatprep.subr.mxu0 0.0
        %2307 = vmatpush1.msra.mxu0 0.0
        %2308 = vmatprep.subr.mxu0 0.0
        %2309 = vmatpush1.msra.mxu0 0.0
        %2310 = vmatprep.subr.mxu0 0.0
        %2311 = vmatpush1.msra.mxu0 0.0
        %2312 = vmatprep.subr.mxu0 0.0
        %2313 = vmatpush1.msra.mxu0 0.0
        %2314 = vmatprep.subr.mxu0 0.0
        %2315 = vmatpush1.msra.mxu0 0.0
        %2316 = vmatprep.subr.mxu0 0.0
        %2317 = vmatpush1.msra.mxu0 0.0
        %2318 = vmatprep.subr.mxu0 0.0
        %2319 = vmatpush1.msra.mxu0 0.0
        %2320 = vmatprep.subr.mxu0 0.0
        %2321 = vmatpush1.msra.mxu0 0.0
        %2322 = vmatprep.subr.mxu0 0.0
        %2323 = vmatpush1.msra.mxu0 0.0
        %2324 = vmatprep.subr.mxu0 0.0
        %2325 = vmatpush1.msra.mxu0 0.0
        %2326 = vmatprep.subr.mxu0 0.0
        %2327 = vmatpush1.msra.mxu0 0.0
        %2328 = vmatprep.subr.mxu0 0.0
        %2329 = vmatpush1.msra.mxu0 0.0
        %2330 = vmatprep.subr.mxu0 0.0
        %2331 = vmatpush1.msra.mxu0 0.0
        %2332 = vmatprep.subr.mxu0 0.0
        %2333 = vmatpush1.msra.mxu0 0.0
        %2334 = vmatprep.subr.mxu0 0.0
        %2335 = vmatpush1.msra.mxu0 0.0
        %2336 = vmatprep.mubr.f32.mxu0 0.0
        %2337 = vmatmul.mubr.f32.gmra.mrb[0].mxu0 %v2249
        %v2338 = vpop.f32.mrb[0].mxu0
        %v2339 = vadd.f32 0.0, %v2338
        %v2340 = vpop.f32.mrb[0].mxu0
        %2341 = vmatprep.mubr.f32.mxu0 0.0
        %2342 = vmatmul.mubr.f32.gmra.mrb[0].mxu0 %v2252
        %v2343 = vpop.f32.mrb[0].mxu0
        %v2344 = vadd.f32 0.0, %v2343
        %v2345 = vpop.f32.mrb[0].mxu0
        %2346 = vmatprep.mubr.f32.mxu0 0.0
        %2347 = vmatmul.mubr.f32.gmra.mrb[0].mxu0 %v2255
        %v2348 = vpop.f32.mrb[0].mxu0
        %v2349 = vadd.f32 0.0, %v2348
        %v2350 = vpop.f32.mrb[0].mxu0
        %2351 = vmatprep.mubr.f32.mxu0 0.0
        %2352 = vmatmul.mubr.f32.gmra.mrb[0].mxu0 %v2258
        %v2353 = vpop.f32.mrb[0].mxu0
        %v2354 = vadd.f32 0.0, %v2353
        %v2355 = vpop.f32.mrb[0].mxu0
        %2356 = vmatprep.mubr.f32.mxu0 0.0
        %2357 = vmatmul.mubr.f32.gmra.mrb[0].mxu0 %v2261
        %v2358 = vpop.f32.mrb[0].mxu0
        %v2359 = vadd.f32 0.0, %v2358
        %v2360 = vpop.f32.mrb[0].mxu0
        %2361 = vmatprep.mubr.f32.mxu0 0.0
        %2362 = vmatmul.mubr.f32.gmra.mrb[0].mxu0 %v2264
        %v2363 = vpop.f32.mrb[0].mxu0
        %v2364 = vadd.f32 0.0, %v2363
        %v2365 = vpop.f32.mrb[0].mxu0
        %2366 = vmatprep.mubr.f32.mxu0 0.0
        %2367 = vmatmul.mubr.f32.gmra.mrb[0].mxu0 %v2267
        %v2368 = vpop.f32.mrb[0].mxu0
        %v2369 = vadd.f32 0.0, %v2368
        %v2370 = vpop.f32.mrb[0].mxu0
        %2371 = vmatprep.mubr.f32.mxu0 0.0
        %2372 = vmatmul.mubr.f32.gmra.mrb[0].mxu0 %v2270
        %v2373 = vpop.f32.mrb[0].mxu0
        %v2374 = vadd.f32 0.0, %v2373
        %v2375 = vpop.f32.mrb[0].mxu0
        %2376 = vdwg.mxu0
        %v2377 = vmax.f32 %v2339, 0.0
        %v2378 = vmax.f32 %v2344, 0.0
        %v2379 = vmax.f32 %v2349, 0.0
        %v2380 = vmax.f32 %v2354, 0.0
        %v2381 = vmax.f32 %v2359, 0.0
        %v2382 = vmax.f32 %v2364, 0.0
        %v2383 = vmax.f32 %v2369, 0.0
        %v2384 = vmax.f32 %v2374, 0.0
        %v2385 = vld [vmem:[%s7] sm:$0xf]
        %vm2386 = vcmask 31744
        %v2388 = vsel %vm2386, %v2377, 0
        %v2391 = vsel %vm2386, %v2378, 0
        %v2394 = vsel %vm2386, %v2379, 0
        %v2397 = vsel %vm2386, %v2380, 0
        %v2400 = vsel %vm2386, %v2381, 0
        %v2403 = vsel %vm2386, %v2382, 0
        %v2406 = vsel %vm2386, %v2383, 0
        %v2409 = vsel %vm2386, %v2384, 0
        %vm2411 = vcmask 1043456
        %v2413 = vsel %vm2411, %v2385, 0
        %2415 = vmatprep.subr.mxu0 0.0
        %2416 = vmatpush1.msra.mxu0 %v2413
        %2417 = vmatprep.subr.mxu0 0.0
        %2418 = vmatpush1.msra.mxu0 0.0
        %2419 = vmatprep.subr.mxu0 0.0
        %2420 = vmatpush1.msra.mxu0 0.0
        %2421 = vmatprep.subr.mxu0 0.0
        %2422 = vmatpush1.msra.mxu0 0.0
        %2423 = vmatprep.subr.mxu0 0.0
        %2424 = vmatpush1.msra.mxu0 0.0
        %2425 = vmatprep.subr.mxu0 0.0
        %2426 = vmatpush1.msra.mxu0 0.0
        %2427 = vmatprep.subr.mxu0 0.0
        %2428 = vmatpush1.msra.mxu0 0.0
        %2429 = vmatprep.subr.mxu0 0.0
        %2430 = vmatpush1.msra.mxu0 0.0
        %2431 = vmatprep.subr.mxu0 0.0
        %2432 = vmatpush1.msra.mxu0 0.0
        %2433 = vmatprep.subr.mxu0 0.0
        %2434 = vmatpush1.msra.mxu0 0.0
        %2435 = vmatprep.subr.mxu0 0.0
        %2436 = vmatpush1.msra.mxu0 0.0
        %2437 = vmatprep.subr.mxu0 0.0
        %2438 = vmatpush1.msra.mxu0 0.0
        %2439 = vmatprep.subr.mxu0 0.0
        %2440 = vmatpush1.msra.mxu0 0.0
        %2441 = vmatprep.subr.mxu0 0.0
        %2442 = vmatpush1.msra.mxu0 0.0
        %2443 = vmatprep.subr.mxu0 0.0
        %2444 = vmatpush1.msra.mxu0 0.0
        %2445 = vmatprep.subr.mxu0 0.0
        %2446 = vmatpush1.msra.mxu0 0.0
        %2447 = vmatprep.subr.mxu0 0.0
        %2448 = vmatpush1.msra.mxu0 0.0
        %2449 = vmatprep.subr.mxu0 0.0
        %2450 = vmatpush1.msra.mxu0 0.0
        %2451 = vmatprep.subr.mxu0 0.0
        %2452 = vmatpush1.msra.mxu0 0.0
        %2453 = vmatprep.subr.mxu0 0.0
        %2454 = vmatpush1.msra.mxu0 0.0
        %2455 = vmatprep.subr.mxu0 0.0
        %2456 = vmatpush1.msra.mxu0 0.0
        %2457 = vmatprep.subr.mxu0 0.0
        %2458 = vmatpush1.msra.mxu0 0.0
        %2459 = vmatprep.subr.mxu0 0.0
        %2460 = vmatpush1.msra.mxu0 0.0
        %2461 = vmatprep.subr.mxu0 0.0
        %2462 = vmatpush1.msra.mxu0 0.0
        %2463 = vmatprep.subr.mxu0 0.0
        %2464 = vmatpush1.msra.mxu0 0.0
        %2465 = vmatprep.subr.mxu0 0.0
        %2466 = vmatpush1.msra.mxu0 0.0
        %2467 = vmatprep.subr.mxu0 0.0
        %2468 = vmatpush1.msra.mxu0 0.0
        %2469 = vmatprep.subr.mxu0 0.0
        %2470 = vmatpush1.msra.mxu0 0.0
        %2471 = vmatprep.subr.mxu0 0.0
        %2472 = vmatpush1.msra.mxu0 0.0
        %2473 = vmatprep.subr.mxu0 0.0
        %2474 = vmatpush1.msra.mxu0 0.0
        %2475 = vmatprep.subr.mxu0 0.0
        %2476 = vmatpush1.msra.mxu0 0.0
        %2477 = vmatprep.subr.mxu0 0.0
        %2478 = vmatpush1.msra.mxu0 0.0
        %2479 = vmatprep.mubr.f32.mxu0 0.0
        %2480 = vmatmul.mubr.f32.gmra.mrb[0].mxu0 %v2388
        %v2481 = vpop.f32.mrb[0].mxu0
        %v2482 = vadd.f32 0.0, %v2481
        %v2483 = vpop.f32.mrb[0].mxu0
        %2484 = vmatprep.mubr.f32.mxu0 0.0
        %2485 = vmatmul.mubr.f32.gmra.mrb[0].mxu0 %v2391
        %v2486 = vpop.f32.mrb[0].mxu0
        %v2487 = vadd.f32 0.0, %v2486
        %v2488 = vpop.f32.mrb[0].mxu0
        %2489 = vmatprep.mubr.f32.mxu0 0.0
        %2490 = vmatmul.mubr.f32.gmra.mrb[0].mxu0 %v2394
        %v2491 = vpop.f32.mrb[0].mxu0
        %v2492 = vadd.f32 0.0, %v2491
        %v2493 = vpop.f32.mrb[0].mxu0
        %2494 = vmatprep.mubr.f32.mxu0 0.0
        %2495 = vmatmul.mubr.f32.gmra.mrb[0].mxu0 %v2397
        %v2496 = vpop.f32.mrb[0].mxu0
        %v2497 = vadd.f32 0.0, %v2496
        %v2498 = vpop.f32.mrb[0].mxu0
        %2499 = vmatprep.mubr.f32.mxu0 0.0
        %2500 = vmatmul.mubr.f32.gmra.mrb[0].mxu0 %v2400
        %v2501 = vpop.f32.mrb[0].mxu0
        %v2502 = vadd.f32 0.0, %v2501
        %v2503 = vpop.f32.mrb[0].mxu0
        %2504 = vmatprep.mubr.f32.mxu0 0.0
        %2505 = vmatmul.mubr.f32.gmra.mrb[0].mxu0 %v2403
        %v2506 = vpop.f32.mrb[0].mxu0
        %v2507 = vadd.f32 0.0, %v2506
        %v2508 = vpop.f32.mrb[0].mxu0
        %2509 = vmatprep.mubr.f32.mxu0 0.0
        %2510 = vmatmul.mubr.f32.gmra.mrb[0].mxu0 %v2406
        %v2511 = vpop.f32.mrb[0].mxu0
        %v2512 = vadd.f32 0.0, %v2511
        %v2513 = vpop.f32.mrb[0].mxu0
        %2514 = vmatprep.mubr.f32.mxu0 0.0
        %2515 = vmatmul.mubr.f32.gmra.mrb[0].mxu0 %v2409
        %v2516 = vpop.f32.mrb[0].mxu0
        %v2517 = vadd.f32 0.0, %v2516
        %v2518 = vpop.f32.mrb[0].mxu0
        %2519 = vdwg.mxu0
        %v2520 = vadd.f32 %v2482, %v2487
        %v2521 = vmax.f32 %v2482, %v2487
        %v2522 = vadd.f32 %v2520, %v2492
        %v2523 = vmax.f32 %v2521, %v2492
        %v2524 = vadd.f32 %v2522, %v2497
        %v2525 = vmax.f32 %v2523, %v2497
        %v2526 = vadd.f32 %v2524, %v2502
        %v2527 = vmax.f32 %v2525, %v2502
        %v2528 = vadd.f32 %v2526, %v2507
        %v2529 = vmax.f32 %v2527, %v2507
        %v2530 = vadd.f32 %v2528, %v2512
        %v2531 = vmax.f32 %v2529, %v2512
        %v2532 = vadd.f32 %v2530, %v2517
        %v2533 = vmax.f32 %v2531, %v2517
        %v2534 = vmul.f32 %v2532, 0.125
        %v2535 = vadd.f32 %v2534, %v2533
        %v2536 = vxor.u32 %v2535, 2147483648
        %v2537 = vmul.f32 %v2536, 1.442695
        %v2538 = vpow.pop %v2537
        %v2539 = vadd.f32 %v2538, 1.0
        %v2540 = vrcp.pop %v2539
        %v2541 = vmul.f32 1.0, %v2540
        %v2542 = vmul.f32 %v2236, %v2541
        %v2543 = vmul.f32 %v2237, %v2541
        %v2544 = vmul.f32 %v2238, %v2541
        %v2545 = vmul.f32 %v2239, %v2541
        %v2546 = vmul.f32 %v2240, %v2541
        %v2547 = vmul.f32 %v2241, %v2541
        %v2548 = vmul.f32 %v2242, %v2541
        %v2549 = vmul.f32 %v2243, %v2541
        %v2550 = vsel %vm559, %v2542, 0.0
        %2551 = vadd.xlane.f32.xlu0 %v2550
        %v2552 = vpop.xlane.xlu0 %2551
        %v2553 = vsel %vm559, %v2543, 0.0
        %2554 = vadd.xlane.f32.xlu0 %v2553
        %v2555 = vpop.xlane.xlu0 %2554
        %v2556 = vsel %vm559, %v2544, 0.0
        %2557 = vadd.xlane.f32.xlu0 %v2556
        %v2558 = vpop.xlane.xlu0 %2557
        %v2559 = vsel %vm559, %v2545, 0.0
        %2560 = vadd.xlane.f32.xlu0 %v2559
        %v2561 = vpop.xlane.xlu0 %2560
        %v2562 = vsel %vm559, %v2546, 0.0
        %2563 = vadd.xlane.f32.xlu0 %v2562
        %v2564 = vpop.xlane.xlu0 %2563
        %v2565 = vsel %vm559, %v2547, 0.0
        %2566 = vadd.xlane.f32.xlu0 %v2565
        %v2567 = vpop.xlane.xlu0 %2566
        %v2568 = vsel %vm559, %v2548, 0.0
        %2569 = vadd.xlane.f32.xlu0 %v2568
        %v2570 = vpop.xlane.xlu0 %2569
        %v2571 = vsel %vm559, %v2549, 0.0
        %2572 = vadd.xlane.f32.xlu0 %v2571
        %v2573 = vpop.xlane.xlu0 %2572
        %v2574 = vrcp.pop 32.0
        %v2575 = vmul.f32 %v2552, %v2574
        %v2576 = vmul.f32 %v2555, %v2574
        %v2577 = vmul.f32 %v2558, %v2574
        %v2578 = vmul.f32 %v2561, %v2574
        %v2579 = vmul.f32 %v2564, %v2574
        %v2580 = vmul.f32 %v2567, %v2574
        %v2581 = vmul.f32 %v2570, %v2574
        %v2582 = vmul.f32 %v2573, %v2574
        %v2583 = vsel %vm559, %v2542, -inf
        %2584 = vmax.xlane.f32.xlu0 %v2583
        %v2585 = vpop.xlane.xlu0 %2584
        %v2586 = vsel %vm559, %v2543, -inf
        %2587 = vmax.xlane.f32.xlu0 %v2586
        %v2588 = vpop.xlane.xlu0 %2587
        %v2589 = vsel %vm559, %v2544, -inf
        %2590 = vmax.xlane.f32.xlu0 %v2589
        %v2591 = vpop.xlane.xlu0 %2590
        %v2592 = vsel %vm559, %v2545, -inf
        %2593 = vmax.xlane.f32.xlu0 %v2592
        %v2594 = vpop.xlane.xlu0 %2593
        %v2595 = vsel %vm559, %v2546, -inf
        %2596 = vmax.xlane.f32.xlu0 %v2595
        %v2597 = vpop.xlane.xlu0 %2596
        %v2598 = vsel %vm559, %v2547, -inf
        %2599 = vmax.xlane.f32.xlu0 %v2598
        %v2600 = vpop.xlane.xlu0 %2599
        %v2601 = vsel %vm559, %v2548, -inf
        %2602 = vmax.xlane.f32.xlu0 %v2601
        %v2603 = vpop.xlane.xlu0 %2602
        %v2604 = vsel %vm559, %v2549, -inf
        %2605 = vmax.xlane.f32.xlu0 %v2604
        %v2606 = vpop.xlane.xlu0 %2605
        %s2607 = sld [smem:[#allocation3]]
        %v2608 = vstv %s2607
        %v2609 = vmul.f32 %v2608, 0.0
        %v2610 = vmul.f32 %v2608, %v2575
        %v2611 = vmul.f32 %v2608, %v2576
        %v2612 = vmul.f32 %v2608, %v2577
        %v2613 = vmul.f32 %v2608, %v2578
        %v2614 = vmul.f32 %v2608, %v2579
        %v2615 = vadd.f32 %v2609, 0.0
        %v2616 = vadd.f32 %v2610, 0.0
        %v2617 = vadd.f32 %v2611, 0.0
        %v2618 = vadd.f32 %v2612, 0.0
        %v2619 = vadd.f32 %v2613, 0.0
        %v2620 = vadd.f32 %v2614, 0.0
        %s2621 = sld [smem:[#allocation3 + $0x7]]
        %v2622 = vstv %s2621
        %v2623 = vmul.f32 %v2622, 0.0
        %v2624 = vmul.f32 %v2622, %v2585
        %v2625 = vmul.f32 %v2622, %v2588
        %v2626 = vmul.f32 %v2622, %v2591
        %v2627 = vmul.f32 %v2622, %v2594
        %v2628 = vmul.f32 %v2622, %v2597
        %v2629 = vadd.f32 %v2615, %v2623
        %v2630 = vadd.f32 %v2616, %v2624
        %v2631 = vadd.f32 %v2617, %v2625
        %v2632 = vadd.f32 %v2618, %v2626
        %v2633 = vadd.f32 %v2619, %v2627
        %v2634 = vadd.f32 %v2620, %v2628
        %s2635 = sld [smem:[#allocation3 + $0x1]]
        %v2636 = vstv %s2635
        %v2637 = vmul.f32 %v2636, 0.0
        %v2638 = vmul.f32 %v2636, %v2575
        %v2639 = vmul.f32 %v2636, %v2576
        %v2640 = vmul.f32 %v2636, %v2577
        %v2641 = vmul.f32 %v2636, %v2578
        %v2642 = vmul.f32 %v2636, %v2579
        %v2643 = vmul.f32 %v2636, %v2580
        %v2644 = vadd.f32 %v2629, %v2637
        %v2645 = vadd.f32 %v2629, %v2638
        %v2646 = vadd.f32 %v2630, %v2639
        %v2647 = vadd.f32 %v2631, %v2640
        %v2648 = vadd.f32 %v2632, %v2641
        %v2649 = vadd.f32 %v2633, %v2642
        %v2650 = vadd.f32 %v2634, %v2643
        %s2651 = sld [smem:[#allocation3 + $0x8]]
        %v2652 = vstv %s2651
        %v2653 = vmul.f32 %v2652, 0.0
        %v2654 = vmul.f32 %v2652, %v2585
        %v2655 = vmul.f32 %v2652, %v2588
        %v2656 = vmul.f32 %v2652, %v2591
        %v2657 = vmul.f32 %v2652, %v2594
        %v2658 = vmul.f32 %v2652, %v2597
        %v2659 = vmul.f32 %v2652, %v2600
        %v2660 = vadd.f32 %v2644, %v2653
        %v2661 = vadd.f32 %v2645, %v2654
        %v2662 = vadd.f32 %v2646, %v2655
        %v2663 = vadd.f32 %v2647, %v2656
        %v2664 = vadd.f32 %v2648, %v2657
        %v2665 = vadd.f32 %v2649, %v2658
        %v2666 = vadd.f32 %v2650, %v2659
        %s2667 = sld [smem:[#allocation3 + $0x2]]
        %v2668 = vstv %s2667
        %v2669 = vmul.f32 %v2668, 0.0
        %v2670 = vmul.f32 %v2668, %v2575
        %v2671 = vmul.f32 %v2668, %v2576
        %v2672 = vmul.f32 %v2668, %v2577
        %v2673 = vmul.f32 %v2668, %v2578
        %v2674 = vmul.f32 %v2668, %v2579
        %v2675 = vmul.f32 %v2668, %v2580
        %v2676 = vmul.f32 %v2668, %v2581
        %v2677 = vadd.f32 %v2660, %v2669
        %v2678 = vadd.f32 %v2660, %v2670
        %v2679 = vadd.f32 %v2661, %v2671
        %v2680 = vadd.f32 %v2662, %v2672
        %v2681 = vadd.f32 %v2663, %v2673
        %v2682 = vadd.f32 %v2664, %v2674
        %v2683 = vadd.f32 %v2665, %v2675
        %v2684 = vadd.f32 %v2666, %v2676
        %s2685 = sld [smem:[#allocation3 + $0x9]]
        %v2686 = vstv %s2685
        %v2687 = vmul.f32 %v2686, 0.0
        %v2688 = vmul.f32 %v2686, %v2585
        %v2689 = vmul.f32 %v2686, %v2588
        %v2690 = vmul.f32 %v2686, %v2591
        %v2691 = vmul.f32 %v2686, %v2594
        %v2692 = vmul.f32 %v2686, %v2597
        %v2693 = vmul.f32 %v2686, %v2600
        %v2694 = vmul.f32 %v2686, %v2603
        %v2695 = vadd.f32 %v2677, %v2687
        %v2696 = vadd.f32 %v2678, %v2688
        %v2697 = vadd.f32 %v2679, %v2689
        %v2698 = vadd.f32 %v2680, %v2690
        %v2699 = vadd.f32 %v2681, %v2691
        %v2700 = vadd.f32 %v2682, %v2692
        %v2701 = vadd.f32 %v2683, %v2693
        %v2702 = vadd.f32 %v2684, %v2694
        %s2703 = sld [smem:[#allocation3 + $0x3]]
        %v2704 = vstv %s2703
        %v2705 = vmul.f32 %v2704, %v2575
        %v2706 = vmul.f32 %v2704, %v2576
        %v2707 = vmul.f32 %v2704, %v2577
        %v2708 = vmul.f32 %v2704, %v2578
        %v2709 = vmul.f32 %v2704, %v2579
        %v2710 = vmul.f32 %v2704, %v2580
        %v2711 = vmul.f32 %v2704, %v2581
        %v2712 = vmul.f32 %v2704, %v2582
        %v2713 = vadd.f32 %v2695, %v2705
        %v2714 = vadd.f32 %v2696, %v2706
        %v2715 = vadd.f32 %v2697, %v2707
        %v2716 = vadd.f32 %v2698, %v2708
        %v2717 = vadd.f32 %v2699, %v2709
        %v2718 = vadd.f32 %v2700, %v2710
        %v2719 = vadd.f32 %v2701, %v2711
        %v2720 = vadd.f32 %v2702, %v2712
        %s2721 = sld [smem:[#allocation3 + $0xa]]
        %v2722 = vstv %s2721
        %v2723 = vmul.f32 %v2722, %v2585
        %v2724 = vmul.f32 %v2722, %v2588
        %v2725 = vmul.f32 %v2722, %v2591
        %v2726 = vmul.f32 %v2722, %v2594
        %v2727 = vmul.f32 %v2722, %v2597
        %v2728 = vmul.f32 %v2722, %v2600
        %v2729 = vmul.f32 %v2722, %v2603
        %v2730 = vmul.f32 %v2722, %v2606
        %v2731 = vadd.f32 %v2713, %v2723
        %v2732 = vadd.f32 %v2714, %v2724
        %v2733 = vadd.f32 %v2715, %v2725
        %v2734 = vadd.f32 %v2716, %v2726
        %v2735 = vadd.f32 %v2717, %v2727
        %v2736 = vadd.f32 %v2718, %v2728
        %v2737 = vadd.f32 %v2719, %v2729
        %v2738 = vadd.f32 %v2720, %v2730
        %s2739 = sld [smem:[#allocation3 + $0x4]]
        %v2740 = vstv %s2739
        %v2741 = vmul.f32 %v2740, %v2576
        %v2742 = vmul.f32 %v2740, %v2577
        %v2743 = vmul.f32 %v2740, %v2578
        %v2744 = vmul.f32 %v2740, %v2579
        %v2745 = vmul.f32 %v2740, %v2580
        %v2746 = vmul.f32 %v2740, %v2581
        %v2747 = vmul.f32 %v2740, %v2582
        %v2748 = vmul.f32 %v2740, 0.0
        %v2749 = vadd.f32 %v2731, %v2741
        %v2750 = vadd.f32 %v2732, %v2742
        %v2751 = vadd.f32 %v2733, %v2743
        %v2752 = vadd.f32 %v2734, %v2744
        %v2753 = vadd.f32 %v2735, %v2745
        %v2754 = vadd.f32 %v2736, %v2746
        %v2755 = vadd.f32 %v2737, %v2747
        %v2756 = vadd.f32 %v2738, %v2748
        %s2757 = sld [smem:[#allocation3 + $0xb]]
        %v2758 = vstv %s2757
        %v2759 = vmul.f32 %v2758, %v2588
        %v2760 = vmul.f32 %v2758, %v2591
        %v2761 = vmul.f32 %v2758, %v2594
        %v2762 = vmul.f32 %v2758, %v2597
        %v2763 = vmul.f32 %v2758, %v2600
        %v2764 = vmul.f32 %v2758, %v2603
        %v2765 = vmul.f32 %v2758, %v2606
        %v2766 = vmul.f32 %v2758, 0.0
        %v2767 = vadd.f32 %v2749, %v2759
        %v2768 = vadd.f32 %v2750, %v2760
        %v2769 = vadd.f32 %v2751, %v2761
        %v2770 = vadd.f32 %v2752, %v2762
        %v2771 = vadd.f32 %v2753, %v2763
        %v2772 = vadd.f32 %v2754, %v2764
        %v2773 = vadd.f32 %v2755, %v2765
        %v2774 = vadd.f32 %v2756, %v2766
        %s2775 = sld [smem:[#allocation3 + $0x5]]
        %v2776 = vstv %s2775
        %v2777 = vmul.f32 %v2776, %v2577
        %v2778 = vmul.f32 %v2776, %v2578
        %v2779 = vmul.f32 %v2776, %v2579
        %v2780 = vmul.f32 %v2776, %v2580
        %v2781 = vmul.f32 %v2776, %v2581
        %v2782 = vmul.f32 %v2776, %v2582
        %v2783 = vmul.f32 %v2776, 0.0
        %v2784 = vadd.f32 %v2767, %v2777
        %v2785 = vadd.f32 %v2768, %v2778
        %v2786 = vadd.f32 %v2769, %v2779
        %v2787 = vadd.f32 %v2770, %v2780
        %v2788 = vadd.f32 %v2771, %v2781
        %v2789 = vadd.f32 %v2772, %v2782
        %v2790 = vadd.f32 %v2773, %v2783
        %v2791 = vadd.f32 %v2774, %v2783
        %s2792 = sld [smem:[#allocation3 + $0xc]]
        %v2793 = vstv %s2792
        %v2794 = vmul.f32 %v2793, %v2591
        %v2795 = vmul.f32 %v2793, %v2594
        %v2796 = vmul.f32 %v2793, %v2597
        %v2797 = vmul.f32 %v2793, %v2600
        %v2798 = vmul.f32 %v2793, %v2603
        %v2799 = vmul.f32 %v2793, %v2606
        %v2800 = vmul.f32 %v2793, 0.0
        %v2801 = vadd.f32 %v2784, %v2794
        %v2802 = vadd.f32 %v2785, %v2795
        %v2803 = vadd.f32 %v2786, %v2796
        %v2804 = vadd.f32 %v2787, %v2797
        %v2805 = vadd.f32 %v2788, %v2798
        %v2806 = vadd.f32 %v2789, %v2799
        %v2807 = vadd.f32 %v2790, %v2800
        %v2808 = vadd.f32 %v2791, %v2800
        %s2809 = sld [smem:[#allocation3 + $0x6]]
        %v2810 = vstv %s2809
        %v2811 = vmul.f32 %v2810, %v2578
        %v2812 = vmul.f32 %v2810, %v2579
        %v2813 = vmul.f32 %v2810, %v2580
        %v2814 = vmul.f32 %v2810, %v2581
        %v2815 = vmul.f32 %v2810, %v2582
        %v2816 = vmul.f32 %v2810, 0.0
        %v2817 = vadd.f32 %v2801, %v2811
        %v2818 = vadd.f32 %v2802, %v2812
        %v2819 = vadd.f32 %v2803, %v2813
        %v2820 = vadd.f32 %v2804, %v2814
        %v2821 = vadd.f32 %v2805, %v2815
        %v2822 = vadd.f32 %v2806, %v2816
        %v2823 = vadd.f32 %v2807, %v2816
        %v2824 = vadd.f32 %v2808, %v2816
        %s2825 = sld [smem:[#allocation3 + $0xd]]
        %v2826 = vstv %s2825
        %v2827 = vmul.f32 %v2826, %v2594
        %v2828 = vmul.f32 %v2826, %v2597
        %v2829 = vmul.f32 %v2826, %v2600
        %v2830 = vmul.f32 %v2826, %v2603
        %v2831 = vmul.f32 %v2826, %v2606
        %v2832 = vmul.f32 %v2826, 0.0
        %v2833 = vadd.f32 %v2817, %v2827
        %v2834 = vadd.f32 %v2818, %v2828
        %v2835 = vadd.f32 %v2819, %v2829
        %v2836 = vadd.f32 %v2820, %v2830
        %v2837 = vadd.f32 %v2821, %v2831
        %v2838 = vadd.f32 %v2822, %v2832
        %v2839 = vadd.f32 %v2823, %v2832
        %v2840 = vadd.f32 %v2824, %v2832
        %v2841 = vxor.u32 %v2833, 2147483648
        %v2842 = vxor.u32 %v2834, 2147483648
        %v2843 = vxor.u32 %v2835, 2147483648
        %v2844 = vxor.u32 %v2836, 2147483648
        %v2845 = vxor.u32 %v2837, 2147483648
        %v2846 = vxor.u32 %v2838, 2147483648
        %v2847 = vxor.u32 %v2839, 2147483648
        %v2848 = vxor.u32 %v2840, 2147483648
        %v2849 = vmul.f32 %v2841, 1.442695
        %v2850 = vpow.pop %v2849
        %v2851 = vmul.f32 %v2842, 1.442695
        %v2852 = vpow.pop %v2851
        %v2853 = vmul.f32 %v2843, 1.442695
        %v2854 = vpow.pop %v2853
        %v2855 = vmul.f32 %v2844, 1.442695
        %v2856 = vpow.pop %v2855
        %v2857 = vmul.f32 %v2845, 1.442695
        %v2858 = vpow.pop %v2857
        %v2859 = vmul.f32 %v2846, 1.442695
        %v2860 = vpow.pop %v2859
        %v2861 = vmul.f32 %v2847, 1.442695
        %v2862 = vpow.pop %v2861
        %v2863 = vmul.f32 %v2848, 1.442695
        %v2864 = vpow.pop %v2863
        %v2865 = vadd.f32 %v2850, 1.0
        %v2866 = vadd.f32 %v2852, 1.0
        %v2867 = vadd.f32 %v2854, 1.0
        %v2868 = vadd.f32 %v2856, 1.0
        %v2869 = vadd.f32 %v2858, 1.0
        %v2870 = vadd.f32 %v2860, 1.0
        %v2871 = vadd.f32 %v2862, 1.0
        %v2872 = vadd.f32 %v2864, 1.0
        %v2873 = vrcp.pop %v2865
        %v2874 = vmul.f32 1.0, %v2873
        %v2875 = vrcp.pop %v2866
        %v2876 = vmul.f32 1.0, %v2875
        %v2877 = vrcp.pop %v2867
        %v2878 = vmul.f32 1.0, %v2877
        %v2879 = vrcp.pop %v2868
        %v2880 = vmul.f32 1.0, %v2879
        %v2881 = vrcp.pop %v2869
        %v2882 = vmul.f32 1.0, %v2881
        %v2883 = vrcp.pop %v2870
        %v2884 = vmul.f32 1.0, %v2883
        %v2885 = vrcp.pop %v2871
        %v2886 = vmul.f32 1.0, %v2885
        %v2887 = vrcp.pop %v2872
        %v2888 = vmul.f32 1.0, %v2887
        %2890 = vset.pattern.permute.xlu0 0
        %2891 = vperm.xlu0 %2890, %v2874
        %v2892 = vpop.permute.xlu0 %2891
        %2895 = vset.pattern.permute.xlu0 0
        %2896 = vperm.xlu0 %2895, %v2876
        %v2897 = vpop.permute.xlu0 %2896
        %2900 = vset.pattern.permute.xlu0 0
        %2901 = vperm.xlu0 %2900, %v2878
        %v2902 = vpop.permute.xlu0 %2901
        %2905 = vset.pattern.permute.xlu0 0
        %2906 = vperm.xlu0 %2905, %v2880
        %v2907 = vpop.permute.xlu0 %2906
        %2910 = vset.pattern.permute.xlu0 0
        %2911 = vperm.xlu0 %2910, %v2882
        %v2912 = vpop.permute.xlu0 %2911
        %2915 = vset.pattern.permute.xlu0 0
        %2916 = vperm.xlu0 %2915, %v2884
        %v2917 = vpop.permute.xlu0 %2916
        %2920 = vset.pattern.permute.xlu0 0
        %2921 = vperm.xlu0 %2920, %v2886
        %v2922 = vpop.permute.xlu0 %2921
        %2925 = vset.pattern.permute.xlu0 0
        %2926 = vperm.xlu0 %2925, %v2888
        %v2927 = vpop.permute.xlu0 %2926
        %v2929 = vmul.f32 %v2542, %v2892
        %v2930 = vmul.f32 %v2543, %v2897
        %v2931 = vmul.f32 %v2544, %v2902
        %v2932 = vmul.f32 %v2545, %v2907
        %v2933 = vmul.f32 %v2546, %v2912
        %v2934 = vmul.f32 %v2547, %v2917
        %v2935 = vmul.f32 %v2548, %v2922
        %v2936 = vmul.f32 %v2549, %v2927
        %v2937 = vmax.f32 %v2929, %v2930
        %v2938 = vmax.f32 %v2937, %v2931
        %v2939 = vmax.f32 %v2938, %v2932
        %v2940 = vmax.f32 %v2939, %v2933
        %v2941 = vmax.f32 %v2940, %v2934
        %v2942 = vmax.f32 %v2941, %v2935
        %v2943 = vmax.f32 %v2942, %v2936
        %v2944 = vld [vmem:[%s9] sm:$0xff]
        %v2945 = vld [vmem:[%s9 + $0x8] sm:$0xff]
        %v2946 = vld [vmem:[%s9 + $0x10] sm:$0xff]
        %v2947 = vld [vmem:[%s9 + $0x18] sm:$0xff]
        %v2948 = vld [vmem:[%s10] sm:$0x1]
        %v2950 = vlaneseq
        %v2951 = vshrl.u32 %v2950, 7
        %v2952 = vsub.s32 0, %v2951
        %v2953 = vrot.slane %v2948, %v2952
        %v2956 = vsel %vm559, %v2943, 0
        %2958 = vmatprep.subr.mxu0 0.0
        %2959 = vmatpush1.msra.mxu0 %v2944
        %2960 = vmatprep.subr.mxu0 0.0
        %2961 = vmatpush1.msra.mxu0 %v2945
        %2962 = vmatprep.subr.mxu0 0.0
        %2963 = vmatpush1.msra.mxu0 %v2946
        %2964 = vmatprep.subr.mxu0 0.0
        %2965 = vmatpush1.msra.mxu0 %v2947
        %2966 = vmatprep.subr.mxu0 0.0
        %2967 = vmatpush1.msra.mxu0 0.0
        %2968 = vmatprep.subr.mxu0 0.0
        %2969 = vmatpush1.msra.mxu0 0.0
        %2970 = vmatprep.subr.mxu0 0.0
        %2971 = vmatpush1.msra.mxu0 0.0
        %2972 = vmatprep.subr.mxu0 0.0
        %2973 = vmatpush1.msra.mxu0 0.0
        %2974 = vmatprep.subr.mxu0 0.0
        %2975 = vmatpush1.msra.mxu0 0.0
        %2976 = vmatprep.subr.mxu0 0.0
        %2977 = vmatpush1.msra.mxu0 0.0
        %2978 = vmatprep.subr.mxu0 0.0
        %2979 = vmatpush1.msra.mxu0 0.0
        %2980 = vmatprep.subr.mxu0 0.0
        %2981 = vmatpush1.msra.mxu0 0.0
        %2982 = vmatprep.subr.mxu0 0.0
        %2983 = vmatpush1.msra.mxu0 0.0
        %2984 = vmatprep.subr.mxu0 0.0
        %2985 = vmatpush1.msra.mxu0 0.0
        %2986 = vmatprep.subr.mxu0 0.0
        %2987 = vmatpush1.msra.mxu0 0.0
        %2988 = vmatprep.subr.mxu0 0.0
        %2989 = vmatpush1.msra.mxu0 0.0
        %2990 = vmatprep.subr.mxu0 0.0
        %2991 = vmatpush1.msra.mxu0 0.0
        %2992 = vmatprep.subr.mxu0 0.0
        %2993 = vmatpush1.msra.mxu0 0.0
        %2994 = vmatprep.subr.mxu0 0.0
        %2995 = vmatpush1.msra.mxu0 0.0
        %2996 = vmatprep.subr.mxu0 0.0
        %2997 = vmatpush1.msra.mxu0 0.0
        %2998 = vmatprep.subr.mxu0 0.0
        %2999 = vmatpush1.msra.mxu0 0.0
        %3000 = vmatprep.subr.mxu0 0.0
        %3001 = vmatpush1.msra.mxu0 0.0
        %3002 = vmatprep.subr.mxu0 0.0
        %3003 = vmatpush1.msra.mxu0 0.0
        %3004 = vmatprep.subr.mxu0 0.0
        %3005 = vmatpush1.msra.mxu0 0.0
        %3006 = vmatprep.subr.mxu0 0.0
        %3007 = vmatpush1.msra.mxu0 0.0
        %3008 = vmatprep.subr.mxu0 0.0
        %3009 = vmatpush1.msra.mxu0 0.0
        %3010 = vmatprep.subr.mxu0 0.0
        %3011 = vmatpush1.msra.mxu0 0.0
        %3012 = vmatprep.subr.mxu0 0.0
        %3013 = vmatpush1.msra.mxu0 0.0
        %3014 = vmatprep.subr.mxu0 0.0
        %3015 = vmatpush1.msra.mxu0 0.0
        %3016 = vmatprep.subr.mxu0 0.0
        %3017 = vmatpush1.msra.mxu0 0.0
        %3018 = vmatprep.subr.mxu0 0.0
        %3019 = vmatpush1.msra.mxu0 0.0
        %3020 = vmatprep.subr.mxu0 0.0
        %3021 = vmatpush1.msra.mxu0 0.0
        %3022 = vmatprep.mubr.f32.mxu0 0.0
        %3023 = vmatmul.mubr.f32.gmra.mrb[0].mxu0 %v2956
        %v3024 = vpop.f32.mrb[0].mxu0
        %v3025 = vadd.f32 %v2953, %v3024
        %v3026 = vpop.f32.mrb[0].mxu0
        %3027 = vdwg.mxu0
        %v3028 = vxor.u32 %v3025, 2147483648
        %v3029 = vmul.f32 %v3028, 1.442695
        %v3030 = vpow.pop %v3029
        %v3031 = vadd.f32 %v3030, 1.0
        %v3032 = vrcp.pop %v3031
        %v3033 = vmul.f32 1.0, %v3032
        %vm3034 = vcmask 15360
        %3035 = vst.msk [vmem:[%s398] sm:$0xff] %vm3034, %v3033
        %p3036 = scmp.lt.s32.totalorder %s23, 1
        %s3037 = scalar_select %p3036, %s23, 1
        %s3038 = smul.addr %s3037, 8
        %s3039 = scalar_lea.vmem %s11, %s3038
        // Predicated region
        $region69: #{model_forward.1} parent=63 // pred_check
          %p3040 = pneg %p277
        $region70: #{model_forward.1} parent=63 // pred_check_branch
          %3042 = sbr.rel (%p3040) target = $region72
        $region71: #{model_forward.1} parent=63 // pred_region
          _
        $region72: #{model_forward.1} parent=63 // pred_fallthru
          _
      $region64: #{model_forward.1} parent=5 // pred_fallthru
        _
      %p3043 = scmp.le.s32.totalorder 2, %s18
      // Predicated region
      $region73: #{model_forward.1} parent=5 // pred_check
        %p3044 = pneg %p3043
      $region74: #{model_forward.1} parent=5 // pred_check_branch
        %3046 = sbr.rel (%p3044) target = $region76
      $region75: #{model_forward.1} parent=5 // pred_region
        %s3047 = ssub.s32 %s18, 2
        // Predicated region
        $region77: #{model_forward.1} parent=75 // pred_check
          %p3048 = pneg %p283
        $region78: #{model_forward.1} parent=75 // pred_check_branch
          %3050 = sbr.rel (%p3048) target = $region80
        $region79: #{model_forward.1} parent=75 // pred_region
          %p3051 = scmp.lt.s32.totalorder %s24, 1
          %s3052 = scalar_select %p3051, %s24, 1
          %s3053 = smul.addr %s3052, 8
          %s3054 = scalar_lea.vmem %s11, %s3053
        $region80: #{model_forward.1} parent=75 // pred_fallthru
          _
      $region76: #{model_forward.1} parent=5 // pred_fallthru
        _
    $region6: #{model_forward.1} parent=1 // loop_footer
      %s22 = sadd.s32 1, %s18
    $region7: #{model_forward.1} parent=1 // loop_footer_branch
      %17 = sbr.rel target = $region3
    $region8: #{model_forward.1} parent=1 // loop_exit
      _
    %3055 = vsyncpa [#allocation4], 1
    %s3056 = scalar_lea.sflag [#allocation4], 1
    %3057 = vsyncpa %s3056, 1

</llo_original>
